<compile_context>
chip_gen: v7x
topology: tpu7x:2x2x1
jax: 0.10.0
libtpu: 0.0.40
codegen_flags: <defaults>
</compile_context>

<pallas_src>
import functools

import jax
import jax.numpy as jnp
import numpy as np
from jax.experimental import pallas as pl
from jax.experimental.pallas import tpu as pltpu

EPS = 1e-5


# ------------------------------ small helpers -------------------------------

def _round_up(x, m):
    return (x + m - 1) // m * m


def _pick_rows(M, target):
    """Largest row tile that divides M, is <= target and keeps the sublane
    constraint (multiple of 8, or the full extent)."""
    if M <= target:
        return M
    for cand in range(target, 7, -1):
        if M % cand == 0 and cand % 8 == 0:
            return cand
    return M


# ----------------------------- Pallas kernels ------------------------------

def matmul_kernel(a_ref, b_ref, o_ref):
    # (tm, K)bf16 @ (K, N)bf16 -> (tm, N)f32: single-pass bf16 MXU, f32 acc.
    o_ref[...] = jnp.dot(a_ref[...], b_ref[...],
                         preferred_element_type=jnp.float32)


def pallas_matmul(a, b, target_rows=2048):
    """a:(M,K) bf16, b:(K,N) bf16 -> (M,N) f32.  K,N are small enough to live
    in a single block; only M is (optionally) tiled."""
    M, K = a.shape
    _, N = b.shape
    Mp = max(_round_up(M, 8), 8)          # keep sublane-friendly row count
    if Mp != M:
        a = jnp.pad(a, ((0, Mp - M), (0, 0)))
    tm = _pick_rows(Mp, target_rows)
    out = pl.pallas_call(
        matmul_kernel,
        out_shape=jax.ShapeDtypeStruct((Mp, N), jnp.float32),
        grid=(Mp // tm,),
        in_specs=[pl.BlockSpec((tm, K), lambda i: (i, 0)),
                  pl.BlockSpec((K, N), lambda i: (0, 0))],
        out_specs=pl.BlockSpec((tm, N), lambda i: (i, 0)),
        compiler_params=pltpu.CompilerParams(
            dimension_semantics=("parallel",)),
    )(a, b)
    return out[:M] if Mp != M else out


def stats_kernel(x_ref, sum_ref, sq_ref):
    # Accumulate per-column sum / sum-of-squares across the row grid axis.
    @pl.when(pl.program_id(0) == 0)
    def _():
        sum_ref[...] = jnp.zeros_like(sum_ref)
        sq_ref[...] = jnp.zeros_like(sq_ref)

    x = x_ref[...]
    sum_ref[...] += jnp.sum(x, axis=0, keepdims=True)
    sq_ref[...] += jnp.sum(x * x, axis=0, keepdims=True)


def pallas_col_stats(x, target_rows=2048):
    M, C = x.shape
    tm = _pick_rows(M, target_rows)
    return pl.pallas_call(
        stats_kernel,
        out_shape=(jax.ShapeDtypeStruct((1, C), jnp.float32),
                   jax.ShapeDtypeStruct((1, C), jnp.float32)),
        grid=(M // tm,),
        in_specs=[pl.BlockSpec((tm, C), lambda i: (i, 0))],
        out_specs=(pl.BlockSpec((1, C), lambda i: (0, 0)),
                   pl.BlockSpec((1, C), lambda i: (0, 0))),
        compiler_params=pltpu.CompilerParams(
            dimension_semantics=("arbitrary",)),
    )(x)


def bn_act_kernel(x_ref, scale_ref, shift_ref, o_ref, *, act):
    y = x_ref[...] * scale_ref[...] + shift_ref[...]     # f32 epilogue (v5e ok)
    if act == "relu":
        y = jnp.maximum(y, 0.0)
    else:  # "tanh"
        y = jnp.tanh(y)
    o_ref[...] = y


def pallas_bn_act(x, scale, shift, act, target_rows=2048):
    M, C = x.shape
    tm = _pick_rows(M, target_rows)
    return pl.pallas_call(
        functools.partial(bn_act_kernel, act=act),
        out_shape=jax.ShapeDtypeStruct((M, C), jnp.float32),
        grid=(M // tm,),
        in_specs=[pl.BlockSpec((tm, C), lambda i: (i, 0)),
                  pl.BlockSpec((1, C), lambda i: (0, 0)),
                  pl.BlockSpec((1, C), lambda i: (0, 0))],
        out_specs=pl.BlockSpec((tm, C), lambda i: (i, 0)),
        input_output_aliases={0: 0},          # y is dead after normalization
        compiler_params=pltpu.CompilerParams(
            dimension_semantics=("parallel",)),
    )(x, scale, shift)


# ------------------------ transposed-conv layer glue ------------------------

def tconv_bn_act_layer(x_nhwc, W_t, stride, pad, gamma, beta, act):
    """ConvTranspose2d (bias=False) [+ BatchNorm2d, training stats] + act.

    Output-expansion formulation: every input pixel produces a (k,k,Cout)
    patch via a single lane-dense matmul over Cin; the k*k overlap-add
    (col2im) and the tiny per-channel finalize are pure data movement /
    scalar math and stay in XLA glue.
    """
    N, H, Wd, Cin = x_nhwc.shape
    _, Cout, k, _ = W_t.shape
    OH = (H - 1) * stride - 2 * pad + k
    OW = (Wd - 1) * stride - 2 * pad + k
    DH = (H - 1) * stride + k
    DW = (Wd - 1) * stride + k

    # (Cin, Cout, kh, kw) -> (Cin, kh*kw*Cout), zero-padded to a multiple of
    # 128 lanes so the matmul output stores are never masked.
    Nout = k * k * Cout
    Npad = _round_up(Nout, 128)
    Wr = jnp.transpose(W_t, (0, 2, 3, 1)).reshape(Cin, Nout)
    if Npad != Nout:
        Wr = jnp.pad(Wr, ((0, 0), (0, Npad - Nout)))

    A = x_nhwc.reshape(N * H * Wd, Cin).astype(jnp.bfloat16)
    P = pallas_matmul(A, Wr.astype(jnp.bfloat16))           # (M, Npad) f32
    P = P[:, :Nout].reshape(N, H, Wd, k, k, Cout)

    # col2im: overlap-add each (kh, kw) contribution, then crop the padding.
    # TODO(synk): fold this scatter-add into a Pallas kernel if it ever
    # dominates; at these sizes it is cheap XLA data movement.
    y_full = jnp.zeros((N, DH, DW, Cout), jnp.float32)
    for kh in range(k):
        for kw in range(k):
            y_full = y_full.at[:, kh:kh + (H - 1) * stride + 1:stride,
                                  kw:kw + (Wd - 1) * stride + 1:stride, :].add(
                P[:, :, :, kh, kw, :])
    y = y_full[:, pad:pad + OH, pad:pad + OW, :]             # (N, OH, OW, Cout)

    M = N * OH * OW
    if gamma is not None:
        # Lane-dense (rows, OW*Cout) view keeps channels aligned to columns.
        L = OW * Cout
        y2 = y.reshape(N * OH, L)
        col_s, col_sq = pallas_col_stats(y2)
        s = col_s.reshape(OW, Cout).sum(axis=0)
        sq = col_sq.reshape(OW, Cout).sum(axis=0)
        mean = s / M
        var = sq / M - mean * mean            # biased variance (training BN)
        scale = gamma / jnp.sqrt(var + EPS)
        shift = beta - mean * scale
        scale_t = jnp.tile(scale, OW).reshape(1, L)
        shift_t = jnp.tile(shift, OW).reshape(1, L)
    else:
        # No BatchNorm: channel alignment is irrelevant, so pick a fully
        # lane-dense flattening for the activation pass.
        total = M * Cout
        L = 256 if total % 256 == 0 else OW * Cout
        y2 = y.reshape(-1, L)
        scale_t = jnp.ones((1, L), jnp.float32)
        shift_t = jnp.zeros((1, L), jnp.float32)

    out2 = pallas_bn_act(y2, scale_t, shift_t, act)
    return out2.reshape(N, OH, OW, Cout)


def generator_forward(x_nchw, p):
    x = jnp.transpose(x_nchw, (0, 2, 3, 1))                  # NCHW -> NHWC once
    h = tconv_bn_act_layer(x, p['w1'], 1, 0, p['g1'], p['b1'], 'relu')
    h = tconv_bn_act_layer(h, p['w2'], 2, 1, p['g2'], p['b2'], 'relu')
    h = tconv_bn_act_layer(h, p['w3'], 2, 1, p['g3'], p['b3'], 'relu')
    h = tconv_bn_act_layer(h, p['w4'], 2, 1, p['g4'], p['b4'], 'relu')
    h = tconv_bn_act_layer(h, p['w5'], 2, 1, None, None, 'tanh')
    return jnp.transpose(h, (0, 3, 1, 2))                    # NHWC -> NCHW once


# --------------------------- pure-JAX reference -----------------------------

def _ref_tconv(x, W, stride, pad):
    k = W.shape[2]
    Wc = jnp.transpose(W[:, :, ::-1, ::-1], (1, 0, 2, 3))    # OIHW
    return jax.lax.conv_general_dilated(
        x, Wc, window_strides=(1, 1),
        padding=[(k - 1 - pad, k - 1 - pad)] * 2,
        lhs_dilation=(stride, stride),
        dimension_numbers=('NCHW', 'OIHW', 'NCHW'),
        precision=jax.lax.Precision.HIGHEST)


def _ref_bn(h, g, b):
    mean = jnp.mean(h, axis=(0, 2, 3), keepdims=True)
    var = jnp.var(h, axis=(0, 2, 3), keepdims=True)
    return (g.reshape(1, -1, 1, 1) * (h - mean) / jnp.sqrt(var + EPS)
            + b.reshape(1, -1, 1, 1))


def reference_forward(x, p):
    h = jnp.maximum(_ref_bn(_ref_tconv(x, p['w1'], 1, 0), p['g1'], p['b1']), 0.)
    h = jnp.maximum(_ref_bn(_ref_tconv(h, p['w2'], 2, 1), p['g2'], p['b2']), 0.)
    h = jnp.maximum(_ref_bn(_ref_tconv(h, p['w3'], 2, 1), p['g3'], p['b3']), 0.)
    h = jnp.maximum(_ref_bn(_ref_tconv(h, p['w4'], 2, 1), p['g4'], p['b4']), 0.)
    return jnp.tanh(_ref_tconv(h, p['w5'], 2, 1))


# ---------------------------------- main ------------------------------------

if __name__ == "__main__":
    # params = {'nz': 16, 'ngf': 8, 'nc': 3}; batch = 2
    nz, ngf, nc, batch = 16, 8, 3, 2

    key = jax.random.PRNGKey(0)
    ks = jax.random.split(key, 14)

    def tconv_w(k_, cin, cout):     # PyTorch layout: (Cin, Cout, kH, kW)
        return (0.02 * jax.random.normal(k_, (cin, cout, 4, 4))).astype(jnp.float32)

    p = {
        'w1': tconv_w(ks[0], nz,      ngf * 8),
        'w2': tconv_w(ks[1], ngf * 8, ngf * 4),
        'w3': tconv_w(ks[2], ngf * 4, ngf * 2),
        'w4': tconv_w(ks[3], ngf * 2, ngf),
        'w5': tconv_w(ks[4], ngf,     nc),
        'g1': (1.0 + 0.05 * jax.random.normal(ks[5], (ngf * 8,))).astype(jnp.float32),
        'b1': (0.05 * jax.random.normal(ks[6], (ngf * 8,))).astype(jnp.float32),
        'g2': (1.0 + 0.05 * jax.random.normal(ks[7], (ngf * 4,))).astype(jnp.float32),
        'b2': (0.05 * jax.random.normal(ks[8], (ngf * 4,))).astype(jnp.float32),
        'g3': (1.0 + 0.05 * jax.random.normal(ks[9], (ngf * 2,))).astype(jnp.float32),
        'b3': (0.05 * jax.random.normal(ks[10], (ngf * 2,))).astype(jnp.float32),
        'g4': (1.0 + 0.05 * jax.random.normal(ks[11], (ngf,))).astype(jnp.float32),
        'b4': (0.05 * jax.random.normal(ks[12], (ngf,))).astype(jnp.float32),
    }

    x = jax.random.normal(ks[13], (batch, nz, 1, 1), jnp.float32)

    out = jax.jit(generator_forward)(x, p)
    out = jax.block_until_ready(out)
    assert out.shape == (batch, nc, 64, 64), out.shape

    # Reference is full-f32 (Precision.HIGHEST); the kernel uses bf16 MXU
    # operands with f32 accumulation, so allow a bf16-scale deviation budget.
    ref = reference_forward(x, p)
    np.testing.assert_allclose(np.asarray(out), np.asarray(ref),
                               atol=1e-2, rtol=1e-2)

    print("KERNEL_OK")
</pallas_src>

<mosaic_0001>
module attributes {stable_mosaic.version = 11 : i64} {
  func.func @matmul_kernel(%arg0: i32, %arg1: memref<8x16xbf16, #tpu.memory_space<vmem>>, %arg2: memref<16x1024xbf16, #tpu.memory_space<vmem>>, %arg3: memref<8x1024xf32, #tpu.memory_space<vmem>>) attributes {dimension_semantics = [#tpu.dimension_semantics<parallel>], iteration_bounds = array<i64: 1>, scalar_prefetch = 0 : i64, scratch_operands = 0 : i64, tpu.core_type = #tpu.core_type<tc>, window_params = [{transform_indices = @transform_0, window_bounds = array<i64: 8, 16>}, {pipeline_mode = #tpu.pipeline_mode<synchronous>, transform_indices = @transform_1, window_bounds = array<i64: 16, 1024>}, {transform_indices = @transform_2, window_bounds = array<i64: 8, 1024>}]} {
    %c0 = arith.constant 0 : index
    %c0_0 = arith.constant 0 : index
    %0 = vector.load %arg1[%c0, %c0_0] : memref<8x16xbf16, #tpu.memory_space<vmem>>, vector<8x16xbf16>
    %c0_1 = arith.constant 0 : index
    %c0_2 = arith.constant 0 : index
    %1 = vector.load %arg2[%c0_1, %c0_2] : memref<16x1024xbf16, #tpu.memory_space<vmem>>, vector<16x1024xbf16>
    %cst = arith.constant dense<0.000000e+00> : vector<8x1024xf32>
    %2 = tpu.matmul %0, %1, %cst {dimension_numbers = #tpu.dot_dimension_numbers<[1], [0], [0], [1], [0, 0, 1, 1], [], []>} : vector<8x16xbf16>, vector<16x1024xbf16>, vector<8x1024xf32> -> vector<8x1024xf32>
    %c0_3 = arith.constant 0 : index
    %c0_4 = arith.constant 0 : index
    %3 = vector.load %arg3[%c0_3, %c0_4] : memref<8x1024xf32, #tpu.memory_space<vmem>>, vector<8x1024xf32>
    tpu.vector_store %arg3[%c0_3, %c0_4], %2 {strides = array<i32>} : memref<8x1024xf32, #tpu.memory_space<vmem>>, vector<8x1024xf32>,
    return
  }
  func.func @transform_0(%arg0: i32) -> (i32, i32) {
    %c0_i32 = arith.constant 0 : i32
    %c0_i32_0 = arith.constant 0 : i32
    return %arg0, %c0_i32 : i32, i32
  }
  func.func @transform_1(%arg0: i32) -> (i32, i32) {
    %c0_i32 = arith.constant 0 : i32
    %c0_i32_0 = arith.constant 0 : i32
    %c0_i32_1 = arith.constant 0 : i32
    return %c0_i32, %c0_i32_0 : i32, i32
  }
  func.func @transform_2(%arg0: i32) -> (i32, i32) {
    %c0_i32 = arith.constant 0 : i32
    %c0_i32_0 = arith.constant 0 : i32
    return %arg0, %c0_i32 : i32, i32
  }
}

module attributes {stable_mosaic.version = 11 : i64} {
  func.func @stats_kernel(%arg0: i32, %arg1: memref<8x256xf32, #tpu.memory_space<vmem>>, %arg2: memref<1x256xf32, #tpu.memory_space<vmem>>, %arg3: memref<1x256xf32, #tpu.memory_space<vmem>>) attributes {dimension_semantics = [#tpu.dimension_semantics<arbitrary>], iteration_bounds = array<i64: 1>, scalar_prefetch = 0 : i64, scratch_operands = 0 : i64, tpu.core_type = #tpu.core_type<tc>, window_params = [{transform_indices = @transform_0, window_bounds = array<i64: 8, 256>}, {pipeline_mode = #tpu.pipeline_mode<synchronous>, transform_indices = @transform_1, window_bounds = array<i64: 1, 256>}, {pipeline_mode = #tpu.pipeline_mode<synchronous>, transform_indices = @transform_2, window_bounds = array<i64: 1, 256>}]} {
    %c0_i32 = arith.constant 0 : i32
    %0 = arith.cmpi eq, %arg0, %c0_i32 : i32
    %1 = arith.extui %0 : i1 to i32
    %c0_i32_0 = arith.constant 0 : i32
    %2 = arith.cmpi ne, %1, %c0_i32_0 : i32
    scf.if %2 {
      %cst_11 = arith.constant 0.000000e+00 : f32
      %15 = vector.broadcast %cst_11 : f32 to vector<1x256xf32>
      %c0_12 = arith.constant 0 : index
      %c0_13 = arith.constant 0 : index
      %16 = vector.load %arg2[%c0_12, %c0_13] : memref<1x256xf32, #tpu.memory_space<vmem>>, vector<1x256xf32>
      tpu.vector_store %arg2[%c0_12, %c0_13], %15 {strides = array<i32>} : memref<1x256xf32, #tpu.memory_space<vmem>>, vector<1x256xf32>,
      %cst_14 = arith.constant 0.000000e+00 : f32
      %17 = vector.broadcast %cst_14 : f32 to vector<1x256xf32>
      %c0_15 = arith.constant 0 : index
      %c0_16 = arith.constant 0 : index
      %18 = vector.load %arg3[%c0_15, %c0_16] : memref<1x256xf32, #tpu.memory_space<vmem>>, vector<1x256xf32>
      tpu.vector_store %arg3[%c0_15, %c0_16], %17 {strides = array<i32>} : memref<1x256xf32, #tpu.memory_space<vmem>>, vector<1x256xf32>,
    } else {
    }
    %c0 = arith.constant 0 : index
    %c0_1 = arith.constant 0 : index
    %3 = vector.load %arg1[%c0, %c0_1] : memref<8x256xf32, #tpu.memory_space<vmem>>, vector<8x256xf32>
    %c0_2 = arith.constant 0 : index
    %c0_3 = arith.constant 0 : index
    %4 = vector.load %arg2[%c0_2, %c0_3] : memref<1x256xf32, #tpu.memory_space<vmem>>, vector<1x256xf32>
    %cst = arith.constant dense<0.000000e+00> : vector<256xf32>
    %5 = vector.multi_reduction <add>, %3, %cst [0] : vector<8x256xf32> to vector<256xf32>
    %6 = vector.shape_cast %5 : vector<256xf32> to vector<1x256xf32>
    %7 = arith.addf %4, %6 : vector<1x256xf32>
    %c0_4 = arith.constant 0 : index
    %c0_5 = arith.constant 0 : index
    %8 = vector.load %arg2[%c0_4, %c0_5] : memref<1x256xf32, #tpu.memory_space<vmem>>, vector<1x256xf32>
    tpu.vector_store %arg2[%c0_4, %c0_5], %7 {strides = array<i32>} : memref<1x256xf32, #tpu.memory_space<vmem>>, vector<1x256xf32>,
    %c0_6 = arith.constant 0 : index
    %c0_7 = arith.constant 0 : index
    %9 = vector.load %arg3[%c0_6, %c0_7] : memref<1x256xf32, #tpu.memory_space<vmem>>, vector<1x256xf32>
    %10 = arith.mulf %3, %3 : vector<8x256xf32>
    %cst_8 = arith.constant dense<0.000000e+00> : vector<256xf32>
    %11 = vector.multi_reduction <add>, %10, %cst_8 [0] : vector<8x256xf32> to vector<256xf32>
    %12 = vector.shape_cast %11 : vector<256xf32> to vector<1x256xf32>
    %13 = arith.addf %9, %12 : vector<1x256xf32>
    %c0_9 = arith.constant 0 : index
    %c0_10 = arith.constant 0 : index
    %14 = vector.load %arg3[%c0_9, %c0_10] : memref<1x256xf32, #tpu.memory_space<vmem>>, vector<1x256xf32>
    tpu.vector_store %arg3[%c0_9, %c0_10], %13 {strides = array<i32>} : memref<1x256xf32, #tpu.memory_space<vmem>>, vector<1x256xf32>,
    return
  }
  func.func @transform_0(%arg0: i32) -> (i32, i32) {
    %c0_i32 = arith.constant 0 : i32
    %c0_i32_0 = arith.constant 0 : i32
    return %arg0, %c0_i32 : i32, i32
  }
  func.func @transform_1(%arg0: i32) -> (i32, i32) {
    %c0_i32 = arith.constant 0 : i32
    %c0_i32_0 = arith.constant 0 : i32
    %c0_i32_1 = arith.constant 0 : i32
    return %c0_i32, %c0_i32_0 : i32, i32
  }
  func.func @transform_2(%arg0: i32) -> (i32, i32) {
    %c0_i32 = arith.constant 0 : i32
    %c0_i32_0 = arith.constant 0 : i32
    %c0_i32_1 = arith.constant 0 : i32
    return %c0_i32, %c0_i32_0 : i32, i32
  }
}

module attributes {stable_mosaic.version = 11 : i64} {
  func.func @bn_act_kernel(%arg0: i32, %arg1: memref<8x256xf32, #tpu.memory_space<vmem>>, %arg2: memref<1x256xf32, #tpu.memory_space<vmem>>, %arg3: memref<1x256xf32, #tpu.memory_space<vmem>>, %arg4: memref<8x256xf32, #tpu.memory_space<vmem>>) attributes {dimension_semantics = [#tpu.dimension_semantics<parallel>], iteration_bounds = array<i64: 1>, scalar_prefetch = 0 : i64, scratch_operands = 0 : i64, tpu.core_type = #tpu.core_type<tc>, window_params = [{transform_indices = @transform_0, window_bounds = array<i64: 8, 256>}, {pipeline_mode = #tpu.pipeline_mode<synchronous>, transform_indices = @transform_1, window_bounds = array<i64: 1, 256>}, {pipeline_mode = #tpu.pipeline_mode<synchronous>, transform_indices = @transform_2, window_bounds = array<i64: 1, 256>}, {transform_indices = @transform_3, window_bounds = array<i64: 8, 256>}]} {
    %c0 = arith.constant 0 : index
    %c0_0 = arith.constant 0 : index
    %0 = vector.load %arg1[%c0, %c0_0] : memref<8x256xf32, #tpu.memory_space<vmem>>, vector<8x256xf32>
    %c0_1 = arith.constant 0 : index
    %c0_2 = arith.constant 0 : index
    %1 = vector.load %arg2[%c0_1, %c0_2] : memref<1x256xf32, #tpu.memory_space<vmem>>, vector<1x256xf32>
    %2 = vector.broadcast %1 : vector<1x256xf32> to vector<8x256xf32>
    %3 = arith.mulf %0, %2 : vector<8x256xf32>
    %c0_3 = arith.constant 0 : index
    %c0_4 = arith.constant 0 : index
    %4 = vector.load %arg3[%c0_3, %c0_4] : memref<1x256xf32, #tpu.memory_space<vmem>>, vector<1x256xf32>
    %5 = vector.broadcast %4 : vector<1x256xf32> to vector<8x256xf32>
    %6 = arith.addf %3, %5 : vector<8x256xf32>
    %cst = arith.constant 0.000000e+00 : f32
    %7 = vector.broadcast %cst : f32 to vector<8x256xf32>
    %8 = arith.maximumf %6, %7 : vector<8x256xf32>
    %c0_5 = arith.constant 0 : index
    %c0_6 = arith.constant 0 : index
    %9 = vector.load %arg4[%c0_5, %c0_6] : memref<8x256xf32, #tpu.memory_space<vmem>>, vector<8x256xf32>
    tpu.vector_store %arg4[%c0_5, %c0_6], %8 {strides = array<i32>} : memref<8x256xf32, #tpu.memory_space<vmem>>, vector<8x256xf32>,
    return
  }
  func.func @transform_0(%arg0: i32) -> (i32, i32) {
    %c0_i32 = arith.constant 0 : i32
    %c0_i32_0 = arith.constant 0 : i32
    return %arg0, %c0_i32 : i32, i32
  }
  func.func @transform_1(%arg0: i32) -> (i32, i32) {
    %c0_i32 = arith.constant 0 : i32
    %c0_i32_0 = arith.constant 0 : i32
    %c0_i32_1 = arith.constant 0 : i32
    return %c0_i32, %c0_i32_0 : i32, i32
  }
  func.func @transform_2(%arg0: i32) -> (i32, i32) {
    %c0_i32 = arith.constant 0 : i32
    %c0_i32_0 = arith.constant 0 : i32
    %c0_i32_1 = arith.constant 0 : i32
    return %c0_i32, %c0_i32_0 : i32, i32
  }
  func.func @transform_3(%arg0: i32) -> (i32, i32) {
    %c0_i32 = arith.constant 0 : i32
    %c0_i32_0 = arith.constant 0 : i32
    return %arg0, %c0_i32 : i32, i32
  }
}

module attributes {stable_mosaic.version = 11 : i64} {
  func.func @matmul_kernel(%arg0: i32, %arg1: memref<32x64xbf16, #tpu.memory_space<vmem>>, %arg2: memref<64x512xbf16, #tpu.memory_space<vmem>>, %arg3: memref<32x512xf32, #tpu.memory_space<vmem>>) attributes {dimension_semantics = [#tpu.dimension_semantics<parallel>], iteration_bounds = array<i64: 1>, scalar_prefetch = 0 : i64, scratch_operands = 0 : i64, tpu.core_type = #tpu.core_type<tc>, window_params = [{transform_indices = @transform_0, window_bounds = array<i64: 32, 64>}, {pipeline_mode = #tpu.pipeline_mode<synchronous>, transform_indices = @transform_1, window_bounds = array<i64: 64, 512>}, {transform_indices = @transform_2, window_bounds = array<i64: 32, 512>}]} {
    %c0 = arith.constant 0 : index
    %c0_0 = arith.constant 0 : index
    %0 = vector.load %arg1[%c0, %c0_0] : memref<32x64xbf16, #tpu.memory_space<vmem>>, vector<32x64xbf16>
    %c0_1 = arith.constant 0 : index
    %c0_2 = arith.constant 0 : index
    %1 = vector.load %arg2[%c0_1, %c0_2] : memref<64x512xbf16, #tpu.memory_space<vmem>>, vector<64x512xbf16>
    %cst = arith.constant dense<0.000000e+00> : vector<32x512xf32>
    %2 = tpu.matmul %0, %1, %cst {dimension_numbers = #tpu.dot_dimension_numbers<[1], [0], [0], [1], [0, 0, 1, 1], [], []>} : vector<32x64xbf16>, vector<64x512xbf16>, vector<32x512xf32> -> vector<32x512xf32>
    %c0_3 = arith.constant 0 : index
    %c0_4 = arith.constant 0 : index
    %3 = vector.load %arg3[%c0_3, %c0_4] : memref<32x512xf32, #tpu.memory_space<vmem>>, vector<32x512xf32>
    tpu.vector_store %arg3[%c0_3, %c0_4], %2 {strides = array<i32>} : memref<32x512xf32, #tpu.memory_space<vmem>>, vector<32x512xf32>,
    return
  }
  func.func @transform_0(%arg0: i32) -> (i32, i32) {
    %c0_i32 = arith.constant 0 : i32
    %c0_i32_0 = arith.constant 0 : i32
    return %arg0, %c0_i32 : i32, i32
  }
  func.func @transform_1(%arg0: i32) -> (i32, i32) {
    %c0_i32 = arith.constant 0 : i32
    %c0_i32_0 = arith.constant 0 : i32
    %c0_i32_1 = arith.constant 0 : i32
    return %c0_i32, %c0_i32_0 : i32, i32
  }
  func.func @transform_2(%arg0: i32) -> (i32, i32) {
    %c0_i32 = arith.constant 0 : i32
    %c0_i32_0 = arith.constant 0 : i32
    return %arg0, %c0_i32 : i32, i32
  }
}

module attributes {stable_mosaic.version = 11 : i64} {
  func.func @stats_kernel(%arg0: i32, %arg1: memref<16x256xf32, #tpu.memory_space<vmem>>, %arg2: memref<1x256xf32, #tpu.memory_space<vmem>>, %arg3: memref<1x256xf32, #tpu.memory_space<vmem>>) attributes {dimension_semantics = [#tpu.dimension_semantics<arbitrary>], iteration_bounds = array<i64: 1>, scalar_prefetch = 0 : i64, scratch_operands = 0 : i64, tpu.core_type = #tpu.core_type<tc>, window_params = [{transform_indices = @transform_0, window_bounds = array<i64: 16, 256>}, {pipeline_mode = #tpu.pipeline_mode<synchronous>, transform_indices = @transform_1, window_bounds = array<i64: 1, 256>}, {pipeline_mode = #tpu.pipeline_mode<synchronous>, transform_indices = @transform_2, window_bounds = array<i64: 1, 256>}]} {
    %c0_i32 = arith.constant 0 : i32
    %0 = arith.cmpi eq, %arg0, %c0_i32 : i32
    %1 = arith.extui %0 : i1 to i32
    %c0_i32_0 = arith.constant 0 : i32
    %2 = arith.cmpi ne, %1, %c0_i32_0 : i32
    scf.if %2 {
      %cst_11 = arith.constant 0.000000e+00 : f32
      %15 = vector.broadcast %cst_11 : f32 to vector<1x256xf32>
      %c0_12 = arith.constant 0 : index
      %c0_13 = arith.constant 0 : index
      %16 = vector.load %arg2[%c0_12, %c0_13] : memref<1x256xf32, #tpu.memory_space<vmem>>, vector<1x256xf32>
      tpu.vector_store %arg2[%c0_12, %c0_13], %15 {strides = array<i32>} : memref<1x256xf32, #tpu.memory_space<vmem>>, vector<1x256xf32>,
      %cst_14 = arith.constant 0.000000e+00 : f32
      %17 = vector.broadcast %cst_14 : f32 to vector<1x256xf32>
      %c0_15 = arith.constant 0 : index
      %c0_16 = arith.constant 0 : index
      %18 = vector.load %arg3[%c0_15, %c0_16] : memref<1x256xf32, #tpu.memory_space<vmem>>, vector<1x256xf32>
      tpu.vector_store %arg3[%c0_15, %c0_16], %17 {strides = array<i32>} : memref<1x256xf32, #tpu.memory_space<vmem>>, vector<1x256xf32>,
    } else {
    }
    %c0 = arith.constant 0 : index
    %c0_1 = arith.constant 0 : index
    %3 = vector.load %arg1[%c0, %c0_1] : memref<16x256xf32, #tpu.memory_space<vmem>>, vector<16x256xf32>
    %c0_2 = arith.constant 0 : index
    %c0_3 = arith.constant 0 : index
    %4 = vector.load %arg2[%c0_2, %c0_3] : memref<1x256xf32, #tpu.memory_space<vmem>>, vector<1x256xf32>
    %cst = arith.constant dense<0.000000e+00> : vector<256xf32>
    %5 = vector.multi_reduction <add>, %3, %cst [0] : vector<16x256xf32> to vector<256xf32>
    %6 = vector.shape_cast %5 : vector<256xf32> to vector<1x256xf32>
    %7 = arith.addf %4, %6 : vector<1x256xf32>
    %c0_4 = arith.constant 0 : index
    %c0_5 = arith.constant 0 : index
    %8 = vector.load %arg2[%c0_4, %c0_5] : memref<1x256xf32, #tpu.memory_space<vmem>>, vector<1x256xf32>
    tpu.vector_store %arg2[%c0_4, %c0_5], %7 {strides = array<i32>} : memref<1x256xf32, #tpu.memory_space<vmem>>, vector<1x256xf32>,
    %c0_6 = arith.constant 0 : index
    %c0_7 = arith.constant 0 : index
    %9 = vector.load %arg3[%c0_6, %c0_7] : memref<1x256xf32, #tpu.memory_space<vmem>>, vector<1x256xf32>
    %10 = arith.mulf %3, %3 : vector<16x256xf32>
    %cst_8 = arith.constant dense<0.000000e+00> : vector<256xf32>
    %11 = vector.multi_reduction <add>, %10, %cst_8 [0] : vector<16x256xf32> to vector<256xf32>
    %12 = vector.shape_cast %11 : vector<256xf32> to vector<1x256xf32>
    %13 = arith.addf %9, %12 : vector<1x256xf32>
    %c0_9 = arith.constant 0 : index
    %c0_10 = arith.constant 0 : index
    %14 = vector.load %arg3[%c0_9, %c0_10] : memref<1x256xf32, #tpu.memory_space<vmem>>, vector<1x256xf32>
    tpu.vector_store %arg3[%c0_9, %c0_10], %13 {strides = array<i32>} : memref<1x256xf32, #tpu.memory_space<vmem>>, vector<1x256xf32>,
    return
  }
  func.func @transform_0(%arg0: i32) -> (i32, i32) {
    %c0_i32 = arith.constant 0 : i32
    %c0_i32_0 = arith.constant 0 : i32
    return %arg0, %c0_i32 : i32, i32
  }
  func.func @transform_1(%arg0: i32) -> (i32, i32) {
    %c0_i32 = arith.constant 0 : i32
    %c0_i32_0 = arith.constant 0 : i32
    %c0_i32_1 = arith.constant 0 : i32
    return %c0_i32, %c0_i32_0 : i32, i32
  }
  func.func @transform_2(%arg0: i32) -> (i32, i32) {
    %c0_i32 = arith.constant 0 : i32
    %c0_i32_0 = arith.constant 0 : i32
    %c0_i32_1 = arith.constant 0 : i32
    return %c0_i32, %c0_i32_0 : i32, i32
  }
}

module attributes {stable_mosaic.version = 11 : i64} {
  func.func @bn_act_kernel(%arg0: i32, %arg1: memref<16x256xf32, #tpu.memory_space<vmem>>, %arg2: memref<1x256xf32, #tpu.memory_space<vmem>>, %arg3: memref<1x256xf32, #tpu.memory_space<vmem>>, %arg4: memref<16x256xf32, #tpu.memory_space<vmem>>) attributes {dimension_semantics = [#tpu.dimension_semantics<parallel>], iteration_bounds = array<i64: 1>, scalar_prefetch = 0 : i64, scratch_operands = 0 : i64, tpu.core_type = #tpu.core_type<tc>, window_params = [{transform_indices = @transform_0, window_bounds = array<i64: 16, 256>}, {pipeline_mode = #tpu.pipeline_mode<synchronous>, transform_indices = @transform_1, window_bounds = array<i64: 1, 256>}, {pipeline_mode = #tpu.pipeline_mode<synchronous>, transform_indices = @transform_2, window_bounds = array<i64: 1, 256>}, {transform_indices = @transform_3, window_bounds = array<i64: 16, 256>}]} {
    %c0 = arith.constant 0 : index
    %c0_0 = arith.constant 0 : index
    %0 = vector.load %arg1[%c0, %c0_0] : memref<16x256xf32, #tpu.memory_space<vmem>>, vector<16x256xf32>
    %c0_1 = arith.constant 0 : index
    %c0_2 = arith.constant 0 : index
    %1 = vector.load %arg2[%c0_1, %c0_2] : memref<1x256xf32, #tpu.memory_space<vmem>>, vector<1x256xf32>
    %2 = vector.broadcast %1 : vector<1x256xf32> to vector<16x256xf32>
    %3 = arith.mulf %0, %2 : vector<16x256xf32>
    %c0_3 = arith.constant 0 : index
    %c0_4 = arith.constant 0 : index
    %4 = vector.load %arg3[%c0_3, %c0_4] : memref<1x256xf32, #tpu.memory_space<vmem>>, vector<1x256xf32>
    %5 = vector.broadcast %4 : vector<1x256xf32> to vector<16x256xf32>
    %6 = arith.addf %3, %5 : vector<16x256xf32>
    %cst = arith.constant 0.000000e+00 : f32
    %7 = vector.broadcast %cst : f32 to vector<16x256xf32>
    %8 = arith.maximumf %6, %7 : vector<16x256xf32>
    %c0_5 = arith.constant 0 : index
    %c0_6 = arith.constant 0 : index
    %9 = vector.load %arg4[%c0_5, %c0_6] : memref<16x256xf32, #tpu.memory_space<vmem>>, vector<16x256xf32>
    tpu.vector_store %arg4[%c0_5, %c0_6], %8 {strides = array<i32>} : memref<16x256xf32, #tpu.memory_space<vmem>>, vector<16x256xf32>,
    return
  }
  func.func @transform_0(%arg0: i32) -> (i32, i32) {
    %c0_i32 = arith.constant 0 : i32
    %c0_i32_0 = arith.constant 0 : i32
    return %arg0, %c0_i32 : i32, i32
  }
  func.func @transform_1(%arg0: i32) -> (i32, i32) {
    %c0_i32 = arith.constant 0 : i32
    %c0_i32_0 = arith.constant 0 : i32
    %c0_i32_1 = arith.constant 0 : i32
    return %c0_i32, %c0_i32_0 : i32, i32
  }
  func.func @transform_2(%arg0: i32) -> (i32, i32) {
    %c0_i32 = arith.constant 0 : i32
    %c0_i32_0 = arith.constant 0 : i32
    %c0_i32_1 = arith.constant 0 : i32
    return %c0_i32, %c0_i32_0 : i32, i32
  }
  func.func @transform_3(%arg0: i32) -> (i32, i32) {
    %c0_i32 = arith.constant 0 : i32
    %c0_i32_0 = arith.constant 0 : i32
    return %arg0, %c0_i32 : i32, i32
  }
}

module attributes {stable_mosaic.version = 11 : i64} {
  func.func @matmul_kernel(%arg0: i32, %arg1: memref<128x32xbf16, #tpu.memory_space<vmem>>, %arg2: memref<32x256xbf16, #tpu.memory_space<vmem>>, %arg3: memref<128x256xf32, #tpu.memory_space<vmem>>) attributes {dimension_semantics = [#tpu.dimension_semantics<parallel>], iteration_bounds = array<i64: 1>, scalar_prefetch = 0 : i64, scratch_operands = 0 : i64, tpu.core_type = #tpu.core_type<tc>, window_params = [{transform_indices = @transform_0, window_bounds = array<i64: 128, 32>}, {pipeline_mode = #tpu.pipeline_mode<synchronous>, transform_indices = @transform_1, window_bounds = array<i64: 32, 256>}, {transform_indices = @transform_2, window_bounds = array<i64: 128, 256>}]} {
    %c0 = arith.constant 0 : index
    %c0_0 = arith.constant 0 : index
    %0 = vector.load %arg1[%c0, %c0_0] : memref<128x32xbf16, #tpu.memory_space<vmem>>, vector<128x32xbf16>
    %c0_1 = arith.constant 0 : index
    %c0_2 = arith.constant 0 : index
    %1 = vector.load %arg2[%c0_1, %c0_2] : memref<32x256xbf16, #tpu.memory_space<vmem>>, vector<32x256xbf16>
    %cst = arith.constant dense<0.000000e+00> : vector<128x256xf32>
    %2 = tpu.matmul %0, %1, %cst {dimension_numbers = #tpu.dot_dimension_numbers<[1], [0], [0], [1], [0, 0, 1, 1], [], []>} : vector<128x32xbf16>, vector<32x256xbf16>, vector<128x256xf32> -> vector<128x256xf32>
    %c0_3 = arith.constant 0 : index
    %c0_4 = arith.constant 0 : index
    %3 = vector.load %arg3[%c0_3, %c0_4] : memref<128x256xf32, #tpu.memory_space<vmem>>, vector<128x256xf32>
    tpu.vector_store %arg3[%c0_3, %c0_4], %2 {strides = array<i32>} : memref<128x256xf32, #tpu.memory_space<vmem>>, vector<128x256xf32>,
    return
  }
  func.func @transform_0(%arg0: i32) -> (i32, i32) {
    %c0_i32 = arith.constant 0 : i32
    %c0_i32_0 = arith.constant 0 : i32
    return %arg0, %c0_i32 : i32, i32
  }
  func.func @transform_1(%arg0: i32) -> (i32, i32) {
    %c0_i32 = arith.constant 0 : i32
    %c0_i32_0 = arith.constant 0 : i32
    %c0_i32_1 = arith.constant 0 : i32
    return %c0_i32, %c0_i32_0 : i32, i32
  }
  func.func @transform_2(%arg0: i32) -> (i32, i32) {
    %c0_i32 = arith.constant 0 : i32
    %c0_i32_0 = arith.constant 0 : i32
    return %arg0, %c0_i32 : i32, i32
  }
}

module attributes {stable_mosaic.version = 11 : i64} {
  func.func @stats_kernel(%arg0: i32, %arg1: memref<32x256xf32, #tpu.memory_space<vmem>>, %arg2: memref<1x256xf32, #tpu.memory_space<vmem>>, %arg3: memref<1x256xf32, #tpu.memory_space<vmem>>) attributes {dimension_semantics = [#tpu.dimension_semantics<arbitrary>], iteration_bounds = array<i64: 1>, scalar_prefetch = 0 : i64, scratch_operands = 0 : i64, tpu.core_type = #tpu.core_type<tc>, window_params = [{transform_indices = @transform_0, window_bounds = array<i64: 32, 256>}, {pipeline_mode = #tpu.pipeline_mode<synchronous>, transform_indices = @transform_1, window_bounds = array<i64: 1, 256>}, {pipeline_mode = #tpu.pipeline_mode<synchronous>, transform_indices = @transform_2, window_bounds = array<i64: 1, 256>}]} {
    %c0_i32 = arith.constant 0 : i32
    %0 = arith.cmpi eq, %arg0, %c0_i32 : i32
    %1 = arith.extui %0 : i1 to i32
    %c0_i32_0 = arith.constant 0 : i32
    %2 = arith.cmpi ne, %1, %c0_i32_0 : i32
    scf.if %2 {
      %cst_11 = arith.constant 0.000000e+00 : f32
      %15 = vector.broadcast %cst_11 : f32 to vector<1x256xf32>
      %c0_12 = arith.constant 0 : index
      %c0_13 = arith.constant 0 : index
      %16 = vector.load %arg2[%c0_12, %c0_13] : memref<1x256xf32, #tpu.memory_space<vmem>>, vector<1x256xf32>
      tpu.vector_store %arg2[%c0_12, %c0_13], %15 {strides = array<i32>} : memref<1x256xf32, #tpu.memory_space<vmem>>, vector<1x256xf32>,
      %cst_14 = arith.constant 0.000000e+00 : f32
      %17 = vector.broadcast %cst_14 : f32 to vector<1x256xf32>
      %c0_15 = arith.constant 0 : index
      %c0_16 = arith.constant 0 : index
      %18 = vector.load %arg3[%c0_15, %c0_16] : memref<1x256xf32, #tpu.memory_space<vmem>>, vector<1x256xf32>
      tpu.vector_store %arg3[%c0_15, %c0_16], %17 {strides = array<i32>} : memref<1x256xf32, #tpu.memory_space<vmem>>, vector<1x256xf32>,
    } else {
    }
    %c0 = arith.constant 0 : index
    %c0_1 = arith.constant 0 : index
    %3 = vector.load %arg1[%c0, %c0_1] : memref<32x256xf32, #tpu.memory_space<vmem>>, vector<32x256xf32>
    %c0_2 = arith.constant 0 : index
    %c0_3 = arith.constant 0 : index
    %4 = vector.load %arg2[%c0_2, %c0_3] : memref<1x256xf32, #tpu.memory_space<vmem>>, vector<1x256xf32>
    %cst = arith.constant dense<0.000000e+00> : vector<256xf32>
    %5 = vector.multi_reduction <add>, %3, %cst [0] : vector<32x256xf32> to vector<256xf32>
    %6 = vector.shape_cast %5 : vector<256xf32> to vector<1x256xf32>
    %7 = arith.addf %4, %6 : vector<1x256xf32>
    %c0_4 = arith.constant 0 : index
    %c0_5 = arith.constant 0 : index
    %8 = vector.load %arg2[%c0_4, %c0_5] : memref<1x256xf32, #tpu.memory_space<vmem>>, vector<1x256xf32>
    tpu.vector_store %arg2[%c0_4, %c0_5], %7 {strides = array<i32>} : memref<1x256xf32, #tpu.memory_space<vmem>>, vector<1x256xf32>,
    %c0_6 = arith.constant 0 : index
    %c0_7 = arith.constant 0 : index
    %9 = vector.load %arg3[%c0_6, %c0_7] : memref<1x256xf32, #tpu.memory_space<vmem>>, vector<1x256xf32>
    %10 = arith.mulf %3, %3 : vector<32x256xf32>
    %cst_8 = arith.constant dense<0.000000e+00> : vector<256xf32>
    %11 = vector.multi_reduction <add>, %10, %cst_8 [0] : vector<32x256xf32> to vector<256xf32>
    %12 = vector.shape_cast %11 : vector<256xf32> to vector<1x256xf32>
    %13 = arith.addf %9, %12 : vector<1x256xf32>
    %c0_9 = arith.constant 0 : index
    %c0_10 = arith.constant 0 : index
    %14 = vector.load %arg3[%c0_9, %c0_10] : memref<1x256xf32, #tpu.memory_space<vmem>>, vector<1x256xf32>
    tpu.vector_store %arg3[%c0_9, %c0_10], %13 {strides = array<i32>} : memref<1x256xf32, #tpu.memory_space<vmem>>, vector<1x256xf32>,
    return
  }
  func.func @transform_0(%arg0: i32) -> (i32, i32) {
    %c0_i32 = arith.constant 0 : i32
    %c0_i32_0 = arith.constant 0 : i32
    return %arg0, %c0_i32 : i32, i32
  }
  func.func @transform_1(%arg0: i32) -> (i32, i32) {
    %c0_i32 = arith.constant 0 : i32
    %c0_i32_0 = arith.constant 0 : i32
    %c0_i32_1 = arith.constant 0 : i32
    return %c0_i32, %c0_i32_0 : i32, i32
  }
  func.func @transform_2(%arg0: i32) -> (i32, i32) {
    %c0_i32 = arith.constant 0 : i32
    %c0_i32_0 = arith.constant 0 : i32
    %c0_i32_1 = arith.constant 0 : i32
    return %c0_i32, %c0_i32_0 : i32, i32
  }
}

module attributes {stable_mosaic.version = 11 : i64} {
  func.func @bn_act_kernel(%arg0: i32, %arg1: memref<32x256xf32, #tpu.memory_space<vmem>>, %arg2: memref<1x256xf32, #tpu.memory_space<vmem>>, %arg3: memref<1x256xf32, #tpu.memory_space<vmem>>, %arg4: memref<32x256xf32, #tpu.memory_space<vmem>>) attributes {dimension_semantics = [#tpu.dimension_semantics<parallel>], iteration_bounds = array<i64: 1>, scalar_prefetch = 0 : i64, scratch_operands = 0 : i64, tpu.core_type = #tpu.core_type<tc>, window_params = [{transform_indices = @transform_0, window_bounds = array<i64: 32, 256>}, {pipeline_mode = #tpu.pipeline_mode<synchronous>, transform_indices = @transform_1, window_bounds = array<i64: 1, 256>}, {pipeline_mode = #tpu.pipeline_mode<synchronous>, transform_indices = @transform_2, window_bounds = array<i64: 1, 256>}, {transform_indices = @transform_3, window_bounds = array<i64: 32, 256>}]} {
    %c0 = arith.constant 0 : index
    %c0_0 = arith.constant 0 : index
    %0 = vector.load %arg1[%c0, %c0_0] : memref<32x256xf32, #tpu.memory_space<vmem>>, vector<32x256xf32>
    %c0_1 = arith.constant 0 : index
    %c0_2 = arith.constant 0 : index
    %1 = vector.load %arg2[%c0_1, %c0_2] : memref<1x256xf32, #tpu.memory_space<vmem>>, vector<1x256xf32>
    %2 = vector.broadcast %1 : vector<1x256xf32> to vector<32x256xf32>
    %3 = arith.mulf %0, %2 : vector<32x256xf32>
    %c0_3 = arith.constant 0 : index
    %c0_4 = arith.constant 0 : index
    %4 = vector.load %arg3[%c0_3, %c0_4] : memref<1x256xf32, #tpu.memory_space<vmem>>, vector<1x256xf32>
    %5 = vector.broadcast %4 : vector<1x256xf32> to vector<32x256xf32>
    %6 = arith.addf %3, %5 : vector<32x256xf32>
    %cst = arith.constant 0.000000e+00 : f32
    %7 = vector.broadcast %cst : f32 to vector<32x256xf32>
    %8 = arith.maximumf %6, %7 : vector<32x256xf32>
    %c0_5 = arith.constant 0 : index
    %c0_6 = arith.constant 0 : index
    %9 = vector.load %arg4[%c0_5, %c0_6] : memref<32x256xf32, #tpu.memory_space<vmem>>, vector<32x256xf32>
    tpu.vector_store %arg4[%c0_5, %c0_6], %8 {strides = array<i32>} : memref<32x256xf32, #tpu.memory_space<vmem>>, vector<32x256xf32>,
    return
  }
  func.func @transform_0(%arg0: i32) -> (i32, i32) {
    %c0_i32 = arith.constant 0 : i32
    %c0_i32_0 = arith.constant 0 : i32
    return %arg0, %c0_i32 : i32, i32
  }
  func.func @transform_1(%arg0: i32) -> (i32, i32) {
    %c0_i32 = arith.constant 0 : i32
    %c0_i32_0 = arith.constant 0 : i32
    %c0_i32_1 = arith.constant 0 : i32
    return %c0_i32, %c0_i32_0 : i32, i32
  }
  func.func @transform_2(%arg0: i32) -> (i32, i32) {
    %c0_i32 = arith.constant 0 : i32
    %c0_i32_0 = arith.constant 0 : i32
    %c0_i32_1 = arith.constant 0 : i32
    return %c0_i32, %c0_i32_0 : i32, i32
  }
  func.func @transform_3(%arg0: i32) -> (i32, i32) {
    %c0_i32 = arith.constant 0 : i32
    %c0_i32_0 = arith.constant 0 : i32
    return %arg0, %c0_i32 : i32, i32
  }
}

module attributes {stable_mosaic.version = 11 : i64} {
  func.func @matmul_kernel(%arg0: i32, %arg1: memref<512x16xbf16, #tpu.memory_space<vmem>>, %arg2: memref<16x128xbf16, #tpu.memory_space<vmem>>, %arg3: memref<512x128xf32, #tpu.memory_space<vmem>>) attributes {dimension_semantics = [#tpu.dimension_semantics<parallel>], iteration_bounds = array<i64: 1>, scalar_prefetch = 0 : i64, scratch_operands = 0 : i64, tpu.core_type = #tpu.core_type<tc>, window_params = [{transform_indices = @transform_0, window_bounds = array<i64: 512, 16>}, {pipeline_mode = #tpu.pipeline_mode<synchronous>, transform_indices = @transform_1, window_bounds = array<i64: 16, 128>}, {transform_indices = @transform_2, window_bounds = array<i64: 512, 128>}]} {
    %c0 = arith.constant 0 : index
    %c0_0 = arith.constant 0 : index
    %0 = vector.load %arg1[%c0, %c0_0] : memref<512x16xbf16, #tpu.memory_space<vmem>>, vector<512x16xbf16>
    %c0_1 = arith.constant 0 : index
    %c0_2 = arith.constant 0 : index
    %1 = vector.load %arg2[%c0_1, %c0_2] : memref<16x128xbf16, #tpu.memory_space<vmem>>, vector<16x128xbf16>
    %cst = arith.constant dense<0.000000e+00> : vector<512x128xf32>
    %2 = tpu.matmul %0, %1, %cst {dimension_numbers = #tpu.dot_dimension_numbers<[1], [0], [0], [1], [0, 0, 1, 1], [], []>} : vector<512x16xbf16>, vector<16x128xbf16>, vector<512x128xf32> -> vector<512x128xf32>
    %c0_3 = arith.constant 0 : index
    %c0_4 = arith.constant 0 : index
    %3 = vector.load %arg3[%c0_3, %c0_4] : memref<512x128xf32, #tpu.memory_space<vmem>>, vector<512x128xf32>
    tpu.vector_store %arg3[%c0_3, %c0_4], %2 {strides = array<i32>} : memref<512x128xf32, #tpu.memory_space<vmem>>, vector<512x128xf32>,
    return
  }
  func.func @transform_0(%arg0: i32) -> (i32, i32) {
    %c0_i32 = arith.constant 0 : i32
    %c0_i32_0 = arith.constant 0 : i32
    return %arg0, %c0_i32 : i32, i32
  }
  func.func @transform_1(%arg0: i32) -> (i32, i32) {
    %c0_i32 = arith.constant 0 : i32
    %c0_i32_0 = arith.constant 0 : i32
    %c0_i32_1 = arith.constant 0 : i32
    return %c0_i32, %c0_i32_0 : i32, i32
  }
  func.func @transform_2(%arg0: i32) -> (i32, i32) {
    %c0_i32 = arith.constant 0 : i32
    %c0_i32_0 = arith.constant 0 : i32
    return %arg0, %c0_i32 : i32, i32
  }
}

module attributes {stable_mosaic.version = 11 : i64} {
  func.func @stats_kernel(%arg0: i32, %arg1: memref<64x256xf32, #tpu.memory_space<vmem>>, %arg2: memref<1x256xf32, #tpu.memory_space<vmem>>, %arg3: memref<1x256xf32, #tpu.memory_space<vmem>>) attributes {dimension_semantics = [#tpu.dimension_semantics<arbitrary>], iteration_bounds = array<i64: 1>, scalar_prefetch = 0 : i64, scratch_operands = 0 : i64, tpu.core_type = #tpu.core_type<tc>, window_params = [{transform_indices = @transform_0, window_bounds = array<i64: 64, 256>}, {pipeline_mode = #tpu.pipeline_mode<synchronous>, transform_indices = @transform_1, window_bounds = array<i64: 1, 256>}, {pipeline_mode = #tpu.pipeline_mode<synchronous>, transform_indices = @transform_2, window_bounds = array<i64: 1, 256>}]} {
    %c0_i32 = arith.constant 0 : i32
    %0 = arith.cmpi eq, %arg0, %c0_i32 : i32
    %1 = arith.extui %0 : i1 to i32
    %c0_i32_0 = arith.constant 0 : i32
    %2 = arith.cmpi ne, %1, %c0_i32_0 : i32
    scf.if %2 {
      %cst_11 = arith.constant 0.000000e+00 : f32
      %15 = vector.broadcast %cst_11 : f32 to vector<1x256xf32>
      %c0_12 = arith.constant 0 : index
      %c0_13 = arith.constant 0 : index
      %16 = vector.load %arg2[%c0_12, %c0_13] : memref<1x256xf32, #tpu.memory_space<vmem>>, vector<1x256xf32>
      tpu.vector_store %arg2[%c0_12, %c0_13], %15 {strides = array<i32>} : memref<1x256xf32, #tpu.memory_space<vmem>>, vector<1x256xf32>,
      %cst_14 = arith.constant 0.000000e+00 : f32
      %17 = vector.broadcast %cst_14 : f32 to vector<1x256xf32>
      %c0_15 = arith.constant 0 : index
      %c0_16 = arith.constant 0 : index
      %18 = vector.load %arg3[%c0_15, %c0_16] : memref<1x256xf32, #tpu.memory_space<vmem>>, vector<1x256xf32>
      tpu.vector_store %arg3[%c0_15, %c0_16], %17 {strides = array<i32>} : memref<1x256xf32, #tpu.memory_space<vmem>>, vector<1x256xf32>,
    } else {
    }
    %c0 = arith.constant 0 : index
    %c0_1 = arith.constant 0 : index
    %3 = vector.load %arg1[%c0, %c0_1] : memref<64x256xf32, #tpu.memory_space<vmem>>, vector<64x256xf32>
    %c0_2 = arith.constant 0 : index
    %c0_3 = arith.constant 0 : index
    %4 = vector.load %arg2[%c0_2, %c0_3] : memref<1x256xf32, #tpu.memory_space<vmem>>, vector<1x256xf32>
    %cst = arith.constant dense<0.000000e+00> : vector<256xf32>
    %5 = vector.multi_reduction <add>, %3, %cst [0] : vector<64x256xf32> to vector<256xf32>
    %6 = vector.shape_cast %5 : vector<256xf32> to vector<1x256xf32>
    %7 = arith.addf %4, %6 : vector<1x256xf32>
    %c0_4 = arith.constant 0 : index
    %c0_5 = arith.constant 0 : index
    %8 = vector.load %arg2[%c0_4, %c0_5] : memref<1x256xf32, #tpu.memory_space<vmem>>, vector<1x256xf32>
    tpu.vector_store %arg2[%c0_4, %c0_5], %7 {strides = array<i32>} : memref<1x256xf32, #tpu.memory_space<vmem>>, vector<1x256xf32>,
    %c0_6 = arith.constant 0 : index
    %c0_7 = arith.constant 0 : index
    %9 = vector.load %arg3[%c0_6, %c0_7] : memref<1x256xf32, #tpu.memory_space<vmem>>, vector<1x256xf32>
    %10 = arith.mulf %3, %3 : vector<64x256xf32>
    %cst_8 = arith.constant dense<0.000000e+00> : vector<256xf32>
    %11 = vector.multi_reduction <add>, %10, %cst_8 [0] : vector<64x256xf32> to vector<256xf32>
    %12 = vector.shape_cast %11 : vector<256xf32> to vector<1x256xf32>
    %13 = arith.addf %9, %12 : vector<1x256xf32>
    %c0_9 = arith.constant 0 : index
    %c0_10 = arith.constant 0 : index
    %14 = vector.load %arg3[%c0_9, %c0_10] : memref<1x256xf32, #tpu.memory_space<vmem>>, vector<1x256xf32>
    tpu.vector_store %arg3[%c0_9, %c0_10], %13 {strides = array<i32>} : memref<1x256xf32, #tpu.memory_space<vmem>>, vector<1x256xf32>,
    return
  }
  func.func @transform_0(%arg0: i32) -> (i32, i32) {
    %c0_i32 = arith.constant 0 : i32
    %c0_i32_0 = arith.constant 0 : i32
    return %arg0, %c0_i32 : i32, i32
  }
  func.func @transform_1(%arg0: i32) -> (i32, i32) {
    %c0_i32 = arith.constant 0 : i32
    %c0_i32_0 = arith.constant 0 : i32
    %c0_i32_1 = arith.constant 0 : i32
    return %c0_i32, %c0_i32_0 : i32, i32
  }
  func.func @transform_2(%arg0: i32) -> (i32, i32) {
    %c0_i32 = arith.constant 0 : i32
    %c0_i32_0 = arith.constant 0 : i32
    %c0_i32_1 = arith.constant 0 : i32
    return %c0_i32, %c0_i32_0 : i32, i32
  }
}

module attributes {stable_mosaic.version = 11 : i64} {
  func.func @bn_act_kernel(%arg0: i32, %arg1: memref<64x256xf32, #tpu.memory_space<vmem>>, %arg2: memref<1x256xf32, #tpu.memory_space<vmem>>, %arg3: memref<1x256xf32, #tpu.memory_space<vmem>>, %arg4: memref<64x256xf32, #tpu.memory_space<vmem>>) attributes {dimension_semantics = [#tpu.dimension_semantics<parallel>], iteration_bounds = array<i64: 1>, scalar_prefetch = 0 : i64, scratch_operands = 0 : i64, tpu.core_type = #tpu.core_type<tc>, window_params = [{transform_indices = @transform_0, window_bounds = array<i64: 64, 256>}, {pipeline_mode = #tpu.pipeline_mode<synchronous>, transform_indices = @transform_1, window_bounds = array<i64: 1, 256>}, {pipeline_mode = #tpu.pipeline_mode<synchronous>, transform_indices = @transform_2, window_bounds = array<i64: 1, 256>}, {transform_indices = @transform_3, window_bounds = array<i64: 64, 256>}]} {
    %c0 = arith.constant 0 : index
    %c0_0 = arith.constant 0 : index
    %0 = vector.load %arg1[%c0, %c0_0] : memref<64x256xf32, #tpu.memory_space<vmem>>, vector<64x256xf32>
    %c0_1 = arith.constant 0 : index
    %c0_2 = arith.constant 0 : index
    %1 = vector.load %arg2[%c0_1, %c0_2] : memref<1x256xf32, #tpu.memory_space<vmem>>, vector<1x256xf32>
    %2 = vector.broadcast %1 : vector<1x256xf32> to vector<64x256xf32>
    %3 = arith.mulf %0, %2 : vector<64x256xf32>
    %c0_3 = arith.constant 0 : index
    %c0_4 = arith.constant 0 : index
    %4 = vector.load %arg3[%c0_3, %c0_4] : memref<1x256xf32, #tpu.memory_space<vmem>>, vector<1x256xf32>
    %5 = vector.broadcast %4 : vector<1x256xf32> to vector<64x256xf32>
    %6 = arith.addf %3, %5 : vector<64x256xf32>
    %cst = arith.constant 0.000000e+00 : f32
    %7 = vector.broadcast %cst : f32 to vector<64x256xf32>
    %8 = arith.maximumf %6, %7 : vector<64x256xf32>
    %c0_5 = arith.constant 0 : index
    %c0_6 = arith.constant 0 : index
    %9 = vector.load %arg4[%c0_5, %c0_6] : memref<64x256xf32, #tpu.memory_space<vmem>>, vector<64x256xf32>
    tpu.vector_store %arg4[%c0_5, %c0_6], %8 {strides = array<i32>} : memref<64x256xf32, #tpu.memory_space<vmem>>, vector<64x256xf32>,
    return
  }
  func.func @transform_0(%arg0: i32) -> (i32, i32) {
    %c0_i32 = arith.constant 0 : i32
    %c0_i32_0 = arith.constant 0 : i32
    return %arg0, %c0_i32 : i32, i32
  }
  func.func @transform_1(%arg0: i32) -> (i32, i32) {
    %c0_i32 = arith.constant 0 : i32
    %c0_i32_0 = arith.constant 0 : i32
    %c0_i32_1 = arith.constant 0 : i32
    return %c0_i32, %c0_i32_0 : i32, i32
  }
  func.func @transform_2(%arg0: i32) -> (i32, i32) {
    %c0_i32 = arith.constant 0 : i32
    %c0_i32_0 = arith.constant 0 : i32
    %c0_i32_1 = arith.constant 0 : i32
    return %c0_i32, %c0_i32_0 : i32, i32
  }
  func.func @transform_3(%arg0: i32) -> (i32, i32) {
    %c0_i32 = arith.constant 0 : i32
    %c0_i32_0 = arith.constant 0 : i32
    return %arg0, %c0_i32 : i32, i32
  }
}

module attributes {stable_mosaic.version = 11 : i64} {
  func.func @matmul_kernel(%arg0: i32, %arg1: memref<2048x8xbf16, #tpu.memory_space<vmem>>, %arg2: memref<8x128xbf16, #tpu.memory_space<vmem>>, %arg3: memref<2048x128xf32, #tpu.memory_space<vmem>>) attributes {dimension_semantics = [#tpu.dimension_semantics<parallel>], iteration_bounds = array<i64: 1>, scalar_prefetch = 0 : i64, scratch_operands = 0 : i64, tpu.core_type = #tpu.core_type<tc>, window_params = [{transform_indices = @transform_0, window_bounds = array<i64: 2048, 8>}, {pipeline_mode = #tpu.pipeline_mode<synchronous>, transform_indices = @transform_1, window_bounds = array<i64: 8, 128>}, {transform_indices = @transform_2, window_bounds = array<i64: 2048, 128>}]} {
    %c0 = arith.constant 0 : index
    %c0_0 = arith.constant 0 : index
    %0 = vector.load %arg1[%c0, %c0_0] : memref<2048x8xbf16, #tpu.memory_space<vmem>>, vector<2048x8xbf16>
    %c0_1 = arith.constant 0 : index
    %c0_2 = arith.constant 0 : index
    %1 = vector.load %arg2[%c0_1, %c0_2] : memref<8x128xbf16, #tpu.memory_space<vmem>>, vector<8x128xbf16>
    %cst = arith.constant dense<0.000000e+00> : vector<2048x128xf32>
    %2 = tpu.matmul %0, %1, %cst {dimension_numbers = #tpu.dot_dimension_numbers<[1], [0], [0], [1], [0, 0, 1, 1], [], []>} : vector<2048x8xbf16>, vector<8x128xbf16>, vector<2048x128xf32> -> vector<2048x128xf32>
    %c0_3 = arith.constant 0 : index
    %c0_4 = arith.constant 0 : index
    %3 = vector.load %arg3[%c0_3, %c0_4] : memref<2048x128xf32, #tpu.memory_space<vmem>>, vector<2048x128xf32>
    tpu.vector_store %arg3[%c0_3, %c0_4], %2 {strides = array<i32>} : memref<2048x128xf32, #tpu.memory_space<vmem>>, vector<2048x128xf32>,
    return
  }
  func.func @transform_0(%arg0: i32) -> (i32, i32) {
    %c0_i32 = arith.constant 0 : i32
    %c0_i32_0 = arith.constant 0 : i32
    return %arg0, %c0_i32 : i32, i32
  }
  func.func @transform_1(%arg0: i32) -> (i32, i32) {
    %c0_i32 = arith.constant 0 : i32
    %c0_i32_0 = arith.constant 0 : i32
    %c0_i32_1 = arith.constant 0 : i32
    return %c0_i32, %c0_i32_0 : i32, i32
  }
  func.func @transform_2(%arg0: i32) -> (i32, i32) {
    %c0_i32 = arith.constant 0 : i32
    %c0_i32_0 = arith.constant 0 : i32
    return %arg0, %c0_i32 : i32, i32
  }
}

module attributes {stable_mosaic.version = 11 : i64} {
  func.func @bn_act_kernel(%arg0: i32, %arg1: memref<96x256xf32, #tpu.memory_space<vmem>>, %arg2: memref<1x256xf32, #tpu.memory_space<vmem>>, %arg3: memref<1x256xf32, #tpu.memory_space<vmem>>, %arg4: memref<96x256xf32, #tpu.memory_space<vmem>>) attributes {dimension_semantics = [#tpu.dimension_semantics<parallel>], iteration_bounds = array<i64: 1>, scalar_prefetch = 0 : i64, scratch_operands = 0 : i64, tpu.core_type = #tpu.core_type<tc>, window_params = [{transform_indices = @transform_0, window_bounds = array<i64: 96, 256>}, {pipeline_mode = #tpu.pipeline_mode<synchronous>, transform_indices = @transform_1, window_bounds = array<i64: 1, 256>}, {pipeline_mode = #tpu.pipeline_mode<synchronous>, transform_indices = @transform_2, window_bounds = array<i64: 1, 256>}, {transform_indices = @transform_3, window_bounds = array<i64: 96, 256>}]} {
    %c0 = arith.constant 0 : index
    %c0_0 = arith.constant 0 : index
    %0 = vector.load %arg1[%c0, %c0_0] : memref<96x256xf32, #tpu.memory_space<vmem>>, vector<96x256xf32>
    %c0_1 = arith.constant 0 : index
    %c0_2 = arith.constant 0 : index
    %1 = vector.load %arg2[%c0_1, %c0_2] : memref<1x256xf32, #tpu.memory_space<vmem>>, vector<1x256xf32>
    %2 = vector.broadcast %1 : vector<1x256xf32> to vector<96x256xf32>
    %3 = arith.mulf %0, %2 : vector<96x256xf32>
    %c0_3 = arith.constant 0 : index
    %c0_4 = arith.constant 0 : index
    %4 = vector.load %arg3[%c0_3, %c0_4] : memref<1x256xf32, #tpu.memory_space<vmem>>, vector<1x256xf32>
    %5 = vector.broadcast %4 : vector<1x256xf32> to vector<96x256xf32>
    %6 = arith.addf %3, %5 : vector<96x256xf32>
    %7 = math.tanh %6 : vector<96x256xf32>
    %c0_5 = arith.constant 0 : index
    %c0_6 = arith.constant 0 : index
    %8 = vector.load %arg4[%c0_5, %c0_6] : memref<96x256xf32, #tpu.memory_space<vmem>>, vector<96x256xf32>
    tpu.vector_store %arg4[%c0_5, %c0_6], %7 {strides = array<i32>} : memref<96x256xf32, #tpu.memory_space<vmem>>, vector<96x256xf32>,
    return
  }
  func.func @transform_0(%arg0: i32) -> (i32, i32) {
    %c0_i32 = arith.constant 0 : i32
    %c0_i32_0 = arith.constant 0 : i32
    return %arg0, %c0_i32 : i32, i32
  }
  func.func @transform_1(%arg0: i32) -> (i32, i32) {
    %c0_i32 = arith.constant 0 : i32
    %c0_i32_0 = arith.constant 0 : i32
    %c0_i32_1 = arith.constant 0 : i32
    return %c0_i32, %c0_i32_0 : i32, i32
  }
  func.func @transform_2(%arg0: i32) -> (i32, i32) {
    %c0_i32 = arith.constant 0 : i32
    %c0_i32_0 = arith.constant 0 : i32
    %c0_i32_1 = arith.constant 0 : i32
    return %c0_i32, %c0_i32_0 : i32, i32
  }
  func.func @transform_3(%arg0: i32) -> (i32, i32) {
    %c0_i32 = arith.constant 0 : i32
    %c0_i32_0 = arith.constant 0 : i32
    return %arg0, %c0_i32 : i32, i32
  }
}

</mosaic_0001>

<llo_original>
// kernel: tile.43
$region0: #{tile.43}
  #allocation0 [shape = 's32[1]{0}', space=sflag, size = 0x4, scoped, tag = 'scoped memory for tile.43']
  %s0 = inlined_call_operand.vmem [shape: f32[64], index: 0, kind: input, shape index: {}]
  %s1 = inlined_call_operand.vmem [shape: f32[4,64], index: 1, kind: output, shape index: {}]
  // Predicated region
  $region2: #{tile.43} parent=0 // pred_check
    _
  $region3: #{tile.43} parent=0 // pred_check_branch
    %3 = sbr.rel (0) target = $region5
  $region4: #{tile.43} parent=0 // pred_region
    _
  $region5: #{tile.43} parent=0 // pred_fallthru
    _
  %v4 = vld [vmem:[%s0] ss:$0 sm:$0xff]
  %5 = vst [vmem:[%s1] sm:$0xf] %v4

// kernel: tile.44
$region0: #{tile.44}
  %s0 = inlined_call_operand.vmem [shape: f32[4,64], index: 0, kind: input, shape index: {}]
  %s1 = inlined_call_operand.vmem [shape: f32[1,256], index: 1, kind: output, shape index: {}]
  $region1: #{tile.44} parent=0
    #allocation0 [shape = 'u8[8192]{0}', space=vmem, size = 0x2000, scoped, tag = 'scoped mem for output reshape']
    #allocation1 [shape = 'u8[4096]{0}', space=vmem, size = 0x1000, scoped, tag = 'scoped mem for input reshape']
    %s3 = sshllo.u32 0, 4
    %v4 = vld [vmem:[%s0] sm:%s3]
    %5 = vst [vmem:[#allocation1] sm:%s3] %v4
    %s6 = smov 3
    %v7 = vld [vmem:[#allocation1] ss:$2 sm:%s6]
    %vm8 = vcmask 523264
    %9 = vst.msk [vmem:[#allocation0] ss:$8 sm:$0x3] %vm8, %v7
    %s10 = scalar_lea.vmem [#allocation1], 1
    %s11 = smov 3
    %v12 = vld [vmem:[%s10] ss:$2 sm:%s11]
    %13 = vrot.lane.b32.xlu0 %v12, 64
    %v14 = vpop.permute.xlu0 %13
    %vm15 = vcmask 1048064
    %16 = vst.msk [vmem:[#allocation0] ss:$8 sm:$0x3] %vm15, %v14
    %s18 = sshllo.u32 0, 1
    %v20 = vld [vmem:[#allocation0] sm:%s18]
    %s21 = sshllo.u32 0, 1
    %22 = vst [vmem:[%s1] sm:%s21] %v20
    %s23 = scalar_lea.vmem [#allocation0], 8
    %v24 = vld [vmem:[%s23] sm:%s18]
    %s25 = sshllo.u32 0, 1
    %s26 = scalar_lea.vmem %s1, 1
    %27 = vst [vmem:[%s26] sm:%s25] %v24

// kernel: generator_forward.15
$region0: #{generator_forward.15}
  #allocation0 [shape = 'u32[]', space=smem, size = 0x4, offset = 0x4, fixed_abs, tag = 'smem constant byte address 0x4 - core index']
  #allocation1 [shape = 'u32[144,128]{1,0:T(1,128)}', space=vmem, size = 0x12000, scoped, tag = 'internal scratch']
  %s0 = inlined_call_operand.vmem [shape: f32[8,256], index: 0, kind: input, shape index: {}]
  %s1 = inlined_call_operand.vmem [shape: f32[1,256], index: 1, kind: output, shape index: {0}]
  %s2 = inlined_call_operand.vmem [shape: f32[1,256], index: 2, kind: output, shape index: {1}]
  %3 = xla_tuple %s1, %s2
  %s4 = sld [smem:[#allocation0]]
  $region26: #{generator_forward.15} parent=0
    _
  %s6 = ssub.s32 1, %s4
  %s7 = scalar_select 0, %s6, %s4
  // Predicated region
  $region2: #{generator_forward.15} parent=0 // pred_check
    _
  $region3: #{generator_forward.15} parent=0 // pred_check_branch
    %9 = sbr.rel (0) target = $region5
  $region4: #{generator_forward.15} parent=0 // pred_region
    _
  $region5: #{generator_forward.15} parent=0 // pred_fallthru
    _
  %p10 = scmp.eq.s32.totalorder 0, 0
  // Predicated region
  $region6: #{generator_forward.15} parent=0 // pred_check
    %p11 = pneg %p10
  $region7: #{generator_forward.15} parent=0 // pred_check_branch
    %13 = sbr.rel (%p11) target = $region9
  $region8: #{generator_forward.15} parent=0 // pred_region
    %v14 = vlaneseq
    %vm15 = vcmp.ge.s32.totalorder %v14, 0
    %vm16 = vcmp.lt.s32.totalorder %v14, 256
    %vm17 = vmand %vm15, %vm16
    %18 = vst.msk [vmem:[%s1] sm:$0x3] %vm17, 0.0
    %19 = vst.msk [vmem:[%s2] sm:$0x3] %vm17, 0.0
  $region9: #{generator_forward.15} parent=0 // pred_fallthru
    _
  %v20 = vld [vmem:[%s0] sm:$0xff]
  %v21 = vld [vmem:[%s0 + $0x8] sm:$0xff]
  %v22 = vld [vmem:[%s1] sm:$0x3]
  %v23 = vrot.slane %v20, 4
  %v24 = vadd.f32 %v20, %v23
  %v25 = vrot.slane %v24, 2
  %v26 = vadd.f32 %v24, %v25
  %v27 = vrot.slane %v26, 1
  %v28 = vadd.f32 %v26, %v27
  %v29 = vrot.slane %v21, 4
  %v30 = vadd.f32 %v21, %v29
  %v31 = vrot.slane %v30, 2
  %v32 = vadd.f32 %v30, %v31
  %v33 = vrot.slane %v32, 1
  %v34 = vadd.f32 %v32, %v33
  %v37 = vcombine.low %v28, %v34
  %v39 = vunpack.c.l.s4 1966171168
  %v40 = vunpack.c.0.s8 %v39
  %v41 = vlaneseq
  %v42 = vshrl.u32 %v41, 7
  %v43 = vsub.s32 %v40, %v42
  %v44 = vrot.slane %v37, %v43
  %v46 = vunpack.c.l.s4 1966171168
  %v47 = vunpack.c.0.s8 %v46
  %v48 = vlaneseq
  %v49 = vshrl.u32 %v48, 7
  %v50 = vsub.s32 %v47, %v49
  %v51 = vrot.slane %v44, %v50
  %v53 = vadd.f32 %v22, %v51
  %v54 = vlaneseq
  %vm55 = vcmp.ge.s32.totalorder %v54, 0
  %vm56 = vcmp.lt.s32.totalorder %v54, 256
  %vm57 = vmand %vm55, %vm56
  %58 = vst.msk [vmem:[%s1] sm:$0x3] %vm57, %v53
  %v59 = vld [vmem:[%s2] sm:$0x3]
  %v60 = vmul.f32 %v20, %v20
  %v61 = vmul.f32 %v21, %v21
  %v62 = vrot.slane %v60, 4
  %v63 = vadd.f32 %v60, %v62
  %v64 = vrot.slane %v63, 2
  %v65 = vadd.f32 %v63, %v64
  %v66 = vrot.slane %v65, 1
  %v67 = vadd.f32 %v65, %v66
  %v68 = vrot.slane %v61, 4
  %v69 = vadd.f32 %v61, %v68
  %v70 = vrot.slane %v69, 2
  %v71 = vadd.f32 %v69, %v70
  %v72 = vrot.slane %v71, 1
  %v73 = vadd.f32 %v71, %v72
  %v76 = vcombine.low %v67, %v73
  %v78 = vunpack.c.l.s4 1966171168
  %v79 = vunpack.c.0.s8 %v78
  %v80 = vlaneseq
  %v81 = vshrl.u32 %v80, 7
  %v82 = vsub.s32 %v79, %v81
  %v83 = vrot.slane %v76, %v82
  %v85 = vunpack.c.l.s4 1966171168
  %v86 = vunpack.c.0.s8 %v85
  %v87 = vlaneseq
  %v88 = vshrl.u32 %v87, 7
  %v89 = vsub.s32 %v86, %v88
  %v90 = vrot.slane %v83, %v89
  %v92 = vadd.f32 %v59, %v90
  %93 = vst.msk [vmem:[%s2] sm:$0x3] %vm57, %v92
  // Predicated region
  $region10: #{generator_forward.15} parent=0 // pred_check
    _
  $region11: #{generator_forward.15} parent=0 // pred_check_branch
    %95 = sbr.rel (0) target = $region13
  $region12: #{generator_forward.15} parent=0 // pred_region
    _
  $region13: #{generator_forward.15} parent=0 // pred_fallthru
    _
  // Predicated region
  $region14: #{generator_forward.15} parent=0 // pred_check
    _
  $region15: #{generator_forward.15} parent=0 // pred_check_branch
    %97 = sbr.rel (0) target = $region17
  $region16: #{generator_forward.15} parent=0 // pred_region
    _
  $region17: #{generator_forward.15} parent=0 // pred_fallthru
    _
  // Predicated region
  $region18: #{generator_forward.15} parent=0 // pred_check
    _
  $region19: #{generator_forward.15} parent=0 // pred_check_branch
    %99 = sbr.rel (0) target = $region21
  $region20: #{generator_forward.15} parent=0 // pred_region
    _
  $region21: #{generator_forward.15} parent=0 // pred_fallthru
    _
  // Predicated region
  $region22: #{generator_forward.15} parent=0 // pred_check
    _
  $region23: #{generator_forward.15} parent=0 // pred_check_branch
    %101 = sbr.rel (0) target = $region25
  $region24: #{generator_forward.15} parent=0 // pred_region
    _
  $region25: #{generator_forward.15} parent=0 // pred_fallthru
    _

// kernel: generator_forward.14
$region0: #{generator_forward.14}
  #allocation0 [shape = 'u32[]', space=smem, size = 0x4, offset = 0x4, fixed_abs, tag = 'smem constant byte address 0x4 - core index']
  #allocation1 [shape = 'u32[144,128]{1,0:T(1,128)}', space=vmem, size = 0x12000, scoped, tag = 'internal scratch']
  %s0 = inlined_call_operand.vmem [shape: bf16[8,16], index: 0, kind: input, shape index: {}]
  %s1 = inlined_call_operand.vmem [shape: bf16[16,1024], index: 1, kind: input, shape index: {}]
  %s2 = inlined_call_operand.vmem [shape: f32[8,1024], index: 2, kind: output, shape index: {}]
  %s3 = sld [smem:[#allocation0]]
  $region18: #{generator_forward.14} parent=0
    _
  %s5 = ssub.s32 1, %s3
  %s6 = scalar_select 0, %s5, %s3
  // Predicated region
  $region2: #{generator_forward.14} parent=0 // pred_check
    _
  $region3: #{generator_forward.14} parent=0 // pred_check_branch
    %8 = sbr.rel (0) target = $region5
  $region4: #{generator_forward.14} parent=0 // pred_region
    _
  $region5: #{generator_forward.14} parent=0 // pred_fallthru
    _
  // Predicated region
  $region6: #{generator_forward.14} parent=0 // pred_check
    _
  $region7: #{generator_forward.14} parent=0 // pred_check_branch
    %10 = sbr.rel (0) target = $region9
  $region8: #{generator_forward.14} parent=0 // pred_region
    _
  $region9: #{generator_forward.14} parent=0 // pred_fallthru
    _
  %v12 = vld [vmem:[%s0] sm:$0xf]
  %v13 = vld [vmem:[%s1] sm:$0xff]
  %v14 = vld [vmem:[%s1 + $0x8] sm:$0xff]
  %v15 = vld [vmem:[%s1 + $0x10] sm:$0xff]
  %v16 = vld [vmem:[%s1 + $0x18] sm:$0xff]
  %v17 = vld [vmem:[%s1 + $0x20] sm:$0xff]
  %v18 = vld [vmem:[%s1 + $0x28] sm:$0xff]
  %v19 = vld [vmem:[%s1 + $0x30] sm:$0xff]
  %v20 = vld [vmem:[%s1 + $0x38] sm:$0xff]
  %v29 = vunpack.c.l.b16 %v13
  %v30 = vunpack.c.h.b16 %v13
  %v31 = vunpack.c.l.b16 %v14
  %v32 = vunpack.c.h.b16 %v14
  %v33 = vunpack.c.l.b16 %v15
  %v34 = vunpack.c.h.b16 %v15
  %v35 = vunpack.c.l.b16 %v16
  %v36 = vunpack.c.h.b16 %v16
  %v37 = vunpack.c.l.b16 %v17
  %v38 = vunpack.c.h.b16 %v17
  %v39 = vunpack.c.l.b16 %v18
  %v40 = vunpack.c.h.b16 %v18
  %v41 = vunpack.c.l.b16 %v19
  %v42 = vunpack.c.h.b16 %v19
  %v43 = vunpack.c.l.b16 %v20
  %v44 = vunpack.c.h.b16 %v20
  %v45 = vpack.c.b16 %v37, %v29
  %v46 = vpack.c.b16 %v38, %v30
  %v47 = vpack.c.b16 %v39, %v31
  %v48 = vpack.c.b16 %v40, %v32
  %v49 = vpack.c.b16 %v41, %v33
  %v50 = vpack.c.b16 %v42, %v34
  %v51 = vpack.c.b16 %v43, %v35
  %v52 = vpack.c.b16 %v44, %v36
  %vm61 = vcmask 130048
  %v63 = vsel %vm61, %v12, 0
  %65 = vmatprep.subr.bf16.mxu0 %v46
  %66 = vmatpush1.bf16.msra.mxu0 %v45
  %67 = vmatprep.subr.bf16.mxu0 0
  %68 = vmatpush1.bf16.msra.mxu0 0
  %69 = vmatprep.subr.bf16.mxu0 0
  %70 = vmatpush1.bf16.msra.mxu0 0
  %71 = vmatprep.subr.bf16.mxu0 0
  %72 = vmatpush1.bf16.msra.mxu0 0
  %73 = vmatprep.subr.bf16.mxu0 0
  %74 = vmatpush1.bf16.msra.mxu0 0
  %75 = vmatprep.subr.bf16.mxu0 0
  %76 = vmatpush1.bf16.msra.mxu0 0
  %77 = vmatprep.subr.bf16.mxu0 0
  %78 = vmatpush1.bf16.msra.mxu0 0
  %79 = vmatprep.subr.bf16.mxu0 0
  %80 = vmatpush1.bf16.msra.mxu0 0
  %81 = vmatprep.subr.bf16.mxu0 0
  %82 = vmatpush1.bf16.msra.mxu0 0
  %83 = vmatprep.subr.bf16.mxu0 0
  %84 = vmatpush1.bf16.msra.mxu0 0
  %85 = vmatprep.subr.bf16.mxu0 0
  %86 = vmatpush1.bf16.msra.mxu0 0
  %87 = vmatprep.subr.bf16.mxu0 0
  %88 = vmatpush1.bf16.msra.mxu0 0
  %89 = vmatprep.subr.bf16.mxu0 0
  %90 = vmatpush1.bf16.msra.mxu0 0
  %91 = vmatprep.subr.bf16.mxu0 0
  %92 = vmatpush1.bf16.msra.mxu0 0
  %93 = vmatprep.subr.bf16.mxu0 0
  %94 = vmatpush1.bf16.msra.mxu0 0
  %95 = vmatprep.subr.bf16.mxu0 0
  %96 = vmatpush1.bf16.msra.mxu0 0
  %97 = vmatprep.mubr.bf16.mxu0 0
  %98 = vmatmul.mubr.bf16.gmra.mrb[0].mxu0 %v63
  %v99 = vpop.f32.mrb[0].mxu0
  %v100 = vadd.f32 0.0, %v99
  %v101 = vpop.f32.mrb[0].mxu0
  %v102 = vadd.f32 0.0, %v101
  %v103 = vpop.f32.mrb[0].mxu0
  %v104 = vpop.f32.mrb[0].mxu0
  %105 = vdwg.mxu0
  %106 = vmatprep.subr.bf16.mxu0 %v48
  %107 = vmatpush1.bf16.msra.mxu0 %v47
  %108 = vmatprep.subr.bf16.mxu0 0
  %109 = vmatpush1.bf16.msra.mxu0 0
  %110 = vmatprep.subr.bf16.mxu0 0
  %111 = vmatpush1.bf16.msra.mxu0 0
  %112 = vmatprep.subr.bf16.mxu0 0
  %113 = vmatpush1.bf16.msra.mxu0 0
  %114 = vmatprep.subr.bf16.mxu0 0
  %115 = vmatpush1.bf16.msra.mxu0 0
  %116 = vmatprep.subr.bf16.mxu0 0
  %117 = vmatpush1.bf16.msra.mxu0 0
  %118 = vmatprep.subr.bf16.mxu0 0
  %119 = vmatpush1.bf16.msra.mxu0 0
  %120 = vmatprep.subr.bf16.mxu0 0
  %121 = vmatpush1.bf16.msra.mxu0 0
  %122 = vmatprep.subr.bf16.mxu0 0
  %123 = vmatpush1.bf16.msra.mxu0 0
  %124 = vmatprep.subr.bf16.mxu0 0
  %125 = vmatpush1.bf16.msra.mxu0 0
  %126 = vmatprep.subr.bf16.mxu0 0
  %127 = vmatpush1.bf16.msra.mxu0 0
  %128 = vmatprep.subr.bf16.mxu0 0
  %129 = vmatpush1.bf16.msra.mxu0 0
  %130 = vmatprep.subr.bf16.mxu0 0
  %131 = vmatpush1.bf16.msra.mxu0 0
  %132 = vmatprep.subr.bf16.mxu0 0
  %133 = vmatpush1.bf16.msra.mxu0 0
  %134 = vmatprep.subr.bf16.mxu0 0
  %135 = vmatpush1.bf16.msra.mxu0 0
  %136 = vmatprep.subr.bf16.mxu0 0
  %137 = vmatpush1.bf16.msra.mxu0 0
  %138 = vmatprep.mubr.bf16.mxu0 0
  %139 = vmatmul.mubr.bf16.gmra.mrb[0].mxu0 %v63
  %v140 = vpop.f32.mrb[0].mxu0
  %v141 = vadd.f32 0.0, %v140
  %v142 = vpop.f32.mrb[0].mxu0
  %v143 = vadd.f32 0.0, %v142
  %v144 = vpop.f32.mrb[0].mxu0
  %v145 = vpop.f32.mrb[0].mxu0
  %146 = vdwg.mxu0
  %147 = vmatprep.subr.bf16.mxu0 %v50
  %148 = vmatpush1.bf16.msra.mxu0 %v49
  %149 = vmatprep.subr.bf16.mxu0 0
  %150 = vmatpush1.bf16.msra.mxu0 0
  %151 = vmatprep.subr.bf16.mxu0 0
  %152 = vmatpush1.bf16.msra.mxu0 0
  %153 = vmatprep.subr.bf16.mxu0 0
  %154 = vmatpush1.bf16.msra.mxu0 0
  %155 = vmatprep.subr.bf16.mxu0 0
  %156 = vmatpush1.bf16.msra.mxu0 0
  %157 = vmatprep.subr.bf16.mxu0 0
  %158 = vmatpush1.bf16.msra.mxu0 0
  %159 = vmatprep.subr.bf16.mxu0 0
  %160 = vmatpush1.bf16.msra.mxu0 0
  %161 = vmatprep.subr.bf16.mxu0 0
  %162 = vmatpush1.bf16.msra.mxu0 0
  %163 = vmatprep.subr.bf16.mxu0 0
  %164 = vmatpush1.bf16.msra.mxu0 0
  %165 = vmatprep.subr.bf16.mxu0 0
  %166 = vmatpush1.bf16.msra.mxu0 0
  %167 = vmatprep.subr.bf16.mxu0 0
  %168 = vmatpush1.bf16.msra.mxu0 0
  %169 = vmatprep.subr.bf16.mxu0 0
  %170 = vmatpush1.bf16.msra.mxu0 0
  %171 = vmatprep.subr.bf16.mxu0 0
  %172 = vmatpush1.bf16.msra.mxu0 0
  %173 = vmatprep.subr.bf16.mxu0 0
  %174 = vmatpush1.bf16.msra.mxu0 0
  %175 = vmatprep.subr.bf16.mxu0 0
  %176 = vmatpush1.bf16.msra.mxu0 0
  %177 = vmatprep.subr.bf16.mxu0 0
  %178 = vmatpush1.bf16.msra.mxu0 0
  %179 = vmatprep.mubr.bf16.mxu0 0
  %180 = vmatmul.mubr.bf16.gmra.mrb[0].mxu0 %v63
  %v181 = vpop.f32.mrb[0].mxu0
  %v182 = vadd.f32 0.0, %v181
  %v183 = vpop.f32.mrb[0].mxu0
  %v184 = vadd.f32 0.0, %v183
  %v185 = vpop.f32.mrb[0].mxu0
  %v186 = vpop.f32.mrb[0].mxu0
  %187 = vdwg.mxu0
  %188 = vmatprep.subr.bf16.mxu0 %v52
  %189 = vmatpush1.bf16.msra.mxu0 %v51
  %190 = vmatprep.subr.bf16.mxu0 0
  %191 = vmatpush1.bf16.msra.mxu0 0
  %192 = vmatprep.subr.bf16.mxu0 0
  %193 = vmatpush1.bf16.msra.mxu0 0
  %194 = vmatprep.subr.bf16.mxu0 0
  %195 = vmatpush1.bf16.msra.mxu0 0
  %196 = vmatprep.subr.bf16.mxu0 0
  %197 = vmatpush1.bf16.msra.mxu0 0
  %198 = vmatprep.subr.bf16.mxu0 0
  %199 = vmatpush1.bf16.msra.mxu0 0
  %200 = vmatprep.subr.bf16.mxu0 0
  %201 = vmatpush1.bf16.msra.mxu0 0
  %202 = vmatprep.subr.bf16.mxu0 0
  %203 = vmatpush1.bf16.msra.mxu0 0
  %204 = vmatprep.subr.bf16.mxu0 0
  %205 = vmatpush1.bf16.msra.mxu0 0
  %206 = vmatprep.subr.bf16.mxu0 0
  %207 = vmatpush1.bf16.msra.mxu0 0
  %208 = vmatprep.subr.bf16.mxu0 0
  %209 = vmatpush1.bf16.msra.mxu0 0
  %210 = vmatprep.subr.bf16.mxu0 0
  %211 = vmatpush1.bf16.msra.mxu0 0
  %212 = vmatprep.subr.bf16.mxu0 0
  %213 = vmatpush1.bf16.msra.mxu0 0
  %214 = vmatprep.subr.bf16.mxu0 0
  %215 = vmatpush1.bf16.msra.mxu0 0
  %216 = vmatprep.subr.bf16.mxu0 0
  %217 = vmatpush1.bf16.msra.mxu0 0
  %218 = vmatprep.subr.bf16.mxu0 0
  %219 = vmatpush1.bf16.msra.mxu0 0
  %220 = vmatprep.mubr.bf16.mxu0 0
  %221 = vmatmul.mubr.bf16.gmra.mrb[0].mxu0 %v63
  %v222 = vpop.f32.mrb[0].mxu0
  %v223 = vadd.f32 0.0, %v222
  %v224 = vpop.f32.mrb[0].mxu0
  %v225 = vadd.f32 0.0, %v224
  %v226 = vpop.f32.mrb[0].mxu0
  %v227 = vpop.f32.mrb[0].mxu0
  %228 = vdwg.mxu0
  %229 = vst [vmem:[%s2] sm:$0xff] %v100
  %230 = vst [vmem:[%s2 + $0x8] sm:$0xff] %v102
  %231 = vst [vmem:[%s2 + $0x10] sm:$0xff] %v141
  %232 = vst [vmem:[%s2 + $0x18] sm:$0xff] %v143
  %233 = vst [vmem:[%s2 + $0x20] sm:$0xff] %v182
  %234 = vst [vmem:[%s2 + $0x28] sm:$0xff] %v184
  %235 = vst [vmem:[%s2 + $0x30] sm:$0xff] %v223
  %236 = vst [vmem:[%s2 + $0x38] sm:$0xff] %v225
  // Predicated region
  $region10: #{generator_forward.14} parent=0 // pred_check
    _
  $region11: #{generator_forward.14} parent=0 // pred_check_branch
    %238 = sbr.rel (0) target = $region13
  $region12: #{generator_forward.14} parent=0 // pred_region
    _
  $region13: #{generator_forward.14} parent=0 // pred_fallthru
    _
  // Predicated region
  $region14: #{generator_forward.14} parent=0 // pred_check
    _
  $region15: #{generator_forward.14} parent=0 // pred_check_branch
    %240 = sbr.rel (0) target = $region17
  $region16: #{generator_forward.14} parent=0 // pred_region
    _
  $region17: #{generator_forward.14} parent=0 // pred_fallthru
    _

// kernel: generator_forward.16
$region0: #{generator_forward.16}
  #allocation0 [shape = 'u32[]', space=smem, size = 0x4, offset = 0x4, fixed_abs, tag = 'smem constant byte address 0x4 - core index']
  #allocation1 [shape = 'u32[144,128]{1,0:T(1,128)}', space=vmem, size = 0x12000, scoped, tag = 'internal scratch']
  %s0 = inlined_call_operand.vmem [shape: f32[8,256], index: 0, kind: input, shape index: {}, may-alias: {0,3}]
  %s1 = inlined_call_operand.vmem [shape: f32[1,256], index: 1, kind: input, shape index: {}]
  %s2 = inlined_call_operand.vmem [shape: f32[1,256], index: 2, kind: input, shape index: {}]
  %s3 = inlined_call_operand.vmem [shape: f32[8,256], index: 3, kind: output, shape index: {}, may-alias: {0,3}]
  %s4 = sld [smem:[#allocation0]]
  $region22: #{generator_forward.16} parent=0
    _
  %s6 = ssub.s32 1, %s4
  %s7 = scalar_select 0, %s6, %s4
  // Predicated region
  $region2: #{generator_forward.16} parent=0 // pred_check
    _
  $region3: #{generator_forward.16} parent=0 // pred_check_branch
    %9 = sbr.rel (0) target = $region5
  $region4: #{generator_forward.16} parent=0 // pred_region
    _
  $region5: #{generator_forward.16} parent=0 // pred_fallthru
    _
  // Predicated region
  $region6: #{generator_forward.16} parent=0 // pred_check
    _
  $region7: #{generator_forward.16} parent=0 // pred_check_branch
    %11 = sbr.rel (0) target = $region9
  $region8: #{generator_forward.16} parent=0 // pred_region
    _
  $region9: #{generator_forward.16} parent=0 // pred_fallthru
    _
  // Predicated region
  $region10: #{generator_forward.16} parent=0 // pred_check
    _
  $region11: #{generator_forward.16} parent=0 // pred_check_branch
    %13 = sbr.rel (0) target = $region13
  $region12: #{generator_forward.16} parent=0 // pred_region
    _
  $region13: #{generator_forward.16} parent=0 // pred_fallthru
    _
  %v14 = vld [vmem:[%s0] sm:$0xff]
  %v15 = vld [vmem:[%s0 + $0x8] sm:$0xff]
  %v16 = vld [vmem:[%s1] sm:$0x3]
  %v18 = vlaneseq
  %v19 = vshrl.u32 %v18, 7
  %v20 = vsub.s32 0, %v19
  %v21 = vrot.slane %v16, %v20
  %v22 = vlaneseq
  %v23 = vshrl.u32 %v22, 7
  %v24 = vsub.s32 1, %v23
  %v25 = vrot.slane %v16, %v24
  %v28 = vmul.f32 %v14, %v21
  %v29 = vmul.f32 %v15, %v25
  %v30 = vld [vmem:[%s2] sm:$0x3]
  %v32 = vlaneseq
  %v33 = vshrl.u32 %v32, 7
  %v34 = vsub.s32 0, %v33
  %v35 = vrot.slane %v30, %v34
  %v36 = vlaneseq
  %v37 = vshrl.u32 %v36, 7
  %v38 = vsub.s32 1, %v37
  %v39 = vrot.slane %v30, %v38
  %v42 = vadd.f32 %v28, %v35
  %v43 = vadd.f32 %v29, %v39
  %v44 = vmax.f32 %v42, 0.0
  %v45 = vmax.f32 %v43, 0.0
  %46 = vst [vmem:[%s3] sm:$0xff] %v44
  %47 = vst [vmem:[%s3 + $0x8] sm:$0xff] %v45
  // Predicated region
  $region14: #{generator_forward.16} parent=0 // pred_check
    _
  $region15: #{generator_forward.16} parent=0 // pred_check_branch
    %49 = sbr.rel (0) target = $region17
  $region16: #{generator_forward.16} parent=0 // pred_region
    _
  $region17: #{generator_forward.16} parent=0 // pred_fallthru
    _
  // Predicated region
  $region18: #{generator_forward.16} parent=0 // pred_check
    _
  $region19: #{generator_forward.16} parent=0 // pred_check_branch
    %51 = sbr.rel (0) target = $region21
  $region20: #{generator_forward.16} parent=0 // pred_region
    _
  $region21: #{generator_forward.16} parent=0 // pred_fallthru
    _

// kernel: generator_forward.17
$region0: #{generator_forward.17}
  #allocation0 [shape = 'u32[]', space=smem, size = 0x4, offset = 0x4, fixed_abs, tag = 'smem constant byte address 0x4 - core index']
  #allocation1 [shape = 'u32[144,128]{1,0:T(1,128)}', space=vmem, size = 0x12000, scoped, tag = 'internal scratch']
  %s0 = inlined_call_operand.vmem [shape: bf16[32,64], index: 0, kind: input, shape index: {}]
  %s1 = inlined_call_operand.vmem [shape: bf16[64,512], index: 1, kind: input, shape index: {}]
  %s2 = inlined_call_operand.vmem [shape: f32[32,512], index: 2, kind: output, shape index: {}]
  %s3 = sld [smem:[#allocation0]]
  $region18: #{generator_forward.17} parent=0
    _
  %s5 = ssub.s32 1, %s3
  %s6 = scalar_select 0, %s5, %s3
  // Predicated region
  $region2: #{generator_forward.17} parent=0 // pred_check
    _
  $region3: #{generator_forward.17} parent=0 // pred_check_branch
    %8 = sbr.rel (0) target = $region5
  $region4: #{generator_forward.17} parent=0 // pred_region
    _
  $region5: #{generator_forward.17} parent=0 // pred_fallthru
    _
  // Predicated region
  $region6: #{generator_forward.17} parent=0 // pred_check
    _
  $region7: #{generator_forward.17} parent=0 // pred_check_branch
    %10 = sbr.rel (0) target = $region9
  $region8: #{generator_forward.17} parent=0 // pred_region
    _
  $region9: #{generator_forward.17} parent=0 // pred_fallthru
    _
  %v12 = vld [vmem:[%s0] sm:$0xf]
  %v13 = vld [vmem:[%s0 + $0x4] sm:$0xf]
  %v14 = vld [vmem:[%s0 + $0x8] sm:$0xf]
  %v15 = vld [vmem:[%s0 + $0xc] sm:$0xf]
  %v16 = vld [vmem:[%s1] sm:$0xff]
  %v17 = vld [vmem:[%s1 + $0x8] sm:$0xff]
  %v18 = vld [vmem:[%s1 + $0x10] sm:$0xff]
  %v19 = vld [vmem:[%s1 + $0x18] sm:$0xff]
  %v20 = vld [vmem:[%s1 + $0x20] sm:$0xff]
  %v21 = vld [vmem:[%s1 + $0x28] sm:$0xff]
  %v22 = vld [vmem:[%s1 + $0x30] sm:$0xff]
  %v23 = vld [vmem:[%s1 + $0x38] sm:$0xff]
  %v24 = vld [vmem:[%s1 + $0x40] sm:$0xff]
  %v25 = vld [vmem:[%s1 + $0x48] sm:$0xff]
  %v26 = vld [vmem:[%s1 + $0x50] sm:$0xff]
  %v27 = vld [vmem:[%s1 + $0x58] sm:$0xff]
  %v28 = vld [vmem:[%s1 + $0x60] sm:$0xff]
  %v29 = vld [vmem:[%s1 + $0x68] sm:$0xff]
  %v30 = vld [vmem:[%s1 + $0x70] sm:$0xff]
  %v31 = vld [vmem:[%s1 + $0x78] sm:$0xff]
  %v36 = vunpack.c.l.b16 %v12
  %v37 = vunpack.c.l.b16 %v13
  %v38 = vunpack.c.l.b16 %v14
  %v39 = vunpack.c.l.b16 %v15
  %v40 = vpack.c.b16 %v37, %v36
  %v41 = vpack.c.b16 %v39, %v38
  %v58 = vunpack.c.l.b16 %v16
  %v59 = vunpack.c.h.b16 %v16
  %v60 = vunpack.c.l.b16 %v17
  %v61 = vunpack.c.h.b16 %v17
  %v62 = vunpack.c.l.b16 %v18
  %v63 = vunpack.c.h.b16 %v18
  %v64 = vunpack.c.l.b16 %v19
  %v65 = vunpack.c.h.b16 %v19
  %v66 = vunpack.c.l.b16 %v20
  %v67 = vunpack.c.h.b16 %v20
  %v68 = vunpack.c.l.b16 %v21
  %v69 = vunpack.c.h.b16 %v21
  %v70 = vunpack.c.l.b16 %v22
  %v71 = vunpack.c.h.b16 %v22
  %v72 = vunpack.c.l.b16 %v23
  %v73 = vunpack.c.h.b16 %v23
  %v74 = vunpack.c.l.b16 %v24
  %v75 = vunpack.c.h.b16 %v24
  %v76 = vunpack.c.l.b16 %v25
  %v77 = vunpack.c.h.b16 %v25
  %v78 = vunpack.c.l.b16 %v26
  %v79 = vunpack.c.h.b16 %v26
  %v80 = vunpack.c.l.b16 %v27
  %v81 = vunpack.c.h.b16 %v27
  %v82 = vunpack.c.l.b16 %v28
  %v83 = vunpack.c.h.b16 %v28
  %v84 = vunpack.c.l.b16 %v29
  %v85 = vunpack.c.h.b16 %v29
  %v86 = vunpack.c.l.b16 %v30
  %v87 = vunpack.c.h.b16 %v30
  %v88 = vunpack.c.l.b16 %v31
  %v89 = vunpack.c.h.b16 %v31
  %v90 = vpack.c.b16 %v62, %v58
  %v91 = vpack.c.b16 %v63, %v59
  %v92 = vpack.c.b16 %v64, %v60
  %v93 = vpack.c.b16 %v65, %v61
  %v94 = vpack.c.b16 %v70, %v66
  %v95 = vpack.c.b16 %v71, %v67
  %v96 = vpack.c.b16 %v72, %v68
  %v97 = vpack.c.b16 %v73, %v69
  %v98 = vpack.c.b16 %v78, %v74
  %v99 = vpack.c.b16 %v79, %v75
  %v100 = vpack.c.b16 %v80, %v76
  %v101 = vpack.c.b16 %v81, %v77
  %v102 = vpack.c.b16 %v86, %v82
  %v103 = vpack.c.b16 %v87, %v83
  %v104 = vpack.c.b16 %v88, %v84
  %v105 = vpack.c.b16 %v89, %v85
  %vm122 = vcmask 523264
  %v124 = vsel %vm122, %v40, 0
  %v127 = vsel %vm122, %v41, 0
  %129 = vmatprep.subr.bf16.mxu0 %v91
  %130 = vmatpush1.bf16.msra.mxu0 %v90
  %131 = vmatprep.subr.bf16.mxu0 %v95
  %132 = vmatpush1.bf16.msra.mxu0 %v94
  %133 = vmatprep.subr.bf16.mxu0 %v99
  %134 = vmatpush1.bf16.msra.mxu0 %v98
  %135 = vmatprep.subr.bf16.mxu0 %v103
  %136 = vmatpush1.bf16.msra.mxu0 %v102
  %137 = vmatprep.subr.bf16.mxu0 0
  %138 = vmatpush1.bf16.msra.mxu0 0
  %139 = vmatprep.subr.bf16.mxu0 0
  %140 = vmatpush1.bf16.msra.mxu0 0
  %141 = vmatprep.subr.bf16.mxu0 0
  %142 = vmatpush1.bf16.msra.mxu0 0
  %143 = vmatprep.subr.bf16.mxu0 0
  %144 = vmatpush1.bf16.msra.mxu0 0
  %145 = vmatprep.subr.bf16.mxu0 0
  %146 = vmatpush1.bf16.msra.mxu0 0
  %147 = vmatprep.subr.bf16.mxu0 0
  %148 = vmatpush1.bf16.msra.mxu0 0
  %149 = vmatprep.subr.bf16.mxu0 0
  %150 = vmatpush1.bf16.msra.mxu0 0
  %151 = vmatprep.subr.bf16.mxu0 0
  %152 = vmatpush1.bf16.msra.mxu0 0
  %153 = vmatprep.subr.bf16.mxu0 0
  %154 = vmatpush1.bf16.msra.mxu0 0
  %155 = vmatprep.subr.bf16.mxu0 0
  %156 = vmatpush1.bf16.msra.mxu0 0
  %157 = vmatprep.subr.bf16.mxu0 0
  %158 = vmatpush1.bf16.msra.mxu0 0
  %159 = vmatprep.subr.bf16.mxu0 0
  %160 = vmatpush1.bf16.msra.mxu0 0
  %161 = vmatprep.mubr.bf16.mxu0 0
  %162 = vmatmul.mubr.bf16.gmra.mrb[0].mxu0 %v124
  %v163 = vpop.f32.mrb[0].mxu0
  %v164 = vadd.f32 0.0, %v163
  %v165 = vpop.f32.mrb[0].mxu0
  %v166 = vadd.f32 0.0, %v165
  %v167 = vpop.f32.mrb[0].mxu0
  %v168 = vadd.f32 0.0, %v167
  %v169 = vpop.f32.mrb[0].mxu0
  %v170 = vadd.f32 0.0, %v169
  %171 = vmatprep.mubr.bf16.mxu0 0
  %172 = vmatmul.mubr.bf16.gmra.mrb[0].mxu0 %v127
  %v173 = vpop.f32.mrb[0].mxu0
  %v174 = vadd.f32 0.0, %v173
  %v175 = vpop.f32.mrb[0].mxu0
  %v176 = vadd.f32 0.0, %v175
  %v177 = vpop.f32.mrb[0].mxu0
  %v178 = vadd.f32 0.0, %v177
  %v179 = vpop.f32.mrb[0].mxu0
  %v180 = vadd.f32 0.0, %v179
  %181 = vdwg.mxu0
  %182 = vmatprep.subr.bf16.mxu0 %v93
  %183 = vmatpush1.bf16.msra.mxu0 %v92
  %184 = vmatprep.subr.bf16.mxu0 %v97
  %185 = vmatpush1.bf16.msra.mxu0 %v96
  %186 = vmatprep.subr.bf16.mxu0 %v101
  %187 = vmatpush1.bf16.msra.mxu0 %v100
  %188 = vmatprep.subr.bf16.mxu0 %v105
  %189 = vmatpush1.bf16.msra.mxu0 %v104
  %190 = vmatprep.subr.bf16.mxu0 0
  %191 = vmatpush1.bf16.msra.mxu0 0
  %192 = vmatprep.subr.bf16.mxu0 0
  %193 = vmatpush1.bf16.msra.mxu0 0
  %194 = vmatprep.subr.bf16.mxu0 0
  %195 = vmatpush1.bf16.msra.mxu0 0
  %196 = vmatprep.subr.bf16.mxu0 0
  %197 = vmatpush1.bf16.msra.mxu0 0
  %198 = vmatprep.subr.bf16.mxu0 0
  %199 = vmatpush1.bf16.msra.mxu0 0
  %200 = vmatprep.subr.bf16.mxu0 0
  %201 = vmatpush1.bf16.msra.mxu0 0
  %202 = vmatprep.subr.bf16.mxu0 0
  %203 = vmatpush1.bf16.msra.mxu0 0
  %204 = vmatprep.subr.bf16.mxu0 0
  %205 = vmatpush1.bf16.msra.mxu0 0
  %206 = vmatprep.subr.bf16.mxu0 0
  %207 = vmatpush1.bf16.msra.mxu0 0
  %208 = vmatprep.subr.bf16.mxu0 0
  %209 = vmatpush1.bf16.msra.mxu0 0
  %210 = vmatprep.subr.bf16.mxu0 0
  %211 = vmatpush1.bf16.msra.mxu0 0
  %212 = vmatprep.subr.bf16.mxu0 0
  %213 = vmatpush1.bf16.msra.mxu0 0
  %214 = vmatprep.mubr.bf16.mxu0 0
  %215 = vmatmul.mubr.bf16.gmra.mrb[0].mxu0 %v124
  %v216 = vpop.f32.mrb[0].mxu0
  %v217 = vadd.f32 0.0, %v216
  %v218 = vpop.f32.mrb[0].mxu0
  %v219 = vadd.f32 0.0, %v218
  %v220 = vpop.f32.mrb[0].mxu0
  %v221 = vadd.f32 0.0, %v220
  %v222 = vpop.f32.mrb[0].mxu0
  %v223 = vadd.f32 0.0, %v222
  %224 = vmatprep.mubr.bf16.mxu0 0
  %225 = vmatmul.mubr.bf16.gmra.mrb[0].mxu0 %v127
  %v226 = vpop.f32.mrb[0].mxu0
  %v227 = vadd.f32 0.0, %v226
  %v228 = vpop.f32.mrb[0].mxu0
  %v229 = vadd.f32 0.0, %v228
  %v230 = vpop.f32.mrb[0].mxu0
  %v231 = vadd.f32 0.0, %v230
  %v232 = vpop.f32.mrb[0].mxu0
  %v233 = vadd.f32 0.0, %v232
  %234 = vdwg.mxu0
  %235 = vst [vmem:[%s2] sm:$0xff] %v164
  %236 = vst [vmem:[%s2 + $0x8] sm:$0xff] %v166
  %237 = vst [vmem:[%s2 + $0x10] sm:$0xff] %v217
  %238 = vst [vmem:[%s2 + $0x18] sm:$0xff] %v219
  %239 = vst [vmem:[%s2 + $0x20] sm:$0xff] %v168
  %240 = vst [vmem:[%s2 + $0x28] sm:$0xff] %v170
  %241 = vst [vmem:[%s2 + $0x30] sm:$0xff] %v221
  %242 = vst [vmem:[%s2 + $0x38] sm:$0xff] %v223
  %243 = vst [vmem:[%s2 + $0x40] sm:$0xff] %v174
  %244 = vst [vmem:[%s2 + $0x48] sm:$0xff] %v176
  %245 = vst [vmem:[%s2 + $0x50] sm:$0xff] %v227
  %246 = vst [vmem:[%s2 + $0x58] sm:$0xff] %v229
  %247 = vst [vmem:[%s2 + $0x60] sm:$0xff] %v178
  %248 = vst [vmem:[%s2 + $0x68] sm:$0xff] %v180
  %249 = vst [vmem:[%s2 + $0x70] sm:$0xff] %v231
  %250 = vst [vmem:[%s2 + $0x78] sm:$0xff] %v233
  // Predicated region
  $region10: #{generator_forward.17} parent=0 // pred_check
    _
  $region11: #{generator_forward.17} parent=0 // pred_check_branch
    %252 = sbr.rel (0) target = $region13
  $region12: #{generator_forward.17} parent=0 // pred_region
    _
  $region13: #{generator_forward.17} parent=0 // pred_fallthru
    _
  // Predicated region
  $region14: #{generator_forward.17} parent=0 // pred_check
    _
  $region15: #{generator_forward.17} parent=0 // pred_check_branch
    %254 = sbr.rel (0) target = $region17
  $region16: #{generator_forward.17} parent=0 // pred_region
    _
  $region17: #{generator_forward.17} parent=0 // pred_fallthru
    _

// kernel: tile.53
$region0: #{tile.53}
  #allocation0 [shape = 's32[1]{0}', space=sflag, size = 0x4, scoped, tag = 'scoped memory for tile.53']
  %s0 = inlined_call_operand.vmem [shape: f32[32], index: 0, kind: input, shape index: {}]
  %s1 = inlined_call_operand.vmem [shape: f32[8,32], index: 1, kind: output, shape index: {}]
  // Predicated region
  $region2: #{tile.53} parent=0 // pred_check
    _
  $region3: #{tile.53} parent=0 // pred_check_branch
    %3 = sbr.rel (0) target = $region5
  $region4: #{tile.53} parent=0 // pred_region
    _
  $region5: #{tile.53} parent=0 // pred_fallthru
    _
  %v4 = vld [vmem:[%s0] ss:$0 sm:$0xff]
  %5 = vst [vmem:[%s1] sm:$0xff] %v4

// kernel: tile.54
$region0: #{tile.54}
  %s0 = inlined_call_operand.vmem [shape: f32[8,32], index: 0, kind: input, shape index: {}]
  %s1 = inlined_call_operand.vmem [shape: f32[1,256], index: 1, kind: output, shape index: {}]
  $region1: #{tile.54} parent=0
    #allocation0 [shape = 'u8[8192]{0}', space=vmem, size = 0x2000, scoped, tag = 'scoped mem for output reshape']
    %s2 = smov 3
    %v3 = vld [vmem:[%s0] ss:$4 sm:%s2]
    %vm4 = vcmask 261120
    %5 = vst.msk [vmem:[#allocation0] ss:$8 sm:$0x3] %vm4, %v3
    %s6 = scalar_lea.vmem %s0, 3
    %s7 = smov 3
    %v8 = vld [vmem:[%s6] ss:$4 sm:%s7]
    %9 = vrot.lane.b32.xlu0 %v8, 96
    %v10 = vpop.permute.xlu0 %9
    %vm11 = vcmask 1048320
    %12 = vst.msk [vmem:[#allocation0] ss:$8 sm:$0x3] %vm11, %v10
    %s13 = scalar_lea.vmem %s0, 2
    %s14 = smov 3
    %v15 = vld [vmem:[%s13] ss:$4 sm:%s14]
    %16 = vrot.lane.b32.xlu0 %v15, 64
    %v17 = vpop.permute.xlu0 %16
    %vm18 = vcmask 785920
    %19 = vst.msk [vmem:[#allocation0] ss:$8 sm:$0x3] %vm18, %v17
    %s20 = scalar_lea.vmem %s0, 1
    %s21 = smov 3
    %v22 = vld [vmem:[%s20] ss:$4 sm:%s21]
    %23 = vrot.lane.b32.xlu0 %v22, 32
    %v24 = vpop.permute.xlu0 %23
    %vm25 = vcmask 523520
    %26 = vst.msk [vmem:[#allocation0] ss:$8 sm:$0x3] %vm25, %v24
    %s28 = sshllo.u32 0, 1
    %v30 = vld [vmem:[#allocation0] sm:%s28]
    %s31 = sshllo.u32 0, 1
    %32 = vst [vmem:[%s1] sm:%s31] %v30
    %s33 = scalar_lea.vmem [#allocation0], 8
    %v34 = vld [vmem:[%s33] sm:%s28]
    %s35 = sshllo.u32 0, 1
    %s36 = scalar_lea.vmem %s1, 1
    %37 = vst [vmem:[%s36] sm:%s35] %v34

// kernel: generator_forward.18
$region0: #{generator_forward.18}
  #allocation0 [shape = 'u32[]', space=smem, size = 0x4, offset = 0x4, fixed_abs, tag = 'smem constant byte address 0x4 - core index']
  #allocation1 [shape = 'u32[144,128]{1,0:T(1,128)}', space=vmem, size = 0x12000, scoped, tag = 'internal scratch']
  %s0 = inlined_call_operand.vmem [shape: f32[16,256], index: 0, kind: input, shape index: {}]
  %s1 = inlined_call_operand.vmem [shape: f32[1,256], index: 1, kind: output, shape index: {0}]
  %s2 = inlined_call_operand.vmem [shape: f32[1,256], index: 2, kind: output, shape index: {1}]
  %3 = xla_tuple %s1, %s2
  %s4 = sld [smem:[#allocation0]]
  $region26: #{generator_forward.18} parent=0
    _
  %s6 = ssub.s32 1, %s4
  %s7 = scalar_select 0, %s6, %s4
  // Predicated region
  $region2: #{generator_forward.18} parent=0 // pred_check
    _
  $region3: #{generator_forward.18} parent=0 // pred_check_branch
    %9 = sbr.rel (0) target = $region5
  $region4: #{generator_forward.18} parent=0 // pred_region
    _
  $region5: #{generator_forward.18} parent=0 // pred_fallthru
    _
  %p10 = scmp.eq.s32.totalorder 0, 0
  // Predicated region
  $region6: #{generator_forward.18} parent=0 // pred_check
    %p11 = pneg %p10
  $region7: #{generator_forward.18} parent=0 // pred_check_branch
    %13 = sbr.rel (%p11) target = $region9
  $region8: #{generator_forward.18} parent=0 // pred_region
    %v14 = vlaneseq
    %vm15 = vcmp.ge.s32.totalorder %v14, 0
    %vm16 = vcmp.lt.s32.totalorder %v14, 256
    %vm17 = vmand %vm15, %vm16
    %18 = vst.msk [vmem:[%s1] sm:$0x3] %vm17, 0.0
    %19 = vst.msk [vmem:[%s2] sm:$0x3] %vm17, 0.0
  $region9: #{generator_forward.18} parent=0 // pred_fallthru
    _
  %v20 = vld [vmem:[%s0] sm:$0xff]
  %v21 = vld [vmem:[%s0 + $0x8] sm:$0xff]
  %v22 = vld [vmem:[%s0 + $0x10] sm:$0xff]
  %v23 = vld [vmem:[%s0 + $0x18] sm:$0xff]
  %v24 = vld [vmem:[%s1] sm:$0x3]
  %v25 = vadd.f32 %v20, %v22
  %v26 = vrot.slane %v25, 4
  %v27 = vadd.f32 %v25, %v26
  %v28 = vrot.slane %v27, 2
  %v29 = vadd.f32 %v27, %v28
  %v30 = vrot.slane %v29, 1
  %v31 = vadd.f32 %v29, %v30
  %v32 = vadd.f32 %v21, %v23
  %v33 = vrot.slane %v32, 4
  %v34 = vadd.f32 %v32, %v33
  %v35 = vrot.slane %v34, 2
  %v36 = vadd.f32 %v34, %v35
  %v37 = vrot.slane %v36, 1
  %v38 = vadd.f32 %v36, %v37
  %v41 = vcombine.low %v31, %v38
  %v43 = vunpack.c.l.s4 1966171168
  %v44 = vunpack.c.0.s8 %v43
  %v45 = vlaneseq
  %v46 = vshrl.u32 %v45, 7
  %v47 = vsub.s32 %v44, %v46
  %v48 = vrot.slane %v41, %v47
  %v50 = vunpack.c.l.s4 1966171168
  %v51 = vunpack.c.0.s8 %v50
  %v52 = vlaneseq
  %v53 = vshrl.u32 %v52, 7
  %v54 = vsub.s32 %v51, %v53
  %v55 = vrot.slane %v48, %v54
  %v57 = vadd.f32 %v24, %v55
  %v58 = vlaneseq
  %vm59 = vcmp.ge.s32.totalorder %v58, 0
  %vm60 = vcmp.lt.s32.totalorder %v58, 256
  %vm61 = vmand %vm59, %vm60
  %62 = vst.msk [vmem:[%s1] sm:$0x3] %vm61, %v57
  %v63 = vld [vmem:[%s2] sm:$0x3]
  %v64 = vmul.f32 %v20, %v20
  %v65 = vmul.f32 %v21, %v21
  %v66 = vmul.f32 %v22, %v22
  %v67 = vmul.f32 %v23, %v23
  %v68 = vadd.f32 %v64, %v66
  %v69 = vrot.slane %v68, 4
  %v70 = vadd.f32 %v68, %v69
  %v71 = vrot.slane %v70, 2
  %v72 = vadd.f32 %v70, %v71
  %v73 = vrot.slane %v72, 1
  %v74 = vadd.f32 %v72, %v73
  %v75 = vadd.f32 %v65, %v67
  %v76 = vrot.slane %v75, 4
  %v77 = vadd.f32 %v75, %v76
  %v78 = vrot.slane %v77, 2
  %v79 = vadd.f32 %v77, %v78
  %v80 = vrot.slane %v79, 1
  %v81 = vadd.f32 %v79, %v80
  %v84 = vcombine.low %v74, %v81
  %v86 = vunpack.c.l.s4 1966171168
  %v87 = vunpack.c.0.s8 %v86
  %v88 = vlaneseq
  %v89 = vshrl.u32 %v88, 7
  %v90 = vsub.s32 %v87, %v89
  %v91 = vrot.slane %v84, %v90
  %v93 = vunpack.c.l.s4 1966171168
  %v94 = vunpack.c.0.s8 %v93
  %v95 = vlaneseq
  %v96 = vshrl.u32 %v95, 7
  %v97 = vsub.s32 %v94, %v96
  %v98 = vrot.slane %v91, %v97
  %v100 = vadd.f32 %v63, %v98
  %101 = vst.msk [vmem:[%s2] sm:$0x3] %vm61, %v100
  // Predicated region
  $region10: #{generator_forward.18} parent=0 // pred_check
    _
  $region11: #{generator_forward.18} parent=0 // pred_check_branch
    %103 = sbr.rel (0) target = $region13
  $region12: #{generator_forward.18} parent=0 // pred_region
    _
  $region13: #{generator_forward.18} parent=0 // pred_fallthru
    _
  // Predicated region
  $region14: #{generator_forward.18} parent=0 // pred_check
    _
  $region15: #{generator_forward.18} parent=0 // pred_check_branch
    %105 = sbr.rel (0) target = $region17
  $region16: #{generator_forward.18} parent=0 // pred_region
    _
  $region17: #{generator_forward.18} parent=0 // pred_fallthru
    _
  // Predicated region
  $region18: #{generator_forward.18} parent=0 // pred_check
    _
  $region19: #{generator_forward.18} parent=0 // pred_check_branch
    %107 = sbr.rel (0) target = $region21
  $region20: #{generator_forward.18} parent=0 // pred_region
    _
  $region21: #{generator_forward.18} parent=0 // pred_fallthru
    _
  // Predicated region
  $region22: #{generator_forward.18} parent=0 // pred_check
    _
  $region23: #{generator_forward.18} parent=0 // pred_check_branch
    %109 = sbr.rel (0) target = $region25
  $region24: #{generator_forward.18} parent=0 // pred_region
    _
  $region25: #{generator_forward.18} parent=0 // pred_fallthru
    _

// kernel: generator_forward.19
$region0: #{generator_forward.19}
  #allocation0 [shape = 'u32[]', space=smem, size = 0x4, offset = 0x4, fixed_abs, tag = 'smem constant byte address 0x4 - core index']
  #allocation1 [shape = 'u32[144,128]{1,0:T(1,128)}', space=vmem, size = 0x12000, scoped, tag = 'internal scratch']
  %s0 = inlined_call_operand.vmem [shape: f32[16,256], index: 0, kind: input, shape index: {}, may-alias: {0,3}]
  %s1 = inlined_call_operand.vmem [shape: f32[1,256], index: 1, kind: input, shape index: {}]
  %s2 = inlined_call_operand.vmem [shape: f32[1,256], index: 2, kind: input, shape index: {}]
  %s3 = inlined_call_operand.vmem [shape: f32[16,256], index: 3, kind: output, shape index: {}, may-alias: {0,3}]
  %s4 = sld [smem:[#allocation0]]
  $region22: #{generator_forward.19} parent=0
    _
  %s6 = ssub.s32 1, %s4
  %s7 = scalar_select 0, %s6, %s4
  // Predicated region
  $region2: #{generator_forward.19} parent=0 // pred_check
    _
  $region3: #{generator_forward.19} parent=0 // pred_check_branch
    %9 = sbr.rel (0) target = $region5
  $region4: #{generator_forward.19} parent=0 // pred_region
    _
  $region5: #{generator_forward.19} parent=0 // pred_fallthru
    _
  // Predicated region
  $region6: #{generator_forward.19} parent=0 // pred_check
    _
  $region7: #{generator_forward.19} parent=0 // pred_check_branch
    %11 = sbr.rel (0) target = $region9
  $region8: #{generator_forward.19} parent=0 // pred_region
    _
  $region9: #{generator_forward.19} parent=0 // pred_fallthru
    _
  // Predicated region
  $region10: #{generator_forward.19} parent=0 // pred_check
    _
  $region11: #{generator_forward.19} parent=0 // pred_check_branch
    %13 = sbr.rel (0) target = $region13
  $region12: #{generator_forward.19} parent=0 // pred_region
    _
  $region13: #{generator_forward.19} parent=0 // pred_fallthru
    _
  %v14 = vld [vmem:[%s0] sm:$0xff]
  %v15 = vld [vmem:[%s0 + $0x8] sm:$0xff]
  %v16 = vld [vmem:[%s0 + $0x10] sm:$0xff]
  %v17 = vld [vmem:[%s0 + $0x18] sm:$0xff]
  %v18 = vld [vmem:[%s1] sm:$0x3]
  %v20 = vlaneseq
  %v21 = vshrl.u32 %v20, 7
  %v22 = vsub.s32 0, %v21
  %v23 = vrot.slane %v18, %v22
  %v24 = vlaneseq
  %v25 = vshrl.u32 %v24, 7
  %v26 = vsub.s32 1, %v25
  %v27 = vrot.slane %v18, %v26
  %v30 = vmul.f32 %v14, %v23
  %v31 = vmul.f32 %v15, %v27
  %v32 = vmul.f32 %v16, %v23
  %v33 = vmul.f32 %v17, %v27
  %v34 = vld [vmem:[%s2] sm:$0x3]
  %v36 = vlaneseq
  %v37 = vshrl.u32 %v36, 7
  %v38 = vsub.s32 0, %v37
  %v39 = vrot.slane %v34, %v38
  %v40 = vlaneseq
  %v41 = vshrl.u32 %v40, 7
  %v42 = vsub.s32 1, %v41
  %v43 = vrot.slane %v34, %v42
  %v46 = vadd.f32 %v30, %v39
  %v47 = vadd.f32 %v31, %v43
  %v48 = vadd.f32 %v32, %v39
  %v49 = vadd.f32 %v33, %v43
  %v50 = vmax.f32 %v46, 0.0
  %v51 = vmax.f32 %v47, 0.0
  %v52 = vmax.f32 %v48, 0.0
  %v53 = vmax.f32 %v49, 0.0
  %54 = vst [vmem:[%s3] sm:$0xff] %v50
  %55 = vst [vmem:[%s3 + $0x8] sm:$0xff] %v51
  %56 = vst [vmem:[%s3 + $0x10] sm:$0xff] %v52
  %57 = vst [vmem:[%s3 + $0x18] sm:$0xff] %v53
  // Predicated region
  $region14: #{generator_forward.19} parent=0 // pred_check
    _
  $region15: #{generator_forward.19} parent=0 // pred_check_branch
    %59 = sbr.rel (0) target = $region17
  $region16: #{generator_forward.19} parent=0 // pred_region
    _
  $region17: #{generator_forward.19} parent=0 // pred_fallthru
    _
  // Predicated region
  $region18: #{generator_forward.19} parent=0 // pred_check
    _
  $region19: #{generator_forward.19} parent=0 // pred_check_branch
    %61 = sbr.rel (0) target = $region21
  $region20: #{generator_forward.19} parent=0 // pred_region
    _
  $region21: #{generator_forward.19} parent=0 // pred_fallthru
    _

// kernel: generator_forward.20
$region0: #{generator_forward.20}
  #allocation0 [shape = 'u32[]', space=smem, size = 0x4, offset = 0x4, fixed_abs, tag = 'smem constant byte address 0x4 - core index']
  #allocation1 [shape = 'u32[144,128]{1,0:T(1,128)}', space=vmem, size = 0x12000, scoped, tag = 'internal scratch']
  %s0 = inlined_call_operand.vmem [shape: bf16[128,32], index: 0, kind: input, shape index: {}]
  %s1 = inlined_call_operand.vmem [shape: bf16[32,256], index: 1, kind: input, shape index: {}]
  %s2 = inlined_call_operand.vmem [shape: f32[128,256], index: 2, kind: output, shape index: {}]
  %s3 = sld [smem:[#allocation0]]
  $region18: #{generator_forward.20} parent=0
    _
  %s5 = ssub.s32 1, %s3
  %s6 = scalar_select 0, %s5, %s3
  // Predicated region
  $region2: #{generator_forward.20} parent=0 // pred_check
    _
  $region3: #{generator_forward.20} parent=0 // pred_check_branch
    %8 = sbr.rel (0) target = $region5
  $region4: #{generator_forward.20} parent=0 // pred_region
    _
  $region5: #{generator_forward.20} parent=0 // pred_fallthru
    _
  // Predicated region
  $region6: #{generator_forward.20} parent=0 // pred_check
    _
  $region7: #{generator_forward.20} parent=0 // pred_check_branch
    %10 = sbr.rel (0) target = $region9
  $region8: #{generator_forward.20} parent=0 // pred_region
    _
  $region9: #{generator_forward.20} parent=0 // pred_fallthru
    _
  %v12 = vld [vmem:[%s0] sm:$0xf]
  %v13 = vld [vmem:[%s0 + $0x4] sm:$0xf]
  %v14 = vld [vmem:[%s0 + $0x8] sm:$0xf]
  %v15 = vld [vmem:[%s0 + $0xc] sm:$0xf]
  %v16 = vld [vmem:[%s0 + $0x10] sm:$0xf]
  %v17 = vld [vmem:[%s0 + $0x14] sm:$0xf]
  %v18 = vld [vmem:[%s0 + $0x18] sm:$0xf]
  %v19 = vld [vmem:[%s0 + $0x1c] sm:$0xf]
  %v20 = vld [vmem:[%s0 + $0x20] sm:$0xf]
  %v21 = vld [vmem:[%s0 + $0x24] sm:$0xf]
  %v22 = vld [vmem:[%s0 + $0x28] sm:$0xf]
  %v23 = vld [vmem:[%s0 + $0x2c] sm:$0xf]
  %v24 = vld [vmem:[%s0 + $0x30] sm:$0xf]
  %v25 = vld [vmem:[%s0 + $0x34] sm:$0xf]
  %v26 = vld [vmem:[%s0 + $0x38] sm:$0xf]
  %v27 = vld [vmem:[%s0 + $0x3c] sm:$0xf]
  %v28 = vld [vmem:[%s1] sm:$0xff]
  %v29 = vld [vmem:[%s1 + $0x8] sm:$0xff]
  %v30 = vld [vmem:[%s1 + $0x10] sm:$0xff]
  %v31 = vld [vmem:[%s1 + $0x18] sm:$0xff]
  %v48 = vunpack.c.l.b16 %v12
  %v49 = vunpack.c.l.b16 %v13
  %v50 = vunpack.c.l.b16 %v14
  %v51 = vunpack.c.l.b16 %v15
  %v52 = vunpack.c.l.b16 %v16
  %v53 = vunpack.c.l.b16 %v17
  %v54 = vunpack.c.l.b16 %v18
  %v55 = vunpack.c.l.b16 %v19
  %v56 = vunpack.c.l.b16 %v20
  %v57 = vunpack.c.l.b16 %v21
  %v58 = vunpack.c.l.b16 %v22
  %v59 = vunpack.c.l.b16 %v23
  %v60 = vunpack.c.l.b16 %v24
  %v61 = vunpack.c.l.b16 %v25
  %v62 = vunpack.c.l.b16 %v26
  %v63 = vunpack.c.l.b16 %v27
  %v64 = vpack.c.b16 %v49, %v48
  %v65 = vpack.c.b16 %v51, %v50
  %v66 = vpack.c.b16 %v53, %v52
  %v67 = vpack.c.b16 %v55, %v54
  %v68 = vpack.c.b16 %v57, %v56
  %v69 = vpack.c.b16 %v59, %v58
  %v70 = vpack.c.b16 %v61, %v60
  %v71 = vpack.c.b16 %v63, %v62
  %v76 = vunpack.c.l.b16 %v28
  %v77 = vunpack.c.h.b16 %v28
  %v78 = vunpack.c.l.b16 %v29
  %v79 = vunpack.c.h.b16 %v29
  %v80 = vunpack.c.l.b16 %v30
  %v81 = vunpack.c.h.b16 %v30
  %v82 = vunpack.c.l.b16 %v31
  %v83 = vunpack.c.h.b16 %v31
  %v84 = vpack.c.b16 %v78, %v76
  %v85 = vpack.c.b16 %v79, %v77
  %v86 = vpack.c.b16 %v82, %v80
  %v87 = vpack.c.b16 %v83, %v81
  %vm92 = vcmask 261120
  %v94 = vsel %vm92, %v64, 0
  %v97 = vsel %vm92, %v65, 0
  %v100 = vsel %vm92, %v66, 0
  %v103 = vsel %vm92, %v67, 0
  %v106 = vsel %vm92, %v68, 0
  %v109 = vsel %vm92, %v69, 0
  %v112 = vsel %vm92, %v70, 0
  %v115 = vsel %vm92, %v71, 0
  %117 = vmatprep.subr.bf16.mxu0 %v85
  %118 = vmatpush1.bf16.msra.mxu0 %v84
  %119 = vmatprep.subr.bf16.mxu0 %v87
  %120 = vmatpush1.bf16.msra.mxu0 %v86
  %121 = vmatprep.subr.bf16.mxu0 0
  %122 = vmatpush1.bf16.msra.mxu0 0
  %123 = vmatprep.subr.bf16.mxu0 0
  %124 = vmatpush1.bf16.msra.mxu0 0
  %125 = vmatprep.subr.bf16.mxu0 0
  %126 = vmatpush1.bf16.msra.mxu0 0
  %127 = vmatprep.subr.bf16.mxu0 0
  %128 = vmatpush1.bf16.msra.mxu0 0
  %129 = vmatprep.subr.bf16.mxu0 0
  %130 = vmatpush1.bf16.msra.mxu0 0
  %131 = vmatprep.subr.bf16.mxu0 0
  %132 = vmatpush1.bf16.msra.mxu0 0
  %133 = vmatprep.subr.bf16.mxu0 0
  %134 = vmatpush1.bf16.msra.mxu0 0
  %135 = vmatprep.subr.bf16.mxu0 0
  %136 = vmatpush1.bf16.msra.mxu0 0
  %137 = vmatprep.subr.bf16.mxu0 0
  %138 = vmatpush1.bf16.msra.mxu0 0
  %139 = vmatprep.subr.bf16.mxu0 0
  %140 = vmatpush1.bf16.msra.mxu0 0
  %141 = vmatprep.subr.bf16.mxu0 0
  %142 = vmatpush1.bf16.msra.mxu0 0
  %143 = vmatprep.subr.bf16.mxu0 0
  %144 = vmatpush1.bf16.msra.mxu0 0
  %145 = vmatprep.subr.bf16.mxu0 0
  %146 = vmatpush1.bf16.msra.mxu0 0
  %147 = vmatprep.subr.bf16.mxu0 0
  %148 = vmatpush1.bf16.msra.mxu0 0
  %149 = vmatprep.mubr.bf16.mxu0 0
  %150 = vmatmul.mubr.bf16.gmra.mrb[0].mxu0 %v94
  %v151 = vpop.f32.mrb[0].mxu0
  %v152 = vadd.f32 0.0, %v151
  %v153 = vpop.f32.mrb[0].mxu0
  %v154 = vadd.f32 0.0, %v153
  %v155 = vpop.f32.mrb[0].mxu0
  %v156 = vadd.f32 0.0, %v155
  %v157 = vpop.f32.mrb[0].mxu0
  %v158 = vadd.f32 0.0, %v157
  %159 = vmatprep.mubr.bf16.mxu0 0
  %160 = vmatmul.mubr.bf16.gmra.mrb[0].mxu0 %v97
  %v161 = vpop.f32.mrb[0].mxu0
  %v162 = vadd.f32 0.0, %v161
  %v163 = vpop.f32.mrb[0].mxu0
  %v164 = vadd.f32 0.0, %v163
  %v165 = vpop.f32.mrb[0].mxu0
  %v166 = vadd.f32 0.0, %v165
  %v167 = vpop.f32.mrb[0].mxu0
  %v168 = vadd.f32 0.0, %v167
  %169 = vmatprep.mubr.bf16.mxu0 0
  %170 = vmatmul.mubr.bf16.gmra.mrb[0].mxu0 %v100
  %v171 = vpop.f32.mrb[0].mxu0
  %v172 = vadd.f32 0.0, %v171
  %v173 = vpop.f32.mrb[0].mxu0
  %v174 = vadd.f32 0.0, %v173
  %v175 = vpop.f32.mrb[0].mxu0
  %v176 = vadd.f32 0.0, %v175
  %v177 = vpop.f32.mrb[0].mxu0
  %v178 = vadd.f32 0.0, %v177
  %179 = vmatprep.mubr.bf16.mxu0 0
  %180 = vmatmul.mubr.bf16.gmra.mrb[0].mxu0 %v103
  %v181 = vpop.f32.mrb[0].mxu0
  %v182 = vadd.f32 0.0, %v181
  %v183 = vpop.f32.mrb[0].mxu0
  %v184 = vadd.f32 0.0, %v183
  %v185 = vpop.f32.mrb[0].mxu0
  %v186 = vadd.f32 0.0, %v185
  %v187 = vpop.f32.mrb[0].mxu0
  %v188 = vadd.f32 0.0, %v187
  %189 = vmatprep.mubr.bf16.mxu0 0
  %190 = vmatmul.mubr.bf16.gmra.mrb[0].mxu0 %v106
  %v191 = vpop.f32.mrb[0].mxu0
  %v192 = vadd.f32 0.0, %v191
  %v193 = vpop.f32.mrb[0].mxu0
  %v194 = vadd.f32 0.0, %v193
  %v195 = vpop.f32.mrb[0].mxu0
  %v196 = vadd.f32 0.0, %v195
  %v197 = vpop.f32.mrb[0].mxu0
  %v198 = vadd.f32 0.0, %v197
  %199 = vmatprep.mubr.bf16.mxu0 0
  %200 = vmatmul.mubr.bf16.gmra.mrb[0].mxu0 %v109
  %v201 = vpop.f32.mrb[0].mxu0
  %v202 = vadd.f32 0.0, %v201
  %v203 = vpop.f32.mrb[0].mxu0
  %v204 = vadd.f32 0.0, %v203
  %v205 = vpop.f32.mrb[0].mxu0
  %v206 = vadd.f32 0.0, %v205
  %v207 = vpop.f32.mrb[0].mxu0
  %v208 = vadd.f32 0.0, %v207
  %209 = vmatprep.mubr.bf16.mxu0 0
  %210 = vmatmul.mubr.bf16.gmra.mrb[0].mxu0 %v112
  %v211 = vpop.f32.mrb[0].mxu0
  %v212 = vadd.f32 0.0, %v211
  %v213 = vpop.f32.mrb[0].mxu0
  %v214 = vadd.f32 0.0, %v213
  %v215 = vpop.f32.mrb[0].mxu0
  %v216 = vadd.f32 0.0, %v215
  %v217 = vpop.f32.mrb[0].mxu0
  %v218 = vadd.f32 0.0, %v217
  %219 = vmatprep.mubr.bf16.mxu0 0
  %220 = vmatmul.mubr.bf16.gmra.mrb[0].mxu0 %v115
  %v221 = vpop.f32.mrb[0].mxu0
  %v222 = vadd.f32 0.0, %v221
  %v223 = vpop.f32.mrb[0].mxu0
  %v224 = vadd.f32 0.0, %v223
  %v225 = vpop.f32.mrb[0].mxu0
  %v226 = vadd.f32 0.0, %v225
  %v227 = vpop.f32.mrb[0].mxu0
  %v228 = vadd.f32 0.0, %v227
  %229 = vdwg.mxu0
  %230 = vst [vmem:[%s2] sm:$0xff] %v152
  %231 = vst [vmem:[%s2 + $0x8] sm:$0xff] %v154
  %232 = vst [vmem:[%s2 + $0x10] sm:$0xff] %v156
  %233 = vst [vmem:[%s2 + $0x18] sm:$0xff] %v158
  %234 = vst [vmem:[%s2 + $0x20] sm:$0xff] %v162
  %235 = vst [vmem:[%s2 + $0x28] sm:$0xff] %v164
  %236 = vst [vmem:[%s2 + $0x30] sm:$0xff] %v166
  %237 = vst [vmem:[%s2 + $0x38] sm:$0xff] %v168
  %238 = vst [vmem:[%s2 + $0x40] sm:$0xff] %v172
  %239 = vst [vmem:[%s2 + $0x48] sm:$0xff] %v174
  %240 = vst [vmem:[%s2 + $0x50] sm:$0xff] %v176
  %241 = vst [vmem:[%s2 + $0x58] sm:$0xff] %v178
  %242 = vst [vmem:[%s2 + $0x60] sm:$0xff] %v182
  %243 = vst [vmem:[%s2 + $0x68] sm:$0xff] %v184
  %244 = vst [vmem:[%s2 + $0x70] sm:$0xff] %v186
  %245 = vst [vmem:[%s2 + $0x78] sm:$0xff] %v188
  %246 = vst [vmem:[%s2 + $0x80] sm:$0xff] %v192
  %247 = vst [vmem:[%s2 + $0x88] sm:$0xff] %v194
  %248 = vst [vmem:[%s2 + $0x90] sm:$0xff] %v196
  %249 = vst [vmem:[%s2 + $0x98] sm:$0xff] %v198
  %250 = vst [vmem:[%s2 + $0xa0] sm:$0xff] %v202
  %251 = vst [vmem:[%s2 + $0xa8] sm:$0xff] %v204
  %252 = vst [vmem:[%s2 + $0xb0] sm:$0xff] %v206
  %253 = vst [vmem:[%s2 + $0xb8] sm:$0xff] %v208
  %254 = vst [vmem:[%s2 + $0xc0] sm:$0xff] %v212
  %255 = vst [vmem:[%s2 + $0xc8] sm:$0xff] %v214
  %256 = vst [vmem:[%s2 + $0xd0] sm:$0xff] %v216
  %257 = vst [vmem:[%s2 + $0xd8] sm:$0xff] %v218
  %258 = vst [vmem:[%s2 + $0xe0] sm:$0xff] %v222
  %259 = vst [vmem:[%s2 + $0xe8] sm:$0xff] %v224
  %260 = vst [vmem:[%s2 + $0xf0] sm:$0xff] %v226
  %261 = vst [vmem:[%s2 + $0xf8] sm:$0xff] %v228
  // Predicated region
  $region10: #{generator_forward.20} parent=0 // pred_check
    _
  $region11: #{generator_forward.20} parent=0 // pred_check_branch
    %263 = sbr.rel (0) target = $region13
  $region12: #{generator_forward.20} parent=0 // pred_region
    _
  $region13: #{generator_forward.20} parent=0 // pred_fallthru
    _
  // Predicated region
  $region14: #{generator_forward.20} parent=0 // pred_check
    _
  $region15: #{generator_forward.20} parent=0 // pred_check_branch
    %265 = sbr.rel (0) target = $region17
  $region16: #{generator_forward.20} parent=0 // pred_region
    _
  $region17: #{generator_forward.20} parent=0 // pred_fallthru
    _

// kernel: tile.63
$region0: #{tile.63}
  #allocation0 [shape = 's32[1]{0}', space=sflag, size = 0x4, scoped, tag = 'scoped memory for tile.63']
  %s0 = inlined_call_operand.vmem [shape: f32[16], index: 0, kind: input, shape index: {}]
  %s1 = inlined_call_operand.vmem [shape: f32[16,16], index: 1, kind: output, shape index: {}]
  // Predicated region
  $region2: #{tile.63} parent=0 // pred_check
    _
  $region3: #{tile.63} parent=0 // pred_check_branch
    %3 = sbr.rel (0) target = $region5
  $region4: #{tile.63} parent=0 // pred_region
    _
  $region5: #{tile.63} parent=0 // pred_fallthru
    _
  %v4 = vld [vmem:[%s0] ss:$0 sm:$0xff]
  %5 = vst [vmem:[%s1] sm:$0xff] %v4
  %s6 = scalar_lea.vmem %s1, 8
  %7 = vst [vmem:[%s6] sm:$0xff] %v4

// kernel: tile.64
$region0: #{tile.64}
  %s0 = inlined_call_operand.vmem [shape: f32[16,16], index: 0, kind: input, shape index: {}]
  %s1 = inlined_call_operand.vmem [shape: f32[1,256], index: 1, kind: output, shape index: {}]
  $region1: #{tile.64} parent=0
    #allocation0 [shape = 'u8[8192]{0}', space=vmem, size = 0x2000, scoped, tag = 'scoped mem for output reshape']
    %s2 = smov 3
    %v3 = vld [vmem:[%s0] ss:$8 sm:%s2]
    %vm4 = vcmask 130048
    %5 = vst.msk [vmem:[#allocation0] ss:$8 sm:$0x3] %vm4, %v3
    %s6 = scalar_lea.vmem %s0, 7
    %s7 = smov 3
    %v8 = vld [vmem:[%s6] ss:$8 sm:%s7]
    %9 = vrot.lane.b32.xlu0 %v8, 112
    %v10 = vpop.permute.xlu0 %9
    %vm11 = vcmask 1048448
    %12 = vst.msk [vmem:[#allocation0] ss:$8 sm:$0x3] %vm11, %v10
    %s13 = scalar_lea.vmem %s0, 6
    %s14 = smov 3
    %v15 = vld [vmem:[%s13] ss:$8 sm:%s14]
    %16 = vrot.lane.b32.xlu0 %v15, 96
    %v17 = vpop.permute.xlu0 %16
    %vm18 = vcmask 917248
    %19 = vst.msk [vmem:[#allocation0] ss:$8 sm:$0x3] %vm18, %v17
    %s20 = scalar_lea.vmem %s0, 5
    %s21 = smov 3
    %v22 = vld [vmem:[%s20] ss:$8 sm:%s21]
    %23 = vrot.lane.b32.xlu0 %v22, 80
    %v24 = vpop.permute.xlu0 %23
    %vm25 = vcmask 786048
    %26 = vst.msk [vmem:[#allocation0] ss:$8 sm:$0x3] %vm25, %v24
    %s27 = scalar_lea.vmem %s0, 4
    %s28 = smov 3
    %v29 = vld [vmem:[%s27] ss:$8 sm:%s28]
    %30 = vrot.lane.b32.xlu0 %v29, 64
    %v31 = vpop.permute.xlu0 %30
    %vm32 = vcmask 654848
    %33 = vst.msk [vmem:[#allocation0] ss:$8 sm:$0x3] %vm32, %v31
    %s34 = scalar_lea.vmem %s0, 3
    %s35 = smov 3
    %v36 = vld [vmem:[%s34] ss:$8 sm:%s35]
    %37 = vrot.lane.b32.xlu0 %v36, 48
    %v38 = vpop.permute.xlu0 %37
    %vm39 = vcmask 523648
    %40 = vst.msk [vmem:[#allocation0] ss:$8 sm:$0x3] %vm39, %v38
    %s41 = scalar_lea.vmem %s0, 2
    %s42 = smov 3
    %v43 = vld [vmem:[%s41] ss:$8 sm:%s42]
    %44 = vrot.lane.b32.xlu0 %v43, 32
    %v45 = vpop.permute.xlu0 %44
    %vm46 = vcmask 392448
    %47 = vst.msk [vmem:[#allocation0] ss:$8 sm:$0x3] %vm46, %v45
    %s48 = scalar_lea.vmem %s0, 1
    %s49 = smov 3
    %v50 = vld [vmem:[%s48] ss:$8 sm:%s49]
    %51 = vrot.lane.b32.xlu0 %v50, 16
    %v52 = vpop.permute.xlu0 %51
    %vm53 = vcmask 261248
    %54 = vst.msk [vmem:[#allocation0] ss:$8 sm:$0x3] %vm53, %v52
    %s56 = sshllo.u32 0, 1
    %v58 = vld [vmem:[#allocation0] sm:%s56]
    %s59 = sshllo.u32 0, 1
    %60 = vst [vmem:[%s1] sm:%s59] %v58
    %s61 = scalar_lea.vmem [#allocation0], 8
    %v62 = vld [vmem:[%s61] sm:%s56]
    %s63 = sshllo.u32 0, 1
    %s64 = scalar_lea.vmem %s1, 1
    %65 = vst [vmem:[%s64] sm:%s63] %v62

// kernel: generator_forward.21
$region0: #{generator_forward.21}
  #allocation0 [shape = 'u32[]', space=smem, size = 0x4, offset = 0x4, fixed_abs, tag = 'smem constant byte address 0x4 - core index']
  #allocation1 [shape = 'u32[144,128]{1,0:T(1,128)}', space=vmem, size = 0x12000, scoped, tag = 'internal scratch']
  %s0 = inlined_call_operand.vmem [shape: f32[32,256], index: 0, kind: input, shape index: {}]
  %s1 = inlined_call_operand.vmem [shape: f32[1,256], index: 1, kind: output, shape index: {0}]
  %s2 = inlined_call_operand.vmem [shape: f32[1,256], index: 2, kind: output, shape index: {1}]
  %3 = xla_tuple %s1, %s2
  %s4 = sld [smem:[#allocation0]]
  $region26: #{generator_forward.21} parent=0
    _
  %s6 = ssub.s32 1, %s4
  %s7 = scalar_select 0, %s6, %s4
  // Predicated region
  $region2: #{generator_forward.21} parent=0 // pred_check
    _
  $region3: #{generator_forward.21} parent=0 // pred_check_branch
    %9 = sbr.rel (0) target = $region5
  $region4: #{generator_forward.21} parent=0 // pred_region
    _
  $region5: #{generator_forward.21} parent=0 // pred_fallthru
    _
  %p10 = scmp.eq.s32.totalorder 0, 0
  // Predicated region
  $region6: #{generator_forward.21} parent=0 // pred_check
    %p11 = pneg %p10
  $region7: #{generator_forward.21} parent=0 // pred_check_branch
    %13 = sbr.rel (%p11) target = $region9
  $region8: #{generator_forward.21} parent=0 // pred_region
    %v14 = vlaneseq
    %vm15 = vcmp.ge.s32.totalorder %v14, 0
    %vm16 = vcmp.lt.s32.totalorder %v14, 256
    %vm17 = vmand %vm15, %vm16
    %18 = vst.msk [vmem:[%s1] sm:$0x3] %vm17, 0.0
    %19 = vst.msk [vmem:[%s2] sm:$0x3] %vm17, 0.0
  $region9: #{generator_forward.21} parent=0 // pred_fallthru
    _
  %v20 = vld [vmem:[%s0] sm:$0xff]
  %v21 = vld [vmem:[%s0 + $0x8] sm:$0xff]
  %v22 = vld [vmem:[%s0 + $0x10] sm:$0xff]
  %v23 = vld [vmem:[%s0 + $0x18] sm:$0xff]
  %v24 = vld [vmem:[%s0 + $0x20] sm:$0xff]
  %v25 = vld [vmem:[%s0 + $0x28] sm:$0xff]
  %v26 = vld [vmem:[%s0 + $0x30] sm:$0xff]
  %v27 = vld [vmem:[%s0 + $0x38] sm:$0xff]
  %v28 = vld [vmem:[%s1] sm:$0x3]
  %v29 = vadd.f32 %v20, %v22
  %v30 = vadd.f32 %v29, %v24
  %v31 = vadd.f32 %v30, %v26
  %v32 = vrot.slane %v31, 4
  %v33 = vadd.f32 %v31, %v32
  %v34 = vrot.slane %v33, 2
  %v35 = vadd.f32 %v33, %v34
  %v36 = vrot.slane %v35, 1
  %v37 = vadd.f32 %v35, %v36
  %v38 = vadd.f32 %v21, %v23
  %v39 = vadd.f32 %v38, %v25
  %v40 = vadd.f32 %v39, %v27
  %v41 = vrot.slane %v40, 4
  %v42 = vadd.f32 %v40, %v41
  %v43 = vrot.slane %v42, 2
  %v44 = vadd.f32 %v42, %v43
  %v45 = vrot.slane %v44, 1
  %v46 = vadd.f32 %v44, %v45
  %v49 = vcombine.low %v37, %v46
  %v51 = vunpack.c.l.s4 1966171168
  %v52 = vunpack.c.0.s8 %v51
  %v53 = vlaneseq
  %v54 = vshrl.u32 %v53, 7
  %v55 = vsub.s32 %v52, %v54
  %v56 = vrot.slane %v49, %v55
  %v58 = vunpack.c.l.s4 1966171168
  %v59 = vunpack.c.0.s8 %v58
  %v60 = vlaneseq
  %v61 = vshrl.u32 %v60, 7
  %v62 = vsub.s32 %v59, %v61
  %v63 = vrot.slane %v56, %v62
  %v65 = vadd.f32 %v28, %v63
  %v66 = vlaneseq
  %vm67 = vcmp.ge.s32.totalorder %v66, 0
  %vm68 = vcmp.lt.s32.totalorder %v66, 256
  %vm69 = vmand %vm67, %vm68
  %70 = vst.msk [vmem:[%s1] sm:$0x3] %vm69, %v65
  %v71 = vld [vmem:[%s2] sm:$0x3]
  %v72 = vmul.f32 %v20, %v20
  %v73 = vmul.f32 %v21, %v21
  %v74 = vmul.f32 %v22, %v22
  %v75 = vmul.f32 %v23, %v23
  %v76 = vmul.f32 %v24, %v24
  %v77 = vmul.f32 %v25, %v25
  %v78 = vmul.f32 %v26, %v26
  %v79 = vmul.f32 %v27, %v27
  %v80 = vadd.f32 %v72, %v74
  %v81 = vadd.f32 %v80, %v76
  %v82 = vadd.f32 %v81, %v78
  %v83 = vrot.slane %v82, 4
  %v84 = vadd.f32 %v82, %v83
  %v85 = vrot.slane %v84, 2
  %v86 = vadd.f32 %v84, %v85
  %v87 = vrot.slane %v86, 1
  %v88 = vadd.f32 %v86, %v87
  %v89 = vadd.f32 %v73, %v75
  %v90 = vadd.f32 %v89, %v77
  %v91 = vadd.f32 %v90, %v79
  %v92 = vrot.slane %v91, 4
  %v93 = vadd.f32 %v91, %v92
  %v94 = vrot.slane %v93, 2
  %v95 = vadd.f32 %v93, %v94
  %v96 = vrot.slane %v95, 1
  %v97 = vadd.f32 %v95, %v96
  %v100 = vcombine.low %v88, %v97
  %v102 = vunpack.c.l.s4 1966171168
  %v103 = vunpack.c.0.s8 %v102
  %v104 = vlaneseq
  %v105 = vshrl.u32 %v104, 7
  %v106 = vsub.s32 %v103, %v105
  %v107 = vrot.slane %v100, %v106
  %v109 = vunpack.c.l.s4 1966171168
  %v110 = vunpack.c.0.s8 %v109
  %v111 = vlaneseq
  %v112 = vshrl.u32 %v111, 7
  %v113 = vsub.s32 %v110, %v112
  %v114 = vrot.slane %v107, %v113
  %v116 = vadd.f32 %v71, %v114
  %117 = vst.msk [vmem:[%s2] sm:$0x3] %vm69, %v116
  // Predicated region
  $region10: #{generator_forward.21} parent=0 // pred_check
    _
  $region11: #{generator_forward.21} parent=0 // pred_check_branch
    %119 = sbr.rel (0) target = $region13
  $region12: #{generator_forward.21} parent=0 // pred_region
    _
  $region13: #{generator_forward.21} parent=0 // pred_fallthru
    _
  // Predicated region
  $region14: #{generator_forward.21} parent=0 // pred_check
    _
  $region15: #{generator_forward.21} parent=0 // pred_check_branch
    %121 = sbr.rel (0) target = $region17
  $region16: #{generator_forward.21} parent=0 // pred_region
    _
  $region17: #{generator_forward.21} parent=0 // pred_fallthru
    _
  // Predicated region
  $region18: #{generator_forward.21} parent=0 // pred_check
    _
  $region19: #{generator_forward.21} parent=0 // pred_check_branch
    %123 = sbr.rel (0) target = $region21
  $region20: #{generator_forward.21} parent=0 // pred_region
    _
  $region21: #{generator_forward.21} parent=0 // pred_fallthru
    _
  // Predicated region
  $region22: #{generator_forward.21} parent=0 // pred_check
    _
  $region23: #{generator_forward.21} parent=0 // pred_check_branch
    %125 = sbr.rel (0) target = $region25
  $region24: #{generator_forward.21} parent=0 // pred_region
    _
  $region25: #{generator_forward.21} parent=0 // pred_fallthru
    _

// kernel: generator_forward.22
$region0: #{generator_forward.22}
  #allocation0 [shape = 'u32[]', space=smem, size = 0x4, offset = 0x4, fixed_abs, tag = 'smem constant byte address 0x4 - core index']
  #allocation1 [shape = 'u32[144,128]{1,0:T(1,128)}', space=vmem, size = 0x12000, scoped, tag = 'internal scratch']
  %s0 = inlined_call_operand.vmem [shape: f32[32,256], index: 0, kind: input, shape index: {}, may-alias: {0,3}]
  %s1 = inlined_call_operand.vmem [shape: f32[1,256], index: 1, kind: input, shape index: {}]
  %s2 = inlined_call_operand.vmem [shape: f32[1,256], index: 2, kind: input, shape index: {}]
  %s3 = inlined_call_operand.vmem [shape: f32[32,256], index: 3, kind: output, shape index: {}, may-alias: {0,3}]
  %s4 = sld [smem:[#allocation0]]
  $region22: #{generator_forward.22} parent=0
    _
  %s6 = ssub.s32 1, %s4
  %s7 = scalar_select 0, %s6, %s4
  // Predicated region
  $region2: #{generator_forward.22} parent=0 // pred_check
    _
  $region3: #{generator_forward.22} parent=0 // pred_check_branch
    %9 = sbr.rel (0) target = $region5
  $region4: #{generator_forward.22} parent=0 // pred_region
    _
  $region5: #{generator_forward.22} parent=0 // pred_fallthru
    _
  // Predicated region
  $region6: #{generator_forward.22} parent=0 // pred_check
    _
  $region7: #{generator_forward.22} parent=0 // pred_check_branch
    %11 = sbr.rel (0) target = $region9
  $region8: #{generator_forward.22} parent=0 // pred_region
    _
  $region9: #{generator_forward.22} parent=0 // pred_fallthru
    _
  // Predicated region
  $region10: #{generator_forward.22} parent=0 // pred_check
    _
  $region11: #{generator_forward.22} parent=0 // pred_check_branch
    %13 = sbr.rel (0) target = $region13
  $region12: #{generator_forward.22} parent=0 // pred_region
    _
  $region13: #{generator_forward.22} parent=0 // pred_fallthru
    _
  %v14 = vld [vmem:[%s0] sm:$0xff]
  %v15 = vld [vmem:[%s0 + $0x8] sm:$0xff]
  %v16 = vld [vmem:[%s0 + $0x10] sm:$0xff]
  %v17 = vld [vmem:[%s0 + $0x18] sm:$0xff]
  %v18 = vld [vmem:[%s0 + $0x20] sm:$0xff]
  %v19 = vld [vmem:[%s0 + $0x28] sm:$0xff]
  %v20 = vld [vmem:[%s0 + $0x30] sm:$0xff]
  %v21 = vld [vmem:[%s0 + $0x38] sm:$0xff]
  %v22 = vld [vmem:[%s1] sm:$0x3]
  %v24 = vlaneseq
  %v25 = vshrl.u32 %v24, 7
  %v26 = vsub.s32 0, %v25
  %v27 = vrot.slane %v22, %v26
  %v28 = vlaneseq
  %v29 = vshrl.u32 %v28, 7
  %v30 = vsub.s32 1, %v29
  %v31 = vrot.slane %v22, %v30
  %v34 = vmul.f32 %v14, %v27
  %v35 = vmul.f32 %v15, %v31
  %v36 = vmul.f32 %v16, %v27
  %v37 = vmul.f32 %v17, %v31
  %v38 = vmul.f32 %v18, %v27
  %v39 = vmul.f32 %v19, %v31
  %v40 = vmul.f32 %v20, %v27
  %v41 = vmul.f32 %v21, %v31
  %v42 = vld [vmem:[%s2] sm:$0x3]
  %v44 = vlaneseq
  %v45 = vshrl.u32 %v44, 7
  %v46 = vsub.s32 0, %v45
  %v47 = vrot.slane %v42, %v46
  %v48 = vlaneseq
  %v49 = vshrl.u32 %v48, 7
  %v50 = vsub.s32 1, %v49
  %v51 = vrot.slane %v42, %v50
  %v54 = vadd.f32 %v34, %v47
  %v55 = vadd.f32 %v35, %v51
  %v56 = vadd.f32 %v36, %v47
  %v57 = vadd.f32 %v37, %v51
  %v58 = vadd.f32 %v38, %v47
  %v59 = vadd.f32 %v39, %v51
  %v60 = vadd.f32 %v40, %v47
  %v61 = vadd.f32 %v41, %v51
  %v62 = vmax.f32 %v54, 0.0
  %v63 = vmax.f32 %v55, 0.0
  %v64 = vmax.f32 %v56, 0.0
  %v65 = vmax.f32 %v57, 0.0
  %v66 = vmax.f32 %v58, 0.0
  %v67 = vmax.f32 %v59, 0.0
  %v68 = vmax.f32 %v60, 0.0
  %v69 = vmax.f32 %v61, 0.0
  %70 = vst [vmem:[%s3] sm:$0xff] %v62
  %71 = vst [vmem:[%s3 + $0x8] sm:$0xff] %v63
  %72 = vst [vmem:[%s3 + $0x10] sm:$0xff] %v64
  %73 = vst [vmem:[%s3 + $0x18] sm:$0xff] %v65
  %74 = vst [vmem:[%s3 + $0x20] sm:$0xff] %v66
  %75 = vst [vmem:[%s3 + $0x28] sm:$0xff] %v67
  %76 = vst [vmem:[%s3 + $0x30] sm:$0xff] %v68
  %77 = vst [vmem:[%s3 + $0x38] sm:$0xff] %v69
  // Predicated region
  $region14: #{generator_forward.22} parent=0 // pred_check
    _
  $region15: #{generator_forward.22} parent=0 // pred_check_branch
    %79 = sbr.rel (0) target = $region17
  $region16: #{generator_forward.22} parent=0 // pred_region
    _
  $region17: #{generator_forward.22} parent=0 // pred_fallthru
    _
  // Predicated region
  $region18: #{generator_forward.22} parent=0 // pred_check
    _
  $region19: #{generator_forward.22} parent=0 // pred_check_branch
    %81 = sbr.rel (0) target = $region21
  $region20: #{generator_forward.22} parent=0 // pred_region
    _
  $region21: #{generator_forward.22} parent=0 // pred_fallthru
    _

// kernel: generator_forward.23
$region0: #{generator_forward.23}
  #allocation0 [shape = 'u32[]', space=smem, size = 0x4, offset = 0x4, fixed_abs, tag = 'smem constant byte address 0x4 - core index']
  #allocation1 [shape = 'u32[144,128]{1,0:T(1,128)}', space=vmem, size = 0x12000, scoped, tag = 'internal scratch']
  %s0 = inlined_call_operand.vmem [shape: bf16[512,16], index: 0, kind: input, shape index: {}]
  %s1 = inlined_call_operand.vmem [shape: bf16[16,128], index: 1, kind: input, shape index: {}]
  %s2 = inlined_call_operand.vmem [shape: f32[512,128], index: 2, kind: output, shape index: {}]
  %s3 = sld [smem:[#allocation0]]
  $region18: #{generator_forward.23} parent=0
    _
  %s5 = ssub.s32 1, %s3
  %s6 = scalar_select 0, %s5, %s3
  // Predicated region
  $region2: #{generator_forward.23} parent=0 // pred_check
    _
  $region3: #{generator_forward.23} parent=0 // pred_check_branch
    %8 = sbr.rel (0) target = $region5
  $region4: #{generator_forward.23} parent=0 // pred_region
    _
  $region5: #{generator_forward.23} parent=0 // pred_fallthru
    _
  // Predicated region
  $region6: #{generator_forward.23} parent=0 // pred_check
    _
  $region7: #{generator_forward.23} parent=0 // pred_check_branch
    %10 = sbr.rel (0) target = $region9
  $region8: #{generator_forward.23} parent=0 // pred_region
    _
  $region9: #{generator_forward.23} parent=0 // pred_fallthru
    _
  %v12 = vld [vmem:[%s0] sm:$0xf]
  %v13 = vld [vmem:[%s0 + $0x4] sm:$0xf]
  %v14 = vld [vmem:[%s0 + $0x8] sm:$0xf]
  %v15 = vld [vmem:[%s0 + $0xc] sm:$0xf]
  %v16 = vld [vmem:[%s0 + $0x10] sm:$0xf]
  %v17 = vld [vmem:[%s0 + $0x14] sm:$0xf]
  %v18 = vld [vmem:[%s0 + $0x18] sm:$0xf]
  %v19 = vld [vmem:[%s0 + $0x1c] sm:$0xf]
  %v20 = vld [vmem:[%s0 + $0x20] sm:$0xf]
  %v21 = vld [vmem:[%s0 + $0x24] sm:$0xf]
  %v22 = vld [vmem:[%s0 + $0x28] sm:$0xf]
  %v23 = vld [vmem:[%s0 + $0x2c] sm:$0xf]
  %v24 = vld [vmem:[%s0 + $0x30] sm:$0xf]
  %v25 = vld [vmem:[%s0 + $0x34] sm:$0xf]
  %v26 = vld [vmem:[%s0 + $0x38] sm:$0xf]
  %v27 = vld [vmem:[%s0 + $0x3c] sm:$0xf]
  %v28 = vld [vmem:[%s0 + $0x40] sm:$0xf]
  %v29 = vld [vmem:[%s0 + $0x44] sm:$0xf]
  %v30 = vld [vmem:[%s0 + $0x48] sm:$0xf]
  %v31 = vld [vmem:[%s0 + $0x4c] sm:$0xf]
  %v32 = vld [vmem:[%s0 + $0x50] sm:$0xf]
  %v33 = vld [vmem:[%s0 + $0x54] sm:$0xf]
  %v34 = vld [vmem:[%s0 + $0x58] sm:$0xf]
  %v35 = vld [vmem:[%s0 + $0x5c] sm:$0xf]
  %v36 = vld [vmem:[%s0 + $0x60] sm:$0xf]
  %v37 = vld [vmem:[%s0 + $0x64] sm:$0xf]
  %v38 = vld [vmem:[%s0 + $0x68] sm:$0xf]
  %v39 = vld [vmem:[%s0 + $0x6c] sm:$0xf]
  %v40 = vld [vmem:[%s0 + $0x70] sm:$0xf]
  %v41 = vld [vmem:[%s0 + $0x74] sm:$0xf]
  %v42 = vld [vmem:[%s0 + $0x78] sm:$0xf]
  %v43 = vld [vmem:[%s0 + $0x7c] sm:$0xf]
  %v44 = vld [vmem:[%s0 + $0x80] sm:$0xf]
  %v45 = vld [vmem:[%s0 + $0x84] sm:$0xf]
  %v46 = vld [vmem:[%s0 + $0x88] sm:$0xf]
  %v47 = vld [vmem:[%s0 + $0x8c] sm:$0xf]
  %v48 = vld [vmem:[%s0 + $0x90] sm:$0xf]
  %v49 = vld [vmem:[%s0 + $0x94] sm:$0xf]
  %v50 = vld [vmem:[%s0 + $0x98] sm:$0xf]
  %v51 = vld [vmem:[%s0 + $0x9c] sm:$0xf]
  %v52 = vld [vmem:[%s0 + $0xa0] sm:$0xf]
  %v53 = vld [vmem:[%s0 + $0xa4] sm:$0xf]
  %v54 = vld [vmem:[%s0 + $0xa8] sm:$0xf]
  %v55 = vld [vmem:[%s0 + $0xac] sm:$0xf]
  %v56 = vld [vmem:[%s0 + $0xb0] sm:$0xf]
  %v57 = vld [vmem:[%s0 + $0xb4] sm:$0xf]
  %v58 = vld [vmem:[%s0 + $0xb8] sm:$0xf]
  %v59 = vld [vmem:[%s0 + $0xbc] sm:$0xf]
  %v60 = vld [vmem:[%s0 + $0xc0] sm:$0xf]
  %v61 = vld [vmem:[%s0 + $0xc4] sm:$0xf]
  %v62 = vld [vmem:[%s0 + $0xc8] sm:$0xf]
  %v63 = vld [vmem:[%s0 + $0xcc] sm:$0xf]
  %v64 = vld [vmem:[%s0 + $0xd0] sm:$0xf]
  %v65 = vld [vmem:[%s0 + $0xd4] sm:$0xf]
  %v66 = vld [vmem:[%s0 + $0xd8] sm:$0xf]
  %v67 = vld [vmem:[%s0 + $0xdc] sm:$0xf]
  %v68 = vld [vmem:[%s0 + $0xe0] sm:$0xf]
  %v69 = vld [vmem:[%s0 + $0xe4] sm:$0xf]
  %v70 = vld [vmem:[%s0 + $0xe8] sm:$0xf]
  %v71 = vld [vmem:[%s0 + $0xec] sm:$0xf]
  %v72 = vld [vmem:[%s0 + $0xf0] sm:$0xf]
  %v73 = vld [vmem:[%s0 + $0xf4] sm:$0xf]
  %v74 = vld [vmem:[%s0 + $0xf8] sm:$0xf]
  %v75 = vld [vmem:[%s0 + $0xfc] sm:$0xf]
  %v76 = vld [vmem:[%s1] sm:$0xf]
  %v77 = vld [vmem:[%s1 + $0x4] sm:$0xf]
  %v142 = vunpack.c.l.b16 %v12
  %v143 = vunpack.c.l.b16 %v13
  %v144 = vunpack.c.l.b16 %v14
  %v145 = vunpack.c.l.b16 %v15
  %v146 = vunpack.c.l.b16 %v16
  %v147 = vunpack.c.l.b16 %v17
  %v148 = vunpack.c.l.b16 %v18
  %v149 = vunpack.c.l.b16 %v19
  %v150 = vunpack.c.l.b16 %v20
  %v151 = vunpack.c.l.b16 %v21
  %v152 = vunpack.c.l.b16 %v22
  %v153 = vunpack.c.l.b16 %v23
  %v154 = vunpack.c.l.b16 %v24
  %v155 = vunpack.c.l.b16 %v25
  %v156 = vunpack.c.l.b16 %v26
  %v157 = vunpack.c.l.b16 %v27
  %v158 = vunpack.c.l.b16 %v28
  %v159 = vunpack.c.l.b16 %v29
  %v160 = vunpack.c.l.b16 %v30
  %v161 = vunpack.c.l.b16 %v31
  %v162 = vunpack.c.l.b16 %v32
  %v163 = vunpack.c.l.b16 %v33
  %v164 = vunpack.c.l.b16 %v34
  %v165 = vunpack.c.l.b16 %v35
  %v166 = vunpack.c.l.b16 %v36
  %v167 = vunpack.c.l.b16 %v37
  %v168 = vunpack.c.l.b16 %v38
  %v169 = vunpack.c.l.b16 %v39
  %v170 = vunpack.c.l.b16 %v40
  %v171 = vunpack.c.l.b16 %v41
  %v172 = vunpack.c.l.b16 %v42
  %v173 = vunpack.c.l.b16 %v43
  %v174 = vunpack.c.l.b16 %v44
  %v175 = vunpack.c.l.b16 %v45
  %v176 = vunpack.c.l.b16 %v46
  %v177 = vunpack.c.l.b16 %v47
  %v178 = vunpack.c.l.b16 %v48
  %v179 = vunpack.c.l.b16 %v49
  %v180 = vunpack.c.l.b16 %v50
  %v181 = vunpack.c.l.b16 %v51
  %v182 = vunpack.c.l.b16 %v52
  %v183 = vunpack.c.l.b16 %v53
  %v184 = vunpack.c.l.b16 %v54
  %v185 = vunpack.c.l.b16 %v55
  %v186 = vunpack.c.l.b16 %v56
  %v187 = vunpack.c.l.b16 %v57
  %v188 = vunpack.c.l.b16 %v58
  %v189 = vunpack.c.l.b16 %v59
  %v190 = vunpack.c.l.b16 %v60
  %v191 = vunpack.c.l.b16 %v61
  %v192 = vunpack.c.l.b16 %v62
  %v193 = vunpack.c.l.b16 %v63
  %v194 = vunpack.c.l.b16 %v64
  %v195 = vunpack.c.l.b16 %v65
  %v196 = vunpack.c.l.b16 %v66
  %v197 = vunpack.c.l.b16 %v67
  %v198 = vunpack.c.l.b16 %v68
  %v199 = vunpack.c.l.b16 %v69
  %v200 = vunpack.c.l.b16 %v70
  %v201 = vunpack.c.l.b16 %v71
  %v202 = vunpack.c.l.b16 %v72
  %v203 = vunpack.c.l.b16 %v73
  %v204 = vunpack.c.l.b16 %v74
  %v205 = vunpack.c.l.b16 %v75
  %v206 = vpack.c.b16 %v143, %v142
  %v207 = vpack.c.b16 %v145, %v144
  %v208 = vpack.c.b16 %v147, %v146
  %v209 = vpack.c.b16 %v149, %v148
  %v210 = vpack.c.b16 %v151, %v150
  %v211 = vpack.c.b16 %v153, %v152
  %v212 = vpack.c.b16 %v155, %v154
  %v213 = vpack.c.b16 %v157, %v156
  %v214 = vpack.c.b16 %v159, %v158
  %v215 = vpack.c.b16 %v161, %v160
  %v216 = vpack.c.b16 %v163, %v162
  %v217 = vpack.c.b16 %v165, %v164
  %v218 = vpack.c.b16 %v167, %v166
  %v219 = vpack.c.b16 %v169, %v168
  %v220 = vpack.c.b16 %v171, %v170
  %v221 = vpack.c.b16 %v173, %v172
  %v222 = vpack.c.b16 %v175, %v174
  %v223 = vpack.c.b16 %v177, %v176
  %v224 = vpack.c.b16 %v179, %v178
  %v225 = vpack.c.b16 %v181, %v180
  %v226 = vpack.c.b16 %v183, %v182
  %v227 = vpack.c.b16 %v185, %v184
  %v228 = vpack.c.b16 %v187, %v186
  %v229 = vpack.c.b16 %v189, %v188
  %v230 = vpack.c.b16 %v191, %v190
  %v231 = vpack.c.b16 %v193, %v192
  %v232 = vpack.c.b16 %v195, %v194
  %v233 = vpack.c.b16 %v197, %v196
  %v234 = vpack.c.b16 %v199, %v198
  %v235 = vpack.c.b16 %v201, %v200
  %v236 = vpack.c.b16 %v203, %v202
  %v237 = vpack.c.b16 %v205, %v204
  %v240 = vunpack.c.l.b16 %v76
  %v241 = vunpack.c.l.b16 %v77
  %v242 = vpack.c.b16 %v241, %v240
  %vm244 = vcmask 130048
  %v246 = vsel %vm244, %v206, 0
  %v249 = vsel %vm244, %v207, 0
  %v252 = vsel %vm244, %v208, 0
  %v255 = vsel %vm244, %v209, 0
  %v258 = vsel %vm244, %v210, 0
  %v261 = vsel %vm244, %v211, 0
  %v264 = vsel %vm244, %v212, 0
  %v267 = vsel %vm244, %v213, 0
  %v270 = vsel %vm244, %v214, 0
  %v273 = vsel %vm244, %v215, 0
  %v276 = vsel %vm244, %v216, 0
  %v279 = vsel %vm244, %v217, 0
  %v282 = vsel %vm244, %v218, 0
  %v285 = vsel %vm244, %v219, 0
  %v288 = vsel %vm244, %v220, 0
  %v291 = vsel %vm244, %v221, 0
  %v294 = vsel %vm244, %v222, 0
  %v297 = vsel %vm244, %v223, 0
  %v300 = vsel %vm244, %v224, 0
  %v303 = vsel %vm244, %v225, 0
  %v306 = vsel %vm244, %v226, 0
  %v309 = vsel %vm244, %v227, 0
  %v312 = vsel %vm244, %v228, 0
  %v315 = vsel %vm244, %v229, 0
  %v318 = vsel %vm244, %v230, 0
  %v321 = vsel %vm244, %v231, 0
  %v324 = vsel %vm244, %v232, 0
  %v327 = vsel %vm244, %v233, 0
  %v330 = vsel %vm244, %v234, 0
  %v333 = vsel %vm244, %v235, 0
  %v336 = vsel %vm244, %v236, 0
  %v339 = vsel %vm244, %v237, 0
  %341 = vmatprep.subr.bf16.mxu0 0
  %342 = vmatpush1.bf16.msra.mxu0 %v242
  %343 = vmatprep.subr.bf16.mxu0 0
  %344 = vmatpush1.bf16.msra.mxu0 0
  %345 = vmatprep.subr.bf16.mxu0 0
  %346 = vmatpush1.bf16.msra.mxu0 0
  %347 = vmatprep.subr.bf16.mxu0 0
  %348 = vmatpush1.bf16.msra.mxu0 0
  %349 = vmatprep.subr.bf16.mxu0 0
  %350 = vmatpush1.bf16.msra.mxu0 0
  %351 = vmatprep.subr.bf16.mxu0 0
  %352 = vmatpush1.bf16.msra.mxu0 0
  %353 = vmatprep.subr.bf16.mxu0 0
  %354 = vmatpush1.bf16.msra.mxu0 0
  %355 = vmatprep.subr.bf16.mxu0 0
  %356 = vmatpush1.bf16.msra.mxu0 0
  %357 = vmatprep.subr.bf16.mxu0 0
  %358 = vmatpush1.bf16.msra.mxu0 0
  %359 = vmatprep.subr.bf16.mxu0 0
  %360 = vmatpush1.bf16.msra.mxu0 0
  %361 = vmatprep.subr.bf16.mxu0 0
  %362 = vmatpush1.bf16.msra.mxu0 0
  %363 = vmatprep.subr.bf16.mxu0 0
  %364 = vmatpush1.bf16.msra.mxu0 0
  %365 = vmatprep.subr.bf16.mxu0 0
  %366 = vmatpush1.bf16.msra.mxu0 0
  %367 = vmatprep.subr.bf16.mxu0 0
  %368 = vmatpush1.bf16.msra.mxu0 0
  %369 = vmatprep.subr.bf16.mxu0 0
  %370 = vmatpush1.bf16.msra.mxu0 0
  %371 = vmatprep.subr.bf16.mxu0 0
  %372 = vmatpush1.bf16.msra.mxu0 0
  %373 = vmatprep.mubr.bf16.mxu0 0
  %374 = vmatmul.mubr.bf16.gmra.mrb[0].mxu0 %v246
  %v375 = vpop.f32.mrb[0].mxu0
  %v376 = vadd.f32 0.0, %v375
  %v377 = vpop.f32.mrb[0].mxu0
  %v378 = vpop.f32.mrb[0].mxu0
  %v379 = vadd.f32 0.0, %v378
  %v380 = vpop.f32.mrb[0].mxu0
  %381 = vmatprep.mubr.bf16.mxu0 0
  %382 = vmatmul.mubr.bf16.gmra.mrb[0].mxu0 %v249
  %v383 = vpop.f32.mrb[0].mxu0
  %v384 = vadd.f32 0.0, %v383
  %v385 = vpop.f32.mrb[0].mxu0
  %v386 = vpop.f32.mrb[0].mxu0
  %v387 = vadd.f32 0.0, %v386
  %v388 = vpop.f32.mrb[0].mxu0
  %389 = vmatprep.mubr.bf16.mxu0 0
  %390 = vmatmul.mubr.bf16.gmra.mrb[0].mxu0 %v252
  %v391 = vpop.f32.mrb[0].mxu0
  %v392 = vadd.f32 0.0, %v391
  %v393 = vpop.f32.mrb[0].mxu0
  %v394 = vpop.f32.mrb[0].mxu0
  %v395 = vadd.f32 0.0, %v394
  %v396 = vpop.f32.mrb[0].mxu0
  %397 = vmatprep.mubr.bf16.mxu0 0
  %398 = vmatmul.mubr.bf16.gmra.mrb[0].mxu0 %v255
  %v399 = vpop.f32.mrb[0].mxu0
  %v400 = vadd.f32 0.0, %v399
  %v401 = vpop.f32.mrb[0].mxu0
  %v402 = vpop.f32.mrb[0].mxu0
  %v403 = vadd.f32 0.0, %v402
  %v404 = vpop.f32.mrb[0].mxu0
  %405 = vmatprep.mubr.bf16.mxu0 0
  %406 = vmatmul.mubr.bf16.gmra.mrb[0].mxu0 %v258
  %v407 = vpop.f32.mrb[0].mxu0
  %v408 = vadd.f32 0.0, %v407
  %v409 = vpop.f32.mrb[0].mxu0
  %v410 = vpop.f32.mrb[0].mxu0
  %v411 = vadd.f32 0.0, %v410
  %v412 = vpop.f32.mrb[0].mxu0
  %413 = vmatprep.mubr.bf16.mxu0 0
  %414 = vmatmul.mubr.bf16.gmra.mrb[0].mxu0 %v261
  %v415 = vpop.f32.mrb[0].mxu0
  %v416 = vadd.f32 0.0, %v415
  %v417 = vpop.f32.mrb[0].mxu0
  %v418 = vpop.f32.mrb[0].mxu0
  %v419 = vadd.f32 0.0, %v418
  %v420 = vpop.f32.mrb[0].mxu0
  %421 = vmatprep.mubr.bf16.mxu0 0
  %422 = vmatmul.mubr.bf16.gmra.mrb[0].mxu0 %v264
  %v423 = vpop.f32.mrb[0].mxu0
  %v424 = vadd.f32 0.0, %v423
  %v425 = vpop.f32.mrb[0].mxu0
  %v426 = vpop.f32.mrb[0].mxu0
  %v427 = vadd.f32 0.0, %v426
  %v428 = vpop.f32.mrb[0].mxu0
  %429 = vmatprep.mubr.bf16.mxu0 0
  %430 = vmatmul.mubr.bf16.gmra.mrb[0].mxu0 %v267
  %v431 = vpop.f32.mrb[0].mxu0
  %v432 = vadd.f32 0.0, %v431
  %v433 = vpop.f32.mrb[0].mxu0
  %v434 = vpop.f32.mrb[0].mxu0
  %v435 = vadd.f32 0.0, %v434
  %v436 = vpop.f32.mrb[0].mxu0
  %437 = vmatprep.mubr.bf16.mxu0 0
  %438 = vmatmul.mubr.bf16.gmra.mrb[0].mxu0 %v270
  %v439 = vpop.f32.mrb[0].mxu0
  %v440 = vadd.f32 0.0, %v439
  %v441 = vpop.f32.mrb[0].mxu0
  %v442 = vpop.f32.mrb[0].mxu0
  %v443 = vadd.f32 0.0, %v442
  %v444 = vpop.f32.mrb[0].mxu0
  %445 = vmatprep.mubr.bf16.mxu0 0
  %446 = vmatmul.mubr.bf16.gmra.mrb[0].mxu0 %v273
  %v447 = vpop.f32.mrb[0].mxu0
  %v448 = vadd.f32 0.0, %v447
  %v449 = vpop.f32.mrb[0].mxu0
  %v450 = vpop.f32.mrb[0].mxu0
  %v451 = vadd.f32 0.0, %v450
  %v452 = vpop.f32.mrb[0].mxu0
  %453 = vmatprep.mubr.bf16.mxu0 0
  %454 = vmatmul.mubr.bf16.gmra.mrb[0].mxu0 %v276
  %v455 = vpop.f32.mrb[0].mxu0
  %v456 = vadd.f32 0.0, %v455
  %v457 = vpop.f32.mrb[0].mxu0
  %v458 = vpop.f32.mrb[0].mxu0
  %v459 = vadd.f32 0.0, %v458
  %v460 = vpop.f32.mrb[0].mxu0
  %461 = vmatprep.mubr.bf16.mxu0 0
  %462 = vmatmul.mubr.bf16.gmra.mrb[0].mxu0 %v279
  %v463 = vpop.f32.mrb[0].mxu0
  %v464 = vadd.f32 0.0, %v463
  %v465 = vpop.f32.mrb[0].mxu0
  %v466 = vpop.f32.mrb[0].mxu0
  %v467 = vadd.f32 0.0, %v466
  %v468 = vpop.f32.mrb[0].mxu0
  %469 = vmatprep.mubr.bf16.mxu0 0
  %470 = vmatmul.mubr.bf16.gmra.mrb[0].mxu0 %v282
  %v471 = vpop.f32.mrb[0].mxu0
  %v472 = vadd.f32 0.0, %v471
  %v473 = vpop.f32.mrb[0].mxu0
  %v474 = vpop.f32.mrb[0].mxu0
  %v475 = vadd.f32 0.0, %v474
  %v476 = vpop.f32.mrb[0].mxu0
  %477 = vmatprep.mubr.bf16.mxu0 0
  %478 = vmatmul.mubr.bf16.gmra.mrb[0].mxu0 %v285
  %v479 = vpop.f32.mrb[0].mxu0
  %v480 = vadd.f32 0.0, %v479
  %v481 = vpop.f32.mrb[0].mxu0
  %v482 = vpop.f32.mrb[0].mxu0
  %v483 = vadd.f32 0.0, %v482
  %v484 = vpop.f32.mrb[0].mxu0
  %485 = vmatprep.mubr.bf16.mxu0 0
  %486 = vmatmul.mubr.bf16.gmra.mrb[0].mxu0 %v288
  %v487 = vpop.f32.mrb[0].mxu0
  %v488 = vadd.f32 0.0, %v487
  %v489 = vpop.f32.mrb[0].mxu0
  %v490 = vpop.f32.mrb[0].mxu0
  %v491 = vadd.f32 0.0, %v490
  %v492 = vpop.f32.mrb[0].mxu0
  %493 = vmatprep.mubr.bf16.mxu0 0
  %494 = vmatmul.mubr.bf16.gmra.mrb[0].mxu0 %v291
  %v495 = vpop.f32.mrb[0].mxu0
  %v496 = vadd.f32 0.0, %v495
  %v497 = vpop.f32.mrb[0].mxu0
  %v498 = vpop.f32.mrb[0].mxu0
  %v499 = vadd.f32 0.0, %v498
  %v500 = vpop.f32.mrb[0].mxu0
  %501 = vmatprep.mubr.bf16.mxu0 0
  %502 = vmatmul.mubr.bf16.gmra.mrb[0].mxu0 %v294
  %v503 = vpop.f32.mrb[0].mxu0
  %v504 = vadd.f32 0.0, %v503
  %v505 = vpop.f32.mrb[0].mxu0
  %v506 = vpop.f32.mrb[0].mxu0
  %v507 = vadd.f32 0.0, %v506
  %v508 = vpop.f32.mrb[0].mxu0
  %509 = vmatprep.mubr.bf16.mxu0 0
  %510 = vmatmul.mubr.bf16.gmra.mrb[0].mxu0 %v297
  %v511 = vpop.f32.mrb[0].mxu0
  %v512 = vadd.f32 0.0, %v511
  %v513 = vpop.f32.mrb[0].mxu0
  %v514 = vpop.f32.mrb[0].mxu0
  %v515 = vadd.f32 0.0, %v514
  %v516 = vpop.f32.mrb[0].mxu0
  %517 = vmatprep.mubr.bf16.mxu0 0
  %518 = vmatmul.mubr.bf16.gmra.mrb[0].mxu0 %v300
  %v519 = vpop.f32.mrb[0].mxu0
  %v520 = vadd.f32 0.0, %v519
  %v521 = vpop.f32.mrb[0].mxu0
  %v522 = vpop.f32.mrb[0].mxu0
  %v523 = vadd.f32 0.0, %v522
  %v524 = vpop.f32.mrb[0].mxu0
  %525 = vmatprep.mubr.bf16.mxu0 0
  %526 = vmatmul.mubr.bf16.gmra.mrb[0].mxu0 %v303
  %v527 = vpop.f32.mrb[0].mxu0
  %v528 = vadd.f32 0.0, %v527
  %v529 = vpop.f32.mrb[0].mxu0
  %v530 = vpop.f32.mrb[0].mxu0
  %v531 = vadd.f32 0.0, %v530
  %v532 = vpop.f32.mrb[0].mxu0
  %533 = vmatprep.mubr.bf16.mxu0 0
  %534 = vmatmul.mubr.bf16.gmra.mrb[0].mxu0 %v306
  %v535 = vpop.f32.mrb[0].mxu0
  %v536 = vadd.f32 0.0, %v535
  %v537 = vpop.f32.mrb[0].mxu0
  %v538 = vpop.f32.mrb[0].mxu0
  %v539 = vadd.f32 0.0, %v538
  %v540 = vpop.f32.mrb[0].mxu0
  %541 = vmatprep.mubr.bf16.mxu0 0
  %542 = vmatmul.mubr.bf16.gmra.mrb[0].mxu0 %v309
  %v543 = vpop.f32.mrb[0].mxu0
  %v544 = vadd.f32 0.0, %v543
  %v545 = vpop.f32.mrb[0].mxu0
  %v546 = vpop.f32.mrb[0].mxu0
  %v547 = vadd.f32 0.0, %v546
  %v548 = vpop.f32.mrb[0].mxu0
  %549 = vmatprep.mubr.bf16.mxu0 0
  %550 = vmatmul.mubr.bf16.gmra.mrb[0].mxu0 %v312
  %v551 = vpop.f32.mrb[0].mxu0
  %v552 = vadd.f32 0.0, %v551
  %v553 = vpop.f32.mrb[0].mxu0
  %v554 = vpop.f32.mrb[0].mxu0
  %v555 = vadd.f32 0.0, %v554
  %v556 = vpop.f32.mrb[0].mxu0
  %557 = vmatprep.mubr.bf16.mxu0 0
  %558 = vmatmul.mubr.bf16.gmra.mrb[0].mxu0 %v315
  %v559 = vpop.f32.mrb[0].mxu0
  %v560 = vadd.f32 0.0, %v559
  %v561 = vpop.f32.mrb[0].mxu0
  %v562 = vpop.f32.mrb[0].mxu0
  %v563 = vadd.f32 0.0, %v562
  %v564 = vpop.f32.mrb[0].mxu0
  %565 = vmatprep.mubr.bf16.mxu0 0
  %566 = vmatmul.mubr.bf16.gmra.mrb[0].mxu0 %v318
  %v567 = vpop.f32.mrb[0].mxu0
  %v568 = vadd.f32 0.0, %v567
  %v569 = vpop.f32.mrb[0].mxu0
  %v570 = vpop.f32.mrb[0].mxu0
  %v571 = vadd.f32 0.0, %v570
  %v572 = vpop.f32.mrb[0].mxu0
  %573 = vmatprep.mubr.bf16.mxu0 0
  %574 = vmatmul.mubr.bf16.gmra.mrb[0].mxu0 %v321
  %v575 = vpop.f32.mrb[0].mxu0
  %v576 = vadd.f32 0.0, %v575
  %v577 = vpop.f32.mrb[0].mxu0
  %v578 = vpop.f32.mrb[0].mxu0
  %v579 = vadd.f32 0.0, %v578
  %v580 = vpop.f32.mrb[0].mxu0
  %581 = vmatprep.mubr.bf16.mxu0 0
  %582 = vmatmul.mubr.bf16.gmra.mrb[0].mxu0 %v324
  %v583 = vpop.f32.mrb[0].mxu0
  %v584 = vadd.f32 0.0, %v583
  %v585 = vpop.f32.mrb[0].mxu0
  %v586 = vpop.f32.mrb[0].mxu0
  %v587 = vadd.f32 0.0, %v586
  %v588 = vpop.f32.mrb[0].mxu0
  %589 = vmatprep.mubr.bf16.mxu0 0
  %590 = vmatmul.mubr.bf16.gmra.mrb[0].mxu0 %v327
  %v591 = vpop.f32.mrb[0].mxu0
  %v592 = vadd.f32 0.0, %v591
  %v593 = vpop.f32.mrb[0].mxu0
  %v594 = vpop.f32.mrb[0].mxu0
  %v595 = vadd.f32 0.0, %v594
  %v596 = vpop.f32.mrb[0].mxu0
  %597 = vmatprep.mubr.bf16.mxu0 0
  %598 = vmatmul.mubr.bf16.gmra.mrb[0].mxu0 %v330
  %v599 = vpop.f32.mrb[0].mxu0
  %v600 = vadd.f32 0.0, %v599
  %v601 = vpop.f32.mrb[0].mxu0
  %v602 = vpop.f32.mrb[0].mxu0
  %v603 = vadd.f32 0.0, %v602
  %v604 = vpop.f32.mrb[0].mxu0
  %605 = vmatprep.mubr.bf16.mxu0 0
  %606 = vmatmul.mubr.bf16.gmra.mrb[0].mxu0 %v333
  %v607 = vpop.f32.mrb[0].mxu0
  %v608 = vadd.f32 0.0, %v607
  %v609 = vpop.f32.mrb[0].mxu0
  %v610 = vpop.f32.mrb[0].mxu0
  %v611 = vadd.f32 0.0, %v610
  %v612 = vpop.f32.mrb[0].mxu0
  %613 = vmatprep.mubr.bf16.mxu0 0
  %614 = vmatmul.mubr.bf16.gmra.mrb[0].mxu0 %v336
  %v615 = vpop.f32.mrb[0].mxu0
  %v616 = vadd.f32 0.0, %v615
  %v617 = vpop.f32.mrb[0].mxu0
  %v618 = vpop.f32.mrb[0].mxu0
  %v619 = vadd.f32 0.0, %v618
  %v620 = vpop.f32.mrb[0].mxu0
  %621 = vmatprep.mubr.bf16.mxu0 0
  %622 = vmatmul.mubr.bf16.gmra.mrb[0].mxu0 %v339
  %v623 = vpop.f32.mrb[0].mxu0
  %v624 = vadd.f32 0.0, %v623
  %v625 = vpop.f32.mrb[0].mxu0
  %v626 = vpop.f32.mrb[0].mxu0
  %v627 = vadd.f32 0.0, %v626
  %v628 = vpop.f32.mrb[0].mxu0
  %629 = vdwg.mxu0
  %630 = vst [vmem:[%s2] sm:$0xff] %v376
  %631 = vst [vmem:[%s2 + $0x8] sm:$0xff] %v379
  %632 = vst [vmem:[%s2 + $0x10] sm:$0xff] %v384
  %633 = vst [vmem:[%s2 + $0x18] sm:$0xff] %v387
  %634 = vst [vmem:[%s2 + $0x20] sm:$0xff] %v392
  %635 = vst [vmem:[%s2 + $0x28] sm:$0xff] %v395
  %636 = vst [vmem:[%s2 + $0x30] sm:$0xff] %v400
  %637 = vst [vmem:[%s2 + $0x38] sm:$0xff] %v403
  %638 = vst [vmem:[%s2 + $0x40] sm:$0xff] %v408
  %639 = vst [vmem:[%s2 + $0x48] sm:$0xff] %v411
  %640 = vst [vmem:[%s2 + $0x50] sm:$0xff] %v416
  %641 = vst [vmem:[%s2 + $0x58] sm:$0xff] %v419
  %642 = vst [vmem:[%s2 + $0x60] sm:$0xff] %v424
  %643 = vst [vmem:[%s2 + $0x68] sm:$0xff] %v427
  %644 = vst [vmem:[%s2 + $0x70] sm:$0xff] %v432
  %645 = vst [vmem:[%s2 + $0x78] sm:$0xff] %v435
  %646 = vst [vmem:[%s2 + $0x80] sm:$0xff] %v440
  %647 = vst [vmem:[%s2 + $0x88] sm:$0xff] %v443
  %648 = vst [vmem:[%s2 + $0x90] sm:$0xff] %v448
  %649 = vst [vmem:[%s2 + $0x98] sm:$0xff] %v451
  %650 = vst [vmem:[%s2 + $0xa0] sm:$0xff] %v456
  %651 = vst [vmem:[%s2 + $0xa8] sm:$0xff] %v459
  %652 = vst [vmem:[%s2 + $0xb0] sm:$0xff] %v464
  %653 = vst [vmem:[%s2 + $0xb8] sm:$0xff] %v467
  %654 = vst [vmem:[%s2 + $0xc0] sm:$0xff] %v472
  %655 = vst [vmem:[%s2 + $0xc8] sm:$0xff] %v475
  %656 = vst [vmem:[%s2 + $0xd0] sm:$0xff] %v480
  %657 = vst [vmem:[%s2 + $0xd8] sm:$0xff] %v483
  %658 = vst [vmem:[%s2 + $0xe0] sm:$0xff] %v488
  %659 = vst [vmem:[%s2 + $0xe8] sm:$0xff] %v491
  %660 = vst [vmem:[%s2 + $0xf0] sm:$0xff] %v496
  %661 = vst [vmem:[%s2 + $0xf8] sm:$0xff] %v499
  %662 = vst [vmem:[%s2 + $0x100] sm:$0xff] %v504
  %663 = vst [vmem:[%s2 + $0x108] sm:$0xff] %v507
  %664 = vst [vmem:[%s2 + $0x110] sm:$0xff] %v512
  %665 = vst [vmem:[%s2 + $0x118] sm:$0xff] %v515
  %666 = vst [vmem:[%s2 + $0x120] sm:$0xff] %v520
  %667 = vst [vmem:[%s2 + $0x128] sm:$0xff] %v523
  %668 = vst [vmem:[%s2 + $0x130] sm:$0xff] %v528
  %669 = vst [vmem:[%s2 + $0x138] sm:$0xff] %v531
  %670 = vst [vmem:[%s2 + $0x140] sm:$0xff] %v536
  %671 = vst [vmem:[%s2 + $0x148] sm:$0xff] %v539
  %672 = vst [vmem:[%s2 + $0x150] sm:$0xff] %v544
  %673 = vst [vmem:[%s2 + $0x158] sm:$0xff] %v547
  %674 = vst [vmem:[%s2 + $0x160] sm:$0xff] %v552
  %675 = vst [vmem:[%s2 + $0x168] sm:$0xff] %v555
  %676 = vst [vmem:[%s2 + $0x170] sm:$0xff] %v560
  %677 = vst [vmem:[%s2 + $0x178] sm:$0xff] %v563
  %678 = vst [vmem:[%s2 + $0x180] sm:$0xff] %v568
  %679 = vst [vmem:[%s2 + $0x188] sm:$0xff] %v571
  %680 = vst [vmem:[%s2 + $0x190] sm:$0xff] %v576
  %681 = vst [vmem:[%s2 + $0x198] sm:$0xff] %v579
  %682 = vst [vmem:[%s2 + $0x1a0] sm:$0xff] %v584
  %683 = vst [vmem:[%s2 + $0x1a8] sm:$0xff] %v587
  %684 = vst [vmem:[%s2 + $0x1b0] sm:$0xff] %v592
  %685 = vst [vmem:[%s2 + $0x1b8] sm:$0xff] %v595
  %686 = vst [vmem:[%s2 + $0x1c0] sm:$0xff] %v600
  %687 = vst [vmem:[%s2 + $0x1c8] sm:$0xff] %v603
  %688 = vst [vmem:[%s2 + $0x1d0] sm:$0xff] %v608
  %689 = vst [vmem:[%s2 + $0x1d8] sm:$0xff] %v611
  %690 = vst [vmem:[%s2 + $0x1e0] sm:$0xff] %v616
  %691 = vst [vmem:[%s2 + $0x1e8] sm:$0xff] %v619
  %692 = vst [vmem:[%s2 + $0x1f0] sm:$0xff] %v624
  %693 = vst [vmem:[%s2 + $0x1f8] sm:$0xff] %v627
  // Predicated region
  $region10: #{generator_forward.23} parent=0 // pred_check
    _
  $region11: #{generator_forward.23} parent=0 // pred_check_branch
    %695 = sbr.rel (0) target = $region13
  $region12: #{generator_forward.23} parent=0 // pred_region
    _
  $region13: #{generator_forward.23} parent=0 // pred_fallthru
    _
  // Predicated region
  $region14: #{generator_forward.23} parent=0 // pred_check
    _
  $region15: #{generator_forward.23} parent=0 // pred_check_branch
    %697 = sbr.rel (0) target = $region17
  $region16: #{generator_forward.23} parent=0 // pred_region
    _
  $region17: #{generator_forward.23} parent=0 // pred_fallthru
    _

// kernel: tile.73
$region0: #{tile.73}
  #allocation0 [shape = 's32[1]{0}', space=sflag, size = 0x4, scoped, tag = 'scoped memory for tile.73']
  %s0 = inlined_call_operand.vmem [shape: f32[8], index: 0, kind: input, shape index: {}]
  %s1 = inlined_call_operand.vmem [shape: f32[32,8], index: 1, kind: output, shape index: {}]
  // Predicated region
  $region2: #{tile.73} parent=0 // pred_check
    _
  $region3: #{tile.73} parent=0 // pred_check_branch
    %3 = sbr.rel (0) target = $region5
  $region4: #{tile.73} parent=0 // pred_region
    _
  $region5: #{tile.73} parent=0 // pred_fallthru
    _
  %v4 = vld [vmem:[%s0] ss:$0 sm:$0xff]
  %5 = vst [vmem:[%s1] sm:$0xff] %v4
  %s6 = scalar_lea.vmem %s1, 8
  %7 = vst [vmem:[%s6] sm:$0xff] %v4
  %s8 = scalar_lea.vmem %s1, 16
  %9 = vst [vmem:[%s8] sm:$0xff] %v4
  %s10 = scalar_lea.vmem %s1, 24
  %11 = vst [vmem:[%s10] sm:$0xff] %v4

// kernel: tile.74
$region0: #{tile.74}
  %s0 = inlined_call_operand.vmem [shape: f32[32,8], index: 0, kind: input, shape index: {}]
  %s1 = inlined_call_operand.vmem [shape: f32[1,256], index: 1, kind: output, shape index: {}]
  $region1: #{tile.74} parent=0
    #allocation0 [shape = 'u8[8192]{0}', space=vmem, size = 0x2000, scoped, tag = 'scoped mem for output reshape']
    %s2 = smov 3
    %v3 = vld [vmem:[%s0] ss:$16 sm:%s2]
    %vm4 = vcmask 64512
    %5 = vst.msk [vmem:[#allocation0] ss:$8 sm:$0x3] %vm4, %v3
    %s6 = scalar_lea.vmem %s0, 15
    %s7 = smov 3
    %v8 = vld [vmem:[%s6] ss:$16 sm:%s7]
    %9 = vrot.lane.b32.xlu0 %v8, 120
    %v10 = vpop.permute.xlu0 %9
    %vm11 = vcmask 1048512
    %12 = vst.msk [vmem:[#allocation0] ss:$8 sm:$0x3] %vm11, %v10
    %s13 = scalar_lea.vmem %s0, 14
    %s14 = smov 3
    %v15 = vld [vmem:[%s13] ss:$16 sm:%s14]
    %16 = vrot.lane.b32.xlu0 %v15, 112
    %v17 = vpop.permute.xlu0 %16
    %vm18 = vcmask 982912
    %19 = vst.msk [vmem:[#allocation0] ss:$8 sm:$0x3] %vm18, %v17
    %s20 = scalar_lea.vmem %s0, 13
    %s21 = smov 3
    %v22 = vld [vmem:[%s20] ss:$16 sm:%s21]
    %23 = vrot.lane.b32.xlu0 %v22, 104
    %v24 = vpop.permute.xlu0 %23
    %vm25 = vcmask 917312
    %26 = vst.msk [vmem:[#allocation0] ss:$8 sm:$0x3] %vm25, %v24
    %s27 = scalar_lea.vmem %s0, 12
    %s28 = smov 3
    %v29 = vld [vmem:[%s27] ss:$16 sm:%s28]
    %30 = vrot.lane.b32.xlu0 %v29, 96
    %v31 = vpop.permute.xlu0 %30
    %vm32 = vcmask 851712
    %33 = vst.msk [vmem:[#allocation0] ss:$8 sm:$0x3] %vm32, %v31
    %s34 = scalar_lea.vmem %s0, 11
    %s35 = smov 3
    %v36 = vld [vmem:[%s34] ss:$16 sm:%s35]
    %37 = vrot.lane.b32.xlu0 %v36, 88
    %v38 = vpop.permute.xlu0 %37
    %vm39 = vcmask 786112
    %40 = vst.msk [vmem:[#allocation0] ss:$8 sm:$0x3] %vm39, %v38
    %s41 = scalar_lea.vmem %s0, 10
    %s42 = smov 3
    %v43 = vld [vmem:[%s41] ss:$16 sm:%s42]
    %44 = vrot.lane.b32.xlu0 %v43, 80
    %v45 = vpop.permute.xlu0 %44
    %vm46 = vcmask 720512
    %47 = vst.msk [vmem:[#allocation0] ss:$8 sm:$0x3] %vm46, %v45
    %s48 = scalar_lea.vmem %s0, 9
    %s49 = smov 3
    %v50 = vld [vmem:[%s48] ss:$16 sm:%s49]
    %51 = vrot.lane.b32.xlu0 %v50, 72
    %v52 = vpop.permute.xlu0 %51
    %vm53 = vcmask 654912
    %54 = vst.msk [vmem:[#allocation0] ss:$8 sm:$0x3] %vm53, %v52
    %s55 = scalar_lea.vmem %s0, 8
    %s56 = smov 3
    %v57 = vld [vmem:[%s55] ss:$16 sm:%s56]
    %58 = vrot.lane.b32.xlu0 %v57, 64
    %v59 = vpop.permute.xlu0 %58
    %vm60 = vcmask 589312
    %61 = vst.msk [vmem:[#allocation0] ss:$8 sm:$0x3] %vm60, %v59
    %s62 = scalar_lea.vmem %s0, 7
    %s63 = smov 3
    %v64 = vld [vmem:[%s62] ss:$16 sm:%s63]
    %65 = vrot.lane.b32.xlu0 %v64, 56
    %v66 = vpop.permute.xlu0 %65
    %vm67 = vcmask 523712
    %68 = vst.msk [vmem:[#allocation0] ss:$8 sm:$0x3] %vm67, %v66
    %s69 = scalar_lea.vmem %s0, 6
    %s70 = smov 3
    %v71 = vld [vmem:[%s69] ss:$16 sm:%s70]
    %72 = vrot.lane.b32.xlu0 %v71, 48
    %v73 = vpop.permute.xlu0 %72
    %vm74 = vcmask 458112
    %75 = vst.msk [vmem:[#allocation0] ss:$8 sm:$0x3] %vm74, %v73
    %s76 = scalar_lea.vmem %s0, 5
    %s77 = smov 3
    %v78 = vld [vmem:[%s76] ss:$16 sm:%s77]
    %79 = vrot.lane.b32.xlu0 %v78, 40
    %v80 = vpop.permute.xlu0 %79
    %vm81 = vcmask 392512
    %82 = vst.msk [vmem:[#allocation0] ss:$8 sm:$0x3] %vm81, %v80
    %s83 = scalar_lea.vmem %s0, 4
    %s84 = smov 3
    %v85 = vld [vmem:[%s83] ss:$16 sm:%s84]
    %86 = vrot.lane.b32.xlu0 %v85, 32
    %v87 = vpop.permute.xlu0 %86
    %vm88 = vcmask 326912
    %89 = vst.msk [vmem:[#allocation0] ss:$8 sm:$0x3] %vm88, %v87
    %s90 = scalar_lea.vmem %s0, 3
    %s91 = smov 3
    %v92 = vld [vmem:[%s90] ss:$16 sm:%s91]
    %93 = vrot.lane.b32.xlu0 %v92, 24
    %v94 = vpop.permute.xlu0 %93
    %vm95 = vcmask 261312
    %96 = vst.msk [vmem:[#allocation0] ss:$8 sm:$0x3] %vm95, %v94
    %s97 = scalar_lea.vmem %s0, 2
    %s98 = smov 3
    %v99 = vld [vmem:[%s97] ss:$16 sm:%s98]
    %100 = vrot.lane.b32.xlu0 %v99, 16
    %v101 = vpop.permute.xlu0 %100
    %vm102 = vcmask 195712
    %103 = vst.msk [vmem:[#allocation0] ss:$8 sm:$0x3] %vm102, %v101
    %s104 = scalar_lea.vmem %s0, 1
    %s105 = smov 3
    %v106 = vld [vmem:[%s104] ss:$16 sm:%s105]
    %107 = vrot.lane.b32.xlu0 %v106, 8
    %v108 = vpop.permute.xlu0 %107
    %vm109 = vcmask 130112
    %110 = vst.msk [vmem:[#allocation0] ss:$8 sm:$0x3] %vm109, %v108
    %s112 = sshllo.u32 0, 1
    %v114 = vld [vmem:[#allocation0] sm:%s112]
    %s115 = sshllo.u32 0, 1
    %116 = vst [vmem:[%s1] sm:%s115] %v114
    %s117 = scalar_lea.vmem [#allocation0], 8
    %v118 = vld [vmem:[%s117] sm:%s112]
    %s119 = sshllo.u32 0, 1
    %s120 = scalar_lea.vmem %s1, 1
    %121 = vst [vmem:[%s120] sm:%s119] %v118

// kernel: generator_forward.24
$region0: #{generator_forward.24}
  #allocation0 [shape = 'u32[]', space=smem, size = 0x4, offset = 0x4, fixed_abs, tag = 'smem constant byte address 0x4 - core index']
  #allocation1 [shape = 'u32[144,128]{1,0:T(1,128)}', space=vmem, size = 0x12000, scoped, tag = 'internal scratch']
  %s0 = inlined_call_operand.vmem [shape: f32[64,256], index: 0, kind: input, shape index: {}]
  %s1 = inlined_call_operand.vmem [shape: f32[1,256], index: 1, kind: output, shape index: {0}]
  %s2 = inlined_call_operand.vmem [shape: f32[1,256], index: 2, kind: output, shape index: {1}]
  %3 = xla_tuple %s1, %s2
  %s4 = sld [smem:[#allocation0]]
  $region26: #{generator_forward.24} parent=0
    _
  %s6 = ssub.s32 1, %s4
  %s7 = scalar_select 0, %s6, %s4
  // Predicated region
  $region2: #{generator_forward.24} parent=0 // pred_check
    _
  $region3: #{generator_forward.24} parent=0 // pred_check_branch
    %9 = sbr.rel (0) target = $region5
  $region4: #{generator_forward.24} parent=0 // pred_region
    _
  $region5: #{generator_forward.24} parent=0 // pred_fallthru
    _
  %p10 = scmp.eq.s32.totalorder 0, 0
  // Predicated region
  $region6: #{generator_forward.24} parent=0 // pred_check
    %p11 = pneg %p10
  $region7: #{generator_forward.24} parent=0 // pred_check_branch
    %13 = sbr.rel (%p11) target = $region9
  $region8: #{generator_forward.24} parent=0 // pred_region
    %v14 = vlaneseq
    %vm15 = vcmp.ge.s32.totalorder %v14, 0
    %vm16 = vcmp.lt.s32.totalorder %v14, 256
    %vm17 = vmand %vm15, %vm16
    %18 = vst.msk [vmem:[%s1] sm:$0x3] %vm17, 0.0
    %19 = vst.msk [vmem:[%s2] sm:$0x3] %vm17, 0.0
  $region9: #{generator_forward.24} parent=0 // pred_fallthru
    _
  %v20 = vld [vmem:[%s0] sm:$0xff]
  %v21 = vld [vmem:[%s0 + $0x8] sm:$0xff]
  %v22 = vld [vmem:[%s0 + $0x10] sm:$0xff]
  %v23 = vld [vmem:[%s0 + $0x18] sm:$0xff]
  %v24 = vld [vmem:[%s0 + $0x20] sm:$0xff]
  %v25 = vld [vmem:[%s0 + $0x28] sm:$0xff]
  %v26 = vld [vmem:[%s0 + $0x30] sm:$0xff]
  %v27 = vld [vmem:[%s0 + $0x38] sm:$0xff]
  %v28 = vld [vmem:[%s0 + $0x40] sm:$0xff]
  %v29 = vld [vmem:[%s0 + $0x48] sm:$0xff]
  %v30 = vld [vmem:[%s0 + $0x50] sm:$0xff]
  %v31 = vld [vmem:[%s0 + $0x58] sm:$0xff]
  %v32 = vld [vmem:[%s0 + $0x60] sm:$0xff]
  %v33 = vld [vmem:[%s0 + $0x68] sm:$0xff]
  %v34 = vld [vmem:[%s0 + $0x70] sm:$0xff]
  %v35 = vld [vmem:[%s0 + $0x78] sm:$0xff]
  %v36 = vld [vmem:[%s1] sm:$0x3]
  %v37 = vadd.f32 %v20, %v22
  %v38 = vadd.f32 %v37, %v24
  %v39 = vadd.f32 %v38, %v26
  %v40 = vadd.f32 %v39, %v28
  %v41 = vadd.f32 %v40, %v30
  %v42 = vadd.f32 %v41, %v32
  %v43 = vadd.f32 %v42, %v34
  %v44 = vrot.slane %v43, 4
  %v45 = vadd.f32 %v43, %v44
  %v46 = vrot.slane %v45, 2
  %v47 = vadd.f32 %v45, %v46
  %v48 = vrot.slane %v47, 1
  %v49 = vadd.f32 %v47, %v48
  %v50 = vadd.f32 %v21, %v23
  %v51 = vadd.f32 %v50, %v25
  %v52 = vadd.f32 %v51, %v27
  %v53 = vadd.f32 %v52, %v29
  %v54 = vadd.f32 %v53, %v31
  %v55 = vadd.f32 %v54, %v33
  %v56 = vadd.f32 %v55, %v35
  %v57 = vrot.slane %v56, 4
  %v58 = vadd.f32 %v56, %v57
  %v59 = vrot.slane %v58, 2
  %v60 = vadd.f32 %v58, %v59
  %v61 = vrot.slane %v60, 1
  %v62 = vadd.f32 %v60, %v61
  %v65 = vcombine.low %v49, %v62
  %v67 = vunpack.c.l.s4 1966171168
  %v68 = vunpack.c.0.s8 %v67
  %v69 = vlaneseq
  %v70 = vshrl.u32 %v69, 7
  %v71 = vsub.s32 %v68, %v70
  %v72 = vrot.slane %v65, %v71
  %v74 = vunpack.c.l.s4 1966171168
  %v75 = vunpack.c.0.s8 %v74
  %v76 = vlaneseq
  %v77 = vshrl.u32 %v76, 7
  %v78 = vsub.s32 %v75, %v77
  %v79 = vrot.slane %v72, %v78
  %v81 = vadd.f32 %v36, %v79
  %v82 = vlaneseq
  %vm83 = vcmp.ge.s32.totalorder %v82, 0
  %vm84 = vcmp.lt.s32.totalorder %v82, 256
  %vm85 = vmand %vm83, %vm84
  %86 = vst.msk [vmem:[%s1] sm:$0x3] %vm85, %v81
  %v87 = vld [vmem:[%s2] sm:$0x3]
  %v88 = vmul.f32 %v20, %v20
  %v89 = vmul.f32 %v21, %v21
  %v90 = vmul.f32 %v22, %v22
  %v91 = vmul.f32 %v23, %v23
  %v92 = vmul.f32 %v24, %v24
  %v93 = vmul.f32 %v25, %v25
  %v94 = vmul.f32 %v26, %v26
  %v95 = vmul.f32 %v27, %v27
  %v96 = vmul.f32 %v28, %v28
  %v97 = vmul.f32 %v29, %v29
  %v98 = vmul.f32 %v30, %v30
  %v99 = vmul.f32 %v31, %v31
  %v100 = vmul.f32 %v32, %v32
  %v101 = vmul.f32 %v33, %v33
  %v102 = vmul.f32 %v34, %v34
  %v103 = vmul.f32 %v35, %v35
  %v104 = vadd.f32 %v88, %v90
  %v105 = vadd.f32 %v104, %v92
  %v106 = vadd.f32 %v105, %v94
  %v107 = vadd.f32 %v106, %v96
  %v108 = vadd.f32 %v107, %v98
  %v109 = vadd.f32 %v108, %v100
  %v110 = vadd.f32 %v109, %v102
  %v111 = vrot.slane %v110, 4
  %v112 = vadd.f32 %v110, %v111
  %v113 = vrot.slane %v112, 2
  %v114 = vadd.f32 %v112, %v113
  %v115 = vrot.slane %v114, 1
  %v116 = vadd.f32 %v114, %v115
  %v117 = vadd.f32 %v89, %v91
  %v118 = vadd.f32 %v117, %v93
  %v119 = vadd.f32 %v118, %v95
  %v120 = vadd.f32 %v119, %v97
  %v121 = vadd.f32 %v120, %v99
  %v122 = vadd.f32 %v121, %v101
  %v123 = vadd.f32 %v122, %v103
  %v124 = vrot.slane %v123, 4
  %v125 = vadd.f32 %v123, %v124
  %v126 = vrot.slane %v125, 2
  %v127 = vadd.f32 %v125, %v126
  %v128 = vrot.slane %v127, 1
  %v129 = vadd.f32 %v127, %v128
  %v132 = vcombine.low %v116, %v129
  %v134 = vunpack.c.l.s4 1966171168
  %v135 = vunpack.c.0.s8 %v134
  %v136 = vlaneseq
  %v137 = vshrl.u32 %v136, 7
  %v138 = vsub.s32 %v135, %v137
  %v139 = vrot.slane %v132, %v138
  %v141 = vunpack.c.l.s4 1966171168
  %v142 = vunpack.c.0.s8 %v141
  %v143 = vlaneseq
  %v144 = vshrl.u32 %v143, 7
  %v145 = vsub.s32 %v142, %v144
  %v146 = vrot.slane %v139, %v145
  %v148 = vadd.f32 %v87, %v146
  %149 = vst.msk [vmem:[%s2] sm:$0x3] %vm85, %v148
  // Predicated region
  $region10: #{generator_forward.24} parent=0 // pred_check
    _
  $region11: #{generator_forward.24} parent=0 // pred_check_branch
    %151 = sbr.rel (0) target = $region13
  $region12: #{generator_forward.24} parent=0 // pred_region
    _
  $region13: #{generator_forward.24} parent=0 // pred_fallthru
    _
  // Predicated region
  $region14: #{generator_forward.24} parent=0 // pred_check
    _
  $region15: #{generator_forward.24} parent=0 // pred_check_branch
    %153 = sbr.rel (0) target = $region17
  $region16: #{generator_forward.24} parent=0 // pred_region
    _
  $region17: #{generator_forward.24} parent=0 // pred_fallthru
    _
  // Predicated region
  $region18: #{generator_forward.24} parent=0 // pred_check
    _
  $region19: #{generator_forward.24} parent=0 // pred_check_branch
    %155 = sbr.rel (0) target = $region21
  $region20: #{generator_forward.24} parent=0 // pred_region
    _
  $region21: #{generator_forward.24} parent=0 // pred_fallthru
    _
  // Predicated region
  $region22: #{generator_forward.24} parent=0 // pred_check
    _
  $region23: #{generator_forward.24} parent=0 // pred_check_branch
    %157 = sbr.rel (0) target = $region25
  $region24: #{generator_forward.24} parent=0 // pred_region
    _
  $region25: #{generator_forward.24} parent=0 // pred_fallthru
    _

// kernel: generator_forward.25
$region0: #{generator_forward.25}
  #allocation0 [shape = 'u32[]', space=smem, size = 0x4, offset = 0x4, fixed_abs, tag = 'smem constant byte address 0x4 - core index']
  #allocation1 [shape = 'u32[144,128]{1,0:T(1,128)}', space=vmem, size = 0x12000, scoped, tag = 'internal scratch']
  %s0 = inlined_call_operand.vmem [shape: f32[64,256], index: 0, kind: input, shape index: {}, may-alias: {0,3}]
  %s1 = inlined_call_operand.vmem [shape: f32[1,256], index: 1, kind: input, shape index: {}]
  %s2 = inlined_call_operand.vmem [shape: f32[1,256], index: 2, kind: input, shape index: {}]
  %s3 = inlined_call_operand.vmem [shape: f32[64,256], index: 3, kind: output, shape index: {}, may-alias: {0,3}]
  %s4 = sld [smem:[#allocation0]]
  $region22: #{generator_forward.25} parent=0
    _
  %s6 = ssub.s32 1, %s4
  %s7 = scalar_select 0, %s6, %s4
  // Predicated region
  $region2: #{generator_forward.25} parent=0 // pred_check
    _
  $region3: #{generator_forward.25} parent=0 // pred_check_branch
    %9 = sbr.rel (0) target = $region5
  $region4: #{generator_forward.25} parent=0 // pred_region
    _
  $region5: #{generator_forward.25} parent=0 // pred_fallthru
    _
  // Predicated region
  $region6: #{generator_forward.25} parent=0 // pred_check
    _
  $region7: #{generator_forward.25} parent=0 // pred_check_branch
    %11 = sbr.rel (0) target = $region9
  $region8: #{generator_forward.25} parent=0 // pred_region
    _
  $region9: #{generator_forward.25} parent=0 // pred_fallthru
    _
  // Predicated region
  $region10: #{generator_forward.25} parent=0 // pred_check
    _
  $region11: #{generator_forward.25} parent=0 // pred_check_branch
    %13 = sbr.rel (0) target = $region13
  $region12: #{generator_forward.25} parent=0 // pred_region
    _
  $region13: #{generator_forward.25} parent=0 // pred_fallthru
    _
  %v14 = vld [vmem:[%s0] sm:$0xff]
  %v15 = vld [vmem:[%s0 + $0x8] sm:$0xff]
  %v16 = vld [vmem:[%s0 + $0x10] sm:$0xff]
  %v17 = vld [vmem:[%s0 + $0x18] sm:$0xff]
  %v18 = vld [vmem:[%s0 + $0x20] sm:$0xff]
  %v19 = vld [vmem:[%s0 + $0x28] sm:$0xff]
  %v20 = vld [vmem:[%s0 + $0x30] sm:$0xff]
  %v21 = vld [vmem:[%s0 + $0x38] sm:$0xff]
  %v22 = vld [vmem:[%s0 + $0x40] sm:$0xff]
  %v23 = vld [vmem:[%s0 + $0x48] sm:$0xff]
  %v24 = vld [vmem:[%s0 + $0x50] sm:$0xff]
  %v25 = vld [vmem:[%s0 + $0x58] sm:$0xff]
  %v26 = vld [vmem:[%s0 + $0x60] sm:$0xff]
  %v27 = vld [vmem:[%s0 + $0x68] sm:$0xff]
  %v28 = vld [vmem:[%s0 + $0x70] sm:$0xff]
  %v29 = vld [vmem:[%s0 + $0x78] sm:$0xff]
  %v30 = vld [vmem:[%s1] sm:$0x3]
  %v32 = vlaneseq
  %v33 = vshrl.u32 %v32, 7
  %v34 = vsub.s32 0, %v33
  %v35 = vrot.slane %v30, %v34
  %v36 = vlaneseq
  %v37 = vshrl.u32 %v36, 7
  %v38 = vsub.s32 1, %v37
  %v39 = vrot.slane %v30, %v38
  %v42 = vmul.f32 %v14, %v35
  %v43 = vmul.f32 %v15, %v39
  %v44 = vmul.f32 %v16, %v35
  %v45 = vmul.f32 %v17, %v39
  %v46 = vmul.f32 %v18, %v35
  %v47 = vmul.f32 %v19, %v39
  %v48 = vmul.f32 %v20, %v35
  %v49 = vmul.f32 %v21, %v39
  %v50 = vmul.f32 %v22, %v35
  %v51 = vmul.f32 %v23, %v39
  %v52 = vmul.f32 %v24, %v35
  %v53 = vmul.f32 %v25, %v39
  %v54 = vmul.f32 %v26, %v35
  %v55 = vmul.f32 %v27, %v39
  %v56 = vmul.f32 %v28, %v35
  %v57 = vmul.f32 %v29, %v39
  %v58 = vld [vmem:[%s2] sm:$0x3]
  %v60 = vlaneseq
  %v61 = vshrl.u32 %v60, 7
  %v62 = vsub.s32 0, %v61
  %v63 = vrot.slane %v58, %v62
  %v64 = vlaneseq
  %v65 = vshrl.u32 %v64, 7
  %v66 = vsub.s32 1, %v65
  %v67 = vrot.slane %v58, %v66
  %v70 = vadd.f32 %v42, %v63
  %v71 = vadd.f32 %v43, %v67
  %v72 = vadd.f32 %v44, %v63
  %v73 = vadd.f32 %v45, %v67
  %v74 = vadd.f32 %v46, %v63
  %v75 = vadd.f32 %v47, %v67
  %v76 = vadd.f32 %v48, %v63
  %v77 = vadd.f32 %v49, %v67
  %v78 = vadd.f32 %v50, %v63
  %v79 = vadd.f32 %v51, %v67
  %v80 = vadd.f32 %v52, %v63
  %v81 = vadd.f32 %v53, %v67
  %v82 = vadd.f32 %v54, %v63
  %v83 = vadd.f32 %v55, %v67
  %v84 = vadd.f32 %v56, %v63
  %v85 = vadd.f32 %v57, %v67
  %v86 = vmax.f32 %v70, 0.0
  %v87 = vmax.f32 %v71, 0.0
  %v88 = vmax.f32 %v72, 0.0
  %v89 = vmax.f32 %v73, 0.0
  %v90 = vmax.f32 %v74, 0.0
  %v91 = vmax.f32 %v75, 0.0
  %v92 = vmax.f32 %v76, 0.0
  %v93 = vmax.f32 %v77, 0.0
  %v94 = vmax.f32 %v78, 0.0
  %v95 = vmax.f32 %v79, 0.0
  %v96 = vmax.f32 %v80, 0.0
  %v97 = vmax.f32 %v81, 0.0
  %v98 = vmax.f32 %v82, 0.0
  %v99 = vmax.f32 %v83, 0.0
  %v100 = vmax.f32 %v84, 0.0
  %v101 = vmax.f32 %v85, 0.0
  %102 = vst [vmem:[%s3] sm:$0xff] %v86
  %103 = vst [vmem:[%s3 + $0x8] sm:$0xff] %v87
  %104 = vst [vmem:[%s3 + $0x10] sm:$0xff] %v88
  %105 = vst [vmem:[%s3 + $0x18] sm:$0xff] %v89
  %106 = vst [vmem:[%s3 + $0x20] sm:$0xff] %v90
  %107 = vst [vmem:[%s3 + $0x28] sm:$0xff] %v91
  %108 = vst [vmem:[%s3 + $0x30] sm:$0xff] %v92
  %109 = vst [vmem:[%s3 + $0x38] sm:$0xff] %v93
  %110 = vst [vmem:[%s3 + $0x40] sm:$0xff] %v94
  %111 = vst [vmem:[%s3 + $0x48] sm:$0xff] %v95
  %112 = vst [vmem:[%s3 + $0x50] sm:$0xff] %v96
  %113 = vst [vmem:[%s3 + $0x58] sm:$0xff] %v97
  %114 = vst [vmem:[%s3 + $0x60] sm:$0xff] %v98
  %115 = vst [vmem:[%s3 + $0x68] sm:$0xff] %v99
  %116 = vst [vmem:[%s3 + $0x70] sm:$0xff] %v100
  %117 = vst [vmem:[%s3 + $0x78] sm:$0xff] %v101
  // Predicated region
  $region14: #{generator_forward.25} parent=0 // pred_check
    _
  $region15: #{generator_forward.25} parent=0 // pred_check_branch
    %119 = sbr.rel (0) target = $region17
  $region16: #{generator_forward.25} parent=0 // pred_region
    _
  $region17: #{generator_forward.25} parent=0 // pred_fallthru
    _
  // Predicated region
  $region18: #{generator_forward.25} parent=0 // pred_check
    _
  $region19: #{generator_forward.25} parent=0 // pred_check_branch
    %121 = sbr.rel (0) target = $region21
  $region20: #{generator_forward.25} parent=0 // pred_region
    _
  $region21: #{generator_forward.25} parent=0 // pred_fallthru
    _

// kernel: generator_forward.26
$region0: #{generator_forward.26}
  #allocation0 [shape = 'u32[]', space=smem, size = 0x4, offset = 0x4, fixed_abs, tag = 'smem constant byte address 0x4 - core index']
  #allocation1 [shape = 'u32[144,128]{1,0:T(1,128)}', space=vmem, size = 0x12000, scoped, tag = 'internal scratch']
  %s0 = inlined_call_operand.vmem [shape: bf16[2048,8], index: 0, kind: input, shape index: {}]
  %s1 = inlined_call_operand.vmem [shape: bf16[8,128], index: 1, kind: input, shape index: {}]
  %s2 = inlined_call_operand.vmem [shape: f32[2048,128], index: 2, kind: output, shape index: {}]
  %s3 = sld [smem:[#allocation0]]
  $region18: #{generator_forward.26} parent=0
    _
  %s5 = ssub.s32 1, %s3
  %s6 = scalar_select 0, %s5, %s3
  // Predicated region
  $region2: #{generator_forward.26} parent=0 // pred_check
    _
  $region3: #{generator_forward.26} parent=0 // pred_check_branch
    %8 = sbr.rel (0) target = $region5
  $region4: #{generator_forward.26} parent=0 // pred_region
    _
  $region5: #{generator_forward.26} parent=0 // pred_fallthru
    _
  // Predicated region
  $region6: #{generator_forward.26} parent=0 // pred_check
    _
  $region7: #{generator_forward.26} parent=0 // pred_check_branch
    %10 = sbr.rel (0) target = $region9
  $region8: #{generator_forward.26} parent=0 // pred_region
    _
  $region9: #{generator_forward.26} parent=0 // pred_fallthru
    _
  %v12 = vld [vmem:[%s0] sm:$0xf]
  %v13 = vld [vmem:[%s0 + $0x4] sm:$0xf]
  %v14 = vld [vmem:[%s0 + $0x8] sm:$0xf]
  %v15 = vld [vmem:[%s0 + $0xc] sm:$0xf]
  %v16 = vld [vmem:[%s0 + $0x10] sm:$0xf]
  %v17 = vld [vmem:[%s0 + $0x14] sm:$0xf]
  %v18 = vld [vmem:[%s0 + $0x18] sm:$0xf]
  %v19 = vld [vmem:[%s0 + $0x1c] sm:$0xf]
  %v20 = vld [vmem:[%s0 + $0x20] sm:$0xf]
  %v21 = vld [vmem:[%s0 + $0x24] sm:$0xf]
  %v22 = vld [vmem:[%s0 + $0x28] sm:$0xf]
  %v23 = vld [vmem:[%s0 + $0x2c] sm:$0xf]
  %v24 = vld [vmem:[%s0 + $0x30] sm:$0xf]
  %v25 = vld [vmem:[%s0 + $0x34] sm:$0xf]
  %v26 = vld [vmem:[%s0 + $0x38] sm:$0xf]
  %v27 = vld [vmem:[%s0 + $0x3c] sm:$0xf]
  %v28 = vld [vmem:[%s0 + $0x40] sm:$0xf]
  %v29 = vld [vmem:[%s0 + $0x44] sm:$0xf]
  %v30 = vld [vmem:[%s0 + $0x48] sm:$0xf]
  %v31 = vld [vmem:[%s0 + $0x4c] sm:$0xf]
  %v32 = vld [vmem:[%s0 + $0x50] sm:$0xf]
  %v33 = vld [vmem:[%s0 + $0x54] sm:$0xf]
  %v34 = vld [vmem:[%s0 + $0x58] sm:$0xf]
  %v35 = vld [vmem:[%s0 + $0x5c] sm:$0xf]
  %v36 = vld [vmem:[%s0 + $0x60] sm:$0xf]
  %v37 = vld [vmem:[%s0 + $0x64] sm:$0xf]
  %v38 = vld [vmem:[%s0 + $0x68] sm:$0xf]
  %v39 = vld [vmem:[%s0 + $0x6c] sm:$0xf]
  %v40 = vld [vmem:[%s0 + $0x70] sm:$0xf]
  %v41 = vld [vmem:[%s0 + $0x74] sm:$0xf]
  %v42 = vld [vmem:[%s0 + $0x78] sm:$0xf]
  %v43 = vld [vmem:[%s0 + $0x7c] sm:$0xf]
  %v44 = vld [vmem:[%s0 + $0x80] sm:$0xf]
  %v45 = vld [vmem:[%s0 + $0x84] sm:$0xf]
  %v46 = vld [vmem:[%s0 + $0x88] sm:$0xf]
  %v47 = vld [vmem:[%s0 + $0x8c] sm:$0xf]
  %v48 = vld [vmem:[%s0 + $0x90] sm:$0xf]
  %v49 = vld [vmem:[%s0 + $0x94] sm:$0xf]
  %v50 = vld [vmem:[%s0 + $0x98] sm:$0xf]
  %v51 = vld [vmem:[%s0 + $0x9c] sm:$0xf]
  %v52 = vld [vmem:[%s0 + $0xa0] sm:$0xf]
  %v53 = vld [vmem:[%s0 + $0xa4] sm:$0xf]
  %v54 = vld [vmem:[%s0 + $0xa8] sm:$0xf]
  %v55 = vld [vmem:[%s0 + $0xac] sm:$0xf]
  %v56 = vld [vmem:[%s0 + $0xb0] sm:$0xf]
  %v57 = vld [vmem:[%s0 + $0xb4] sm:$0xf]
  %v58 = vld [vmem:[%s0 + $0xb8] sm:$0xf]
  %v59 = vld [vmem:[%s0 + $0xbc] sm:$0xf]
  %v60 = vld [vmem:[%s0 + $0xc0] sm:$0xf]
  %v61 = vld [vmem:[%s0 + $0xc4] sm:$0xf]
  %v62 = vld [vmem:[%s0 + $0xc8] sm:$0xf]
  %v63 = vld [vmem:[%s0 + $0xcc] sm:$0xf]
  %v64 = vld [vmem:[%s0 + $0xd0] sm:$0xf]
  %v65 = vld [vmem:[%s0 + $0xd4] sm:$0xf]
  %v66 = vld [vmem:[%s0 + $0xd8] sm:$0xf]
  %v67 = vld [vmem:[%s0 + $0xdc] sm:$0xf]
  %v68 = vld [vmem:[%s0 + $0xe0] sm:$0xf]
  %v69 = vld [vmem:[%s0 + $0xe4] sm:$0xf]
  %v70 = vld [vmem:[%s0 + $0xe8] sm:$0xf]
  %v71 = vld [vmem:[%s0 + $0xec] sm:$0xf]
  %v72 = vld [vmem:[%s0 + $0xf0] sm:$0xf]
  %v73 = vld [vmem:[%s0 + $0xf4] sm:$0xf]
  %v74 = vld [vmem:[%s0 + $0xf8] sm:$0xf]
  %v75 = vld [vmem:[%s0 + $0xfc] sm:$0xf]
  %v76 = vld [vmem:[%s0 + $0x100] sm:$0xf]
  %v77 = vld [vmem:[%s0 + $0x104] sm:$0xf]
  %v78 = vld [vmem:[%s0 + $0x108] sm:$0xf]
  %v79 = vld [vmem:[%s0 + $0x10c] sm:$0xf]
  %v80 = vld [vmem:[%s0 + $0x110] sm:$0xf]
  %v81 = vld [vmem:[%s0 + $0x114] sm:$0xf]
  %v82 = vld [vmem:[%s0 + $0x118] sm:$0xf]
  %v83 = vld [vmem:[%s0 + $0x11c] sm:$0xf]
  %v84 = vld [vmem:[%s0 + $0x120] sm:$0xf]
  %v85 = vld [vmem:[%s0 + $0x124] sm:$0xf]
  %v86 = vld [vmem:[%s0 + $0x128] sm:$0xf]
  %v87 = vld [vmem:[%s0 + $0x12c] sm:$0xf]
  %v88 = vld [vmem:[%s0 + $0x130] sm:$0xf]
  %v89 = vld [vmem:[%s0 + $0x134] sm:$0xf]
  %v90 = vld [vmem:[%s0 + $0x138] sm:$0xf]
  %v91 = vld [vmem:[%s0 + $0x13c] sm:$0xf]
  %v92 = vld [vmem:[%s0 + $0x140] sm:$0xf]
  %v93 = vld [vmem:[%s0 + $0x144] sm:$0xf]
  %v94 = vld [vmem:[%s0 + $0x148] sm:$0xf]
  %v95 = vld [vmem:[%s0 + $0x14c] sm:$0xf]
  %v96 = vld [vmem:[%s0 + $0x150] sm:$0xf]
  %v97 = vld [vmem:[%s0 + $0x154] sm:$0xf]
  %v98 = vld [vmem:[%s0 + $0x158] sm:$0xf]
  %v99 = vld [vmem:[%s0 + $0x15c] sm:$0xf]
  %v100 = vld [vmem:[%s0 + $0x160] sm:$0xf]
  %v101 = vld [vmem:[%s0 + $0x164] sm:$0xf]
  %v102 = vld [vmem:[%s0 + $0x168] sm:$0xf]
  %v103 = vld [vmem:[%s0 + $0x16c] sm:$0xf]
  %v104 = vld [vmem:[%s0 + $0x170] sm:$0xf]
  %v105 = vld [vmem:[%s0 + $0x174] sm:$0xf]
  %v106 = vld [vmem:[%s0 + $0x178] sm:$0xf]
  %v107 = vld [vmem:[%s0 + $0x17c] sm:$0xf]
  %v108 = vld [vmem:[%s0 + $0x180] sm:$0xf]
  %v109 = vld [vmem:[%s0 + $0x184] sm:$0xf]
  %v110 = vld [vmem:[%s0 + $0x188] sm:$0xf]
  %v111 = vld [vmem:[%s0 + $0x18c] sm:$0xf]
  %v112 = vld [vmem:[%s0 + $0x190] sm:$0xf]
  %v113 = vld [vmem:[%s0 + $0x194] sm:$0xf]
  %v114 = vld [vmem:[%s0 + $0x198] sm:$0xf]
  %v115 = vld [vmem:[%s0 + $0x19c] sm:$0xf]
  %v116 = vld [vmem:[%s0 + $0x1a0] sm:$0xf]
  %v117 = vld [vmem:[%s0 + $0x1a4] sm:$0xf]
  %v118 = vld [vmem:[%s0 + $0x1a8] sm:$0xf]
  %v119 = vld [vmem:[%s0 + $0x1ac] sm:$0xf]
  %v120 = vld [vmem:[%s0 + $0x1b0] sm:$0xf]
  %v121 = vld [vmem:[%s0 + $0x1b4] sm:$0xf]
  %v122 = vld [vmem:[%s0 + $0x1b8] sm:$0xf]
  %v123 = vld [vmem:[%s0 + $0x1bc] sm:$0xf]
  %v124 = vld [vmem:[%s0 + $0x1c0] sm:$0xf]
  %v125 = vld [vmem:[%s0 + $0x1c4] sm:$0xf]
  %v126 = vld [vmem:[%s0 + $0x1c8] sm:$0xf]
  %v127 = vld [vmem:[%s0 + $0x1cc] sm:$0xf]
  %v128 = vld [vmem:[%s0 + $0x1d0] sm:$0xf]
  %v129 = vld [vmem:[%s0 + $0x1d4] sm:$0xf]
  %v130 = vld [vmem:[%s0 + $0x1d8] sm:$0xf]
  %v131 = vld [vmem:[%s0 + $0x1dc] sm:$0xf]
  %v132 = vld [vmem:[%s0 + $0x1e0] sm:$0xf]
  %v133 = vld [vmem:[%s0 + $0x1e4] sm:$0xf]
  %v134 = vld [vmem:[%s0 + $0x1e8] sm:$0xf]
  %v135 = vld [vmem:[%s0 + $0x1ec] sm:$0xf]
  %v136 = vld [vmem:[%s0 + $0x1f0] sm:$0xf]
  %v137 = vld [vmem:[%s0 + $0x1f4] sm:$0xf]
  %v138 = vld [vmem:[%s0 + $0x1f8] sm:$0xf]
  %v139 = vld [vmem:[%s0 + $0x1fc] sm:$0xf]
  %v140 = vld [vmem:[%s0 + $0x200] sm:$0xf]
  %v141 = vld [vmem:[%s0 + $0x204] sm:$0xf]
  %v142 = vld [vmem:[%s0 + $0x208] sm:$0xf]
  %v143 = vld [vmem:[%s0 + $0x20c] sm:$0xf]
  %v144 = vld [vmem:[%s0 + $0x210] sm:$0xf]
  %v145 = vld [vmem:[%s0 + $0x214] sm:$0xf]
  %v146 = vld [vmem:[%s0 + $0x218] sm:$0xf]
  %v147 = vld [vmem:[%s0 + $0x21c] sm:$0xf]
  %v148 = vld [vmem:[%s0 + $0x220] sm:$0xf]
  %v149 = vld [vmem:[%s0 + $0x224] sm:$0xf]
  %v150 = vld [vmem:[%s0 + $0x228] sm:$0xf]
  %v151 = vld [vmem:[%s0 + $0x22c] sm:$0xf]
  %v152 = vld [vmem:[%s0 + $0x230] sm:$0xf]
  %v153 = vld [vmem:[%s0 + $0x234] sm:$0xf]
  %v154 = vld [vmem:[%s0 + $0x238] sm:$0xf]
  %v155 = vld [vmem:[%s0 + $0x23c] sm:$0xf]
  %v156 = vld [vmem:[%s0 + $0x240] sm:$0xf]
  %v157 = vld [vmem:[%s0 + $0x244] sm:$0xf]
  %v158 = vld [vmem:[%s0 + $0x248] sm:$0xf]
  %v159 = vld [vmem:[%s0 + $0x24c] sm:$0xf]
  %v160 = vld [vmem:[%s0 + $0x250] sm:$0xf]
  %v161 = vld [vmem:[%s0 + $0x254] sm:$0xf]
  %v162 = vld [vmem:[%s0 + $0x258] sm:$0xf]
  %v163 = vld [vmem:[%s0 + $0x25c] sm:$0xf]
  %v164 = vld [vmem:[%s0 + $0x260] sm:$0xf]
  %v165 = vld [vmem:[%s0 + $0x264] sm:$0xf]
  %v166 = vld [vmem:[%s0 + $0x268] sm:$0xf]
  %v167 = vld [vmem:[%s0 + $0x26c] sm:$0xf]
  %v168 = vld [vmem:[%s0 + $0x270] sm:$0xf]
  %v169 = vld [vmem:[%s0 + $0x274] sm:$0xf]
  %v170 = vld [vmem:[%s0 + $0x278] sm:$0xf]
  %v171 = vld [vmem:[%s0 + $0x27c] sm:$0xf]
  %v172 = vld [vmem:[%s0 + $0x280] sm:$0xf]
  %v173 = vld [vmem:[%s0 + $0x284] sm:$0xf]
  %v174 = vld [vmem:[%s0 + $0x288] sm:$0xf]
  %v175 = vld [vmem:[%s0 + $0x28c] sm:$0xf]
  %v176 = vld [vmem:[%s0 + $0x290] sm:$0xf]
  %v177 = vld [vmem:[%s0 + $0x294] sm:$0xf]
  %v178 = vld [vmem:[%s0 + $0x298] sm:$0xf]
  %v179 = vld [vmem:[%s0 + $0x29c] sm:$0xf]
  %v180 = vld [vmem:[%s0 + $0x2a0] sm:$0xf]
  %v181 = vld [vmem:[%s0 + $0x2a4] sm:$0xf]
  %v182 = vld [vmem:[%s0 + $0x2a8] sm:$0xf]
  %v183 = vld [vmem:[%s0 + $0x2ac] sm:$0xf]
  %v184 = vld [vmem:[%s0 + $0x2b0] sm:$0xf]
  %v185 = vld [vmem:[%s0 + $0x2b4] sm:$0xf]
  %v186 = vld [vmem:[%s0 + $0x2b8] sm:$0xf]
  %v187 = vld [vmem:[%s0 + $0x2bc] sm:$0xf]
  %v188 = vld [vmem:[%s0 + $0x2c0] sm:$0xf]
  %v189 = vld [vmem:[%s0 + $0x2c4] sm:$0xf]
  %v190 = vld [vmem:[%s0 + $0x2c8] sm:$0xf]
  %v191 = vld [vmem:[%s0 + $0x2cc] sm:$0xf]
  %v192 = vld [vmem:[%s0 + $0x2d0] sm:$0xf]
  %v193 = vld [vmem:[%s0 + $0x2d4] sm:$0xf]
  %v194 = vld [vmem:[%s0 + $0x2d8] sm:$0xf]
  %v195 = vld [vmem:[%s0 + $0x2dc] sm:$0xf]
  %v196 = vld [vmem:[%s0 + $0x2e0] sm:$0xf]
  %v197 = vld [vmem:[%s0 + $0x2e4] sm:$0xf]
  %v198 = vld [vmem:[%s0 + $0x2e8] sm:$0xf]
  %v199 = vld [vmem:[%s0 + $0x2ec] sm:$0xf]
  %v200 = vld [vmem:[%s0 + $0x2f0] sm:$0xf]
  %v201 = vld [vmem:[%s0 + $0x2f4] sm:$0xf]
  %v202 = vld [vmem:[%s0 + $0x2f8] sm:$0xf]
  %v203 = vld [vmem:[%s0 + $0x2fc] sm:$0xf]
  %v204 = vld [vmem:[%s0 + $0x300] sm:$0xf]
  %v205 = vld [vmem:[%s0 + $0x304] sm:$0xf]
  %v206 = vld [vmem:[%s0 + $0x308] sm:$0xf]
  %v207 = vld [vmem:[%s0 + $0x30c] sm:$0xf]
  %v208 = vld [vmem:[%s0 + $0x310] sm:$0xf]
  %v209 = vld [vmem:[%s0 + $0x314] sm:$0xf]
  %v210 = vld [vmem:[%s0 + $0x318] sm:$0xf]
  %v211 = vld [vmem:[%s0 + $0x31c] sm:$0xf]
  %v212 = vld [vmem:[%s0 + $0x320] sm:$0xf]
  %v213 = vld [vmem:[%s0 + $0x324] sm:$0xf]
  %v214 = vld [vmem:[%s0 + $0x328] sm:$0xf]
  %v215 = vld [vmem:[%s0 + $0x32c] sm:$0xf]
  %v216 = vld [vmem:[%s0 + $0x330] sm:$0xf]
  %v217 = vld [vmem:[%s0 + $0x334] sm:$0xf]
  %v218 = vld [vmem:[%s0 + $0x338] sm:$0xf]
  %v219 = vld [vmem:[%s0 + $0x33c] sm:$0xf]
  %v220 = vld [vmem:[%s0 + $0x340] sm:$0xf]
  %v221 = vld [vmem:[%s0 + $0x344] sm:$0xf]
  %v222 = vld [vmem:[%s0 + $0x348] sm:$0xf]
  %v223 = vld [vmem:[%s0 + $0x34c] sm:$0xf]
  %v224 = vld [vmem:[%s0 + $0x350] sm:$0xf]
  %v225 = vld [vmem:[%s0 + $0x354] sm:$0xf]
  %v226 = vld [vmem:[%s0 + $0x358] sm:$0xf]
  %v227 = vld [vmem:[%s0 + $0x35c] sm:$0xf]
  %v228 = vld [vmem:[%s0 + $0x360] sm:$0xf]
  %v229 = vld [vmem:[%s0 + $0x364] sm:$0xf]
  %v230 = vld [vmem:[%s0 + $0x368] sm:$0xf]
  %v231 = vld [vmem:[%s0 + $0x36c] sm:$0xf]
  %v232 = vld [vmem:[%s0 + $0x370] sm:$0xf]
  %v233 = vld [vmem:[%s0 + $0x374] sm:$0xf]
  %v234 = vld [vmem:[%s0 + $0x378] sm:$0xf]
  %v235 = vld [vmem:[%s0 + $0x37c] sm:$0xf]
  %v236 = vld [vmem:[%s0 + $0x380] sm:$0xf]
  %v237 = vld [vmem:[%s0 + $0x384] sm:$0xf]
  %v238 = vld [vmem:[%s0 + $0x388] sm:$0xf]
  %v239 = vld [vmem:[%s0 + $0x38c] sm:$0xf]
  %v240 = vld [vmem:[%s0 + $0x390] sm:$0xf]
  %v241 = vld [vmem:[%s0 + $0x394] sm:$0xf]
  %v242 = vld [vmem:[%s0 + $0x398] sm:$0xf]
  %v243 = vld [vmem:[%s0 + $0x39c] sm:$0xf]
  %v244 = vld [vmem:[%s0 + $0x3a0] sm:$0xf]
  %v245 = vld [vmem:[%s0 + $0x3a4] sm:$0xf]
  %v246 = vld [vmem:[%s0 + $0x3a8] sm:$0xf]
  %v247 = vld [vmem:[%s0 + $0x3ac] sm:$0xf]
  %v248 = vld [vmem:[%s0 + $0x3b0] sm:$0xf]
  %v249 = vld [vmem:[%s0 + $0x3b4] sm:$0xf]
  %v250 = vld [vmem:[%s0 + $0x3b8] sm:$0xf]
  %v251 = vld [vmem:[%s0 + $0x3bc] sm:$0xf]
  %v252 = vld [vmem:[%s0 + $0x3c0] sm:$0xf]
  %v253 = vld [vmem:[%s0 + $0x3c4] sm:$0xf]
  %v254 = vld [vmem:[%s0 + $0x3c8] sm:$0xf]
  %v255 = vld [vmem:[%s0 + $0x3cc] sm:$0xf]
  %v256 = vld [vmem:[%s0 + $0x3d0] sm:$0xf]
  %v257 = vld [vmem:[%s0 + $0x3d4] sm:$0xf]
  %v258 = vld [vmem:[%s0 + $0x3d8] sm:$0xf]
  %v259 = vld [vmem:[%s0 + $0x3dc] sm:$0xf]
  %v260 = vld [vmem:[%s0 + $0x3e0] sm:$0xf]
  %v261 = vld [vmem:[%s0 + $0x3e4] sm:$0xf]
  %v262 = vld [vmem:[%s0 + $0x3e8] sm:$0xf]
  %v263 = vld [vmem:[%s0 + $0x3ec] sm:$0xf]
  %v264 = vld [vmem:[%s0 + $0x3f0] sm:$0xf]
  %v265 = vld [vmem:[%s0 + $0x3f4] sm:$0xf]
  %v266 = vld [vmem:[%s0 + $0x3f8] sm:$0xf]
  %v267 = vld [vmem:[%s0 + $0x3fc] sm:$0xf]
  %v268 = vld [vmem:[%s1] sm:$0xf]
  %v525 = vunpack.c.l.b16 %v12
  %v526 = vunpack.c.l.b16 %v13
  %v527 = vunpack.c.l.b16 %v14
  %v528 = vunpack.c.l.b16 %v15
  %v529 = vunpack.c.l.b16 %v16
  %v530 = vunpack.c.l.b16 %v17
  %v531 = vunpack.c.l.b16 %v18
  %v532 = vunpack.c.l.b16 %v19
  %v533 = vunpack.c.l.b16 %v20
  %v534 = vunpack.c.l.b16 %v21
  %v535 = vunpack.c.l.b16 %v22
  %v536 = vunpack.c.l.b16 %v23
  %v537 = vunpack.c.l.b16 %v24
  %v538 = vunpack.c.l.b16 %v25
  %v539 = vunpack.c.l.b16 %v26
  %v540 = vunpack.c.l.b16 %v27
  %v541 = vunpack.c.l.b16 %v28
  %v542 = vunpack.c.l.b16 %v29
  %v543 = vunpack.c.l.b16 %v30
  %v544 = vunpack.c.l.b16 %v31
  %v545 = vunpack.c.l.b16 %v32
  %v546 = vunpack.c.l.b16 %v33
  %v547 = vunpack.c.l.b16 %v34
  %v548 = vunpack.c.l.b16 %v35
  %v549 = vunpack.c.l.b16 %v36
  %v550 = vunpack.c.l.b16 %v37
  %v551 = vunpack.c.l.b16 %v38
  %v552 = vunpack.c.l.b16 %v39
  %v553 = vunpack.c.l.b16 %v40
  %v554 = vunpack.c.l.b16 %v41
  %v555 = vunpack.c.l.b16 %v42
  %v556 = vunpack.c.l.b16 %v43
  %v557 = vunpack.c.l.b16 %v44
  %v558 = vunpack.c.l.b16 %v45
  %v559 = vunpack.c.l.b16 %v46
  %v560 = vunpack.c.l.b16 %v47
  %v561 = vunpack.c.l.b16 %v48
  %v562 = vunpack.c.l.b16 %v49
  %v563 = vunpack.c.l.b16 %v50
  %v564 = vunpack.c.l.b16 %v51
  %v565 = vunpack.c.l.b16 %v52
  %v566 = vunpack.c.l.b16 %v53
  %v567 = vunpack.c.l.b16 %v54
  %v568 = vunpack.c.l.b16 %v55
  %v569 = vunpack.c.l.b16 %v56
  %v570 = vunpack.c.l.b16 %v57
  %v571 = vunpack.c.l.b16 %v58
  %v572 = vunpack.c.l.b16 %v59
  %v573 = vunpack.c.l.b16 %v60
  %v574 = vunpack.c.l.b16 %v61
  %v575 = vunpack.c.l.b16 %v62
  %v576 = vunpack.c.l.b16 %v63
  %v577 = vunpack.c.l.b16 %v64
  %v578 = vunpack.c.l.b16 %v65
  %v579 = vunpack.c.l.b16 %v66
  %v580 = vunpack.c.l.b16 %v67
  %v581 = vunpack.c.l.b16 %v68
  %v582 = vunpack.c.l.b16 %v69
  %v583 = vunpack.c.l.b16 %v70
  %v584 = vunpack.c.l.b16 %v71
  %v585 = vunpack.c.l.b16 %v72
  %v586 = vunpack.c.l.b16 %v73
  %v587 = vunpack.c.l.b16 %v74
  %v588 = vunpack.c.l.b16 %v75
  %v589 = vunpack.c.l.b16 %v76
  %v590 = vunpack.c.l.b16 %v77
  %v591 = vunpack.c.l.b16 %v78
  %v592 = vunpack.c.l.b16 %v79
  %v593 = vunpack.c.l.b16 %v80
  %v594 = vunpack.c.l.b16 %v81
  %v595 = vunpack.c.l.b16 %v82
  %v596 = vunpack.c.l.b16 %v83
  %v597 = vunpack.c.l.b16 %v84
  %v598 = vunpack.c.l.b16 %v85
  %v599 = vunpack.c.l.b16 %v86
  %v600 = vunpack.c.l.b16 %v87
  %v601 = vunpack.c.l.b16 %v88
  %v602 = vunpack.c.l.b16 %v89
  %v603 = vunpack.c.l.b16 %v90
  %v604 = vunpack.c.l.b16 %v91
  %v605 = vunpack.c.l.b16 %v92
  %v606 = vunpack.c.l.b16 %v93
  %v607 = vunpack.c.l.b16 %v94
  %v608 = vunpack.c.l.b16 %v95
  %v609 = vunpack.c.l.b16 %v96
  %v610 = vunpack.c.l.b16 %v97
  %v611 = vunpack.c.l.b16 %v98
  %v612 = vunpack.c.l.b16 %v99
  %v613 = vunpack.c.l.b16 %v100
  %v614 = vunpack.c.l.b16 %v101
  %v615 = vunpack.c.l.b16 %v102
  %v616 = vunpack.c.l.b16 %v103
  %v617 = vunpack.c.l.b16 %v104
  %v618 = vunpack.c.l.b16 %v105
  %v619 = vunpack.c.l.b16 %v106
  %v620 = vunpack.c.l.b16 %v107
  %v621 = vunpack.c.l.b16 %v108
  %v622 = vunpack.c.l.b16 %v109
  %v623 = vunpack.c.l.b16 %v110
  %v624 = vunpack.c.l.b16 %v111
  %v625 = vunpack.c.l.b16 %v112
  %v626 = vunpack.c.l.b16 %v113
  %v627 = vunpack.c.l.b16 %v114
  %v628 = vunpack.c.l.b16 %v115
  %v629 = vunpack.c.l.b16 %v116
  %v630 = vunpack.c.l.b16 %v117
  %v631 = vunpack.c.l.b16 %v118
  %v632 = vunpack.c.l.b16 %v119
  %v633 = vunpack.c.l.b16 %v120
  %v634 = vunpack.c.l.b16 %v121
  %v635 = vunpack.c.l.b16 %v122
  %v636 = vunpack.c.l.b16 %v123
  %v637 = vunpack.c.l.b16 %v124
  %v638 = vunpack.c.l.b16 %v125
  %v639 = vunpack.c.l.b16 %v126
  %v640 = vunpack.c.l.b16 %v127
  %v641 = vunpack.c.l.b16 %v128
  %v642 = vunpack.c.l.b16 %v129
  %v643 = vunpack.c.l.b16 %v130
  %v644 = vunpack.c.l.b16 %v131
  %v645 = vunpack.c.l.b16 %v132
  %v646 = vunpack.c.l.b16 %v133
  %v647 = vunpack.c.l.b16 %v134
  %v648 = vunpack.c.l.b16 %v135
  %v649 = vunpack.c.l.b16 %v136
  %v650 = vunpack.c.l.b16 %v137
  %v651 = vunpack.c.l.b16 %v138
  %v652 = vunpack.c.l.b16 %v139
  %v653 = vunpack.c.l.b16 %v140
  %v654 = vunpack.c.l.b16 %v141
  %v655 = vunpack.c.l.b16 %v142
  %v656 = vunpack.c.l.b16 %v143
  %v657 = vunpack.c.l.b16 %v144
  %v658 = vunpack.c.l.b16 %v145
  %v659 = vunpack.c.l.b16 %v146
  %v660 = vunpack.c.l.b16 %v147
  %v661 = vunpack.c.l.b16 %v148
  %v662 = vunpack.c.l.b16 %v149
  %v663 = vunpack.c.l.b16 %v150
  %v664 = vunpack.c.l.b16 %v151
  %v665 = vunpack.c.l.b16 %v152
  %v666 = vunpack.c.l.b16 %v153
  %v667 = vunpack.c.l.b16 %v154
  %v668 = vunpack.c.l.b16 %v155
  %v669 = vunpack.c.l.b16 %v156
  %v670 = vunpack.c.l.b16 %v157
  %v671 = vunpack.c.l.b16 %v158
  %v672 = vunpack.c.l.b16 %v159
  %v673 = vunpack.c.l.b16 %v160
  %v674 = vunpack.c.l.b16 %v161
  %v675 = vunpack.c.l.b16 %v162
  %v676 = vunpack.c.l.b16 %v163
  %v677 = vunpack.c.l.b16 %v164
  %v678 = vunpack.c.l.b16 %v165
  %v679 = vunpack.c.l.b16 %v166
  %v680 = vunpack.c.l.b16 %v167
  %v681 = vunpack.c.l.b16 %v168
  %v682 = vunpack.c.l.b16 %v169
  %v683 = vunpack.c.l.b16 %v170
  %v684 = vunpack.c.l.b16 %v171
  %v685 = vunpack.c.l.b16 %v172
  %v686 = vunpack.c.l.b16 %v173
  %v687 = vunpack.c.l.b16 %v174
  %v688 = vunpack.c.l.b16 %v175
  %v689 = vunpack.c.l.b16 %v176
  %v690 = vunpack.c.l.b16 %v177
  %v691 = vunpack.c.l.b16 %v178
  %v692 = vunpack.c.l.b16 %v179
  %v693 = vunpack.c.l.b16 %v180
  %v694 = vunpack.c.l.b16 %v181
  %v695 = vunpack.c.l.b16 %v182
  %v696 = vunpack.c.l.b16 %v183
  %v697 = vunpack.c.l.b16 %v184
  %v698 = vunpack.c.l.b16 %v185
  %v699 = vunpack.c.l.b16 %v186
  %v700 = vunpack.c.l.b16 %v187
  %v701 = vunpack.c.l.b16 %v188
  %v702 = vunpack.c.l.b16 %v189
  %v703 = vunpack.c.l.b16 %v190
  %v704 = vunpack.c.l.b16 %v191
  %v705 = vunpack.c.l.b16 %v192
  %v706 = vunpack.c.l.b16 %v193
  %v707 = vunpack.c.l.b16 %v194
  %v708 = vunpack.c.l.b16 %v195
  %v709 = vunpack.c.l.b16 %v196
  %v710 = vunpack.c.l.b16 %v197
  %v711 = vunpack.c.l.b16 %v198
  %v712 = vunpack.c.l.b16 %v199
  %v713 = vunpack.c.l.b16 %v200
  %v714 = vunpack.c.l.b16 %v201
  %v715 = vunpack.c.l.b16 %v202
  %v716 = vunpack.c.l.b16 %v203
  %v717 = vunpack.c.l.b16 %v204
  %v718 = vunpack.c.l.b16 %v205
  %v719 = vunpack.c.l.b16 %v206
  %v720 = vunpack.c.l.b16 %v207
  %v721 = vunpack.c.l.b16 %v208
  %v722 = vunpack.c.l.b16 %v209
  %v723 = vunpack.c.l.b16 %v210
  %v724 = vunpack.c.l.b16 %v211
  %v725 = vunpack.c.l.b16 %v212
  %v726 = vunpack.c.l.b16 %v213
  %v727 = vunpack.c.l.b16 %v214
  %v728 = vunpack.c.l.b16 %v215
  %v729 = vunpack.c.l.b16 %v216
  %v730 = vunpack.c.l.b16 %v217
  %v731 = vunpack.c.l.b16 %v218
  %v732 = vunpack.c.l.b16 %v219
  %v733 = vunpack.c.l.b16 %v220
  %v734 = vunpack.c.l.b16 %v221
  %v735 = vunpack.c.l.b16 %v222
  %v736 = vunpack.c.l.b16 %v223
  %v737 = vunpack.c.l.b16 %v224
  %v738 = vunpack.c.l.b16 %v225
  %v739 = vunpack.c.l.b16 %v226
  %v740 = vunpack.c.l.b16 %v227
  %v741 = vunpack.c.l.b16 %v228
  %v742 = vunpack.c.l.b16 %v229
  %v743 = vunpack.c.l.b16 %v230
  %v744 = vunpack.c.l.b16 %v231
  %v745 = vunpack.c.l.b16 %v232
  %v746 = vunpack.c.l.b16 %v233
  %v747 = vunpack.c.l.b16 %v234
  %v748 = vunpack.c.l.b16 %v235
  %v749 = vunpack.c.l.b16 %v236
  %v750 = vunpack.c.l.b16 %v237
  %v751 = vunpack.c.l.b16 %v238
  %v752 = vunpack.c.l.b16 %v239
  %v753 = vunpack.c.l.b16 %v240
  %v754 = vunpack.c.l.b16 %v241
  %v755 = vunpack.c.l.b16 %v242
  %v756 = vunpack.c.l.b16 %v243
  %v757 = vunpack.c.l.b16 %v244
  %v758 = vunpack.c.l.b16 %v245
  %v759 = vunpack.c.l.b16 %v246
  %v760 = vunpack.c.l.b16 %v247
  %v761 = vunpack.c.l.b16 %v248
  %v762 = vunpack.c.l.b16 %v249
  %v763 = vunpack.c.l.b16 %v250
  %v764 = vunpack.c.l.b16 %v251
  %v765 = vunpack.c.l.b16 %v252
  %v766 = vunpack.c.l.b16 %v253
  %v767 = vunpack.c.l.b16 %v254
  %v768 = vunpack.c.l.b16 %v255
  %v769 = vunpack.c.l.b16 %v256
  %v770 = vunpack.c.l.b16 %v257
  %v771 = vunpack.c.l.b16 %v258
  %v772 = vunpack.c.l.b16 %v259
  %v773 = vunpack.c.l.b16 %v260
  %v774 = vunpack.c.l.b16 %v261
  %v775 = vunpack.c.l.b16 %v262
  %v776 = vunpack.c.l.b16 %v263
  %v777 = vunpack.c.l.b16 %v264
  %v778 = vunpack.c.l.b16 %v265
  %v779 = vunpack.c.l.b16 %v266
  %v780 = vunpack.c.l.b16 %v267
  %v781 = vpack.c.b16 %v526, %v525
  %v782 = vpack.c.b16 %v528, %v527
  %v783 = vpack.c.b16 %v530, %v529
  %v784 = vpack.c.b16 %v532, %v531
  %v785 = vpack.c.b16 %v534, %v533
  %v786 = vpack.c.b16 %v536, %v535
  %v787 = vpack.c.b16 %v538, %v537
  %v788 = vpack.c.b16 %v540, %v539
  %v789 = vpack.c.b16 %v542, %v541
  %v790 = vpack.c.b16 %v544, %v543
  %v791 = vpack.c.b16 %v546, %v545
  %v792 = vpack.c.b16 %v548, %v547
  %v793 = vpack.c.b16 %v550, %v549
  %v794 = vpack.c.b16 %v552, %v551
  %v795 = vpack.c.b16 %v554, %v553
  %v796 = vpack.c.b16 %v556, %v555
  %v797 = vpack.c.b16 %v558, %v557
  %v798 = vpack.c.b16 %v560, %v559
  %v799 = vpack.c.b16 %v562, %v561
  %v800 = vpack.c.b16 %v564, %v563
  %v801 = vpack.c.b16 %v566, %v565
  %v802 = vpack.c.b16 %v568, %v567
  %v803 = vpack.c.b16 %v570, %v569
  %v804 = vpack.c.b16 %v572, %v571
  %v805 = vpack.c.b16 %v574, %v573
  %v806 = vpack.c.b16 %v576, %v575
  %v807 = vpack.c.b16 %v578, %v577
  %v808 = vpack.c.b16 %v580, %v579
  %v809 = vpack.c.b16 %v582, %v581
  %v810 = vpack.c.b16 %v584, %v583
  %v811 = vpack.c.b16 %v586, %v585
  %v812 = vpack.c.b16 %v588, %v587
  %v813 = vpack.c.b16 %v590, %v589
  %v814 = vpack.c.b16 %v592, %v591
  %v815 = vpack.c.b16 %v594, %v593
  %v816 = vpack.c.b16 %v596, %v595
  %v817 = vpack.c.b16 %v598, %v597
  %v818 = vpack.c.b16 %v600, %v599
  %v819 = vpack.c.b16 %v602, %v601
  %v820 = vpack.c.b16 %v604, %v603
  %v821 = vpack.c.b16 %v606, %v605
  %v822 = vpack.c.b16 %v608, %v607
  %v823 = vpack.c.b16 %v610, %v609
  %v824 = vpack.c.b16 %v612, %v611
  %v825 = vpack.c.b16 %v614, %v613
  %v826 = vpack.c.b16 %v616, %v615
  %v827 = vpack.c.b16 %v618, %v617
  %v828 = vpack.c.b16 %v620, %v619
  %v829 = vpack.c.b16 %v622, %v621
  %v830 = vpack.c.b16 %v624, %v623
  %v831 = vpack.c.b16 %v626, %v625
  %v832 = vpack.c.b16 %v628, %v627
  %v833 = vpack.c.b16 %v630, %v629
  %v834 = vpack.c.b16 %v632, %v631
  %v835 = vpack.c.b16 %v634, %v633
  %v836 = vpack.c.b16 %v636, %v635
  %v837 = vpack.c.b16 %v638, %v637
  %v838 = vpack.c.b16 %v640, %v639
  %v839 = vpack.c.b16 %v642, %v641
  %v840 = vpack.c.b16 %v644, %v643
  %v841 = vpack.c.b16 %v646, %v645
  %v842 = vpack.c.b16 %v648, %v647
  %v843 = vpack.c.b16 %v650, %v649
  %v844 = vpack.c.b16 %v652, %v651
  %v845 = vpack.c.b16 %v654, %v653
  %v846 = vpack.c.b16 %v656, %v655
  %v847 = vpack.c.b16 %v658, %v657
  %v848 = vpack.c.b16 %v660, %v659
  %v849 = vpack.c.b16 %v662, %v661
  %v850 = vpack.c.b16 %v664, %v663
  %v851 = vpack.c.b16 %v666, %v665
  %v852 = vpack.c.b16 %v668, %v667
  %v853 = vpack.c.b16 %v670, %v669
  %v854 = vpack.c.b16 %v672, %v671
  %v855 = vpack.c.b16 %v674, %v673
  %v856 = vpack.c.b16 %v676, %v675
  %v857 = vpack.c.b16 %v678, %v677
  %v858 = vpack.c.b16 %v680, %v679
  %v859 = vpack.c.b16 %v682, %v681
  %v860 = vpack.c.b16 %v684, %v683
  %v861 = vpack.c.b16 %v686, %v685
  %v862 = vpack.c.b16 %v688, %v687
  %v863 = vpack.c.b16 %v690, %v689
  %v864 = vpack.c.b16 %v692, %v691
  %v865 = vpack.c.b16 %v694, %v693
  %v866 = vpack.c.b16 %v696, %v695
  %v867 = vpack.c.b16 %v698, %v697
  %v868 = vpack.c.b16 %v700, %v699
  %v869 = vpack.c.b16 %v702, %v701
  %v870 = vpack.c.b16 %v704, %v703
  %v871 = vpack.c.b16 %v706, %v705
  %v872 = vpack.c.b16 %v708, %v707
  %v873 = vpack.c.b16 %v710, %v709
  %v874 = vpack.c.b16 %v712, %v711
  %v875 = vpack.c.b16 %v714, %v713
  %v876 = vpack.c.b16 %v716, %v715
  %v877 = vpack.c.b16 %v718, %v717
  %v878 = vpack.c.b16 %v720, %v719
  %v879 = vpack.c.b16 %v722, %v721
  %v880 = vpack.c.b16 %v724, %v723
  %v881 = vpack.c.b16 %v726, %v725
  %v882 = vpack.c.b16 %v728, %v727
  %v883 = vpack.c.b16 %v730, %v729
  %v884 = vpack.c.b16 %v732, %v731
  %v885 = vpack.c.b16 %v734, %v733
  %v886 = vpack.c.b16 %v736, %v735
  %v887 = vpack.c.b16 %v738, %v737
  %v888 = vpack.c.b16 %v740, %v739
  %v889 = vpack.c.b16 %v742, %v741
  %v890 = vpack.c.b16 %v744, %v743
  %v891 = vpack.c.b16 %v746, %v745
  %v892 = vpack.c.b16 %v748, %v747
  %v893 = vpack.c.b16 %v750, %v749
  %v894 = vpack.c.b16 %v752, %v751
  %v895 = vpack.c.b16 %v754, %v753
  %v896 = vpack.c.b16 %v756, %v755
  %v897 = vpack.c.b16 %v758, %v757
  %v898 = vpack.c.b16 %v760, %v759
  %v899 = vpack.c.b16 %v762, %v761
  %v900 = vpack.c.b16 %v764, %v763
  %v901 = vpack.c.b16 %v766, %v765
  %v902 = vpack.c.b16 %v768, %v767
  %v903 = vpack.c.b16 %v770, %v769
  %v904 = vpack.c.b16 %v772, %v771
  %v905 = vpack.c.b16 %v774, %v773
  %v906 = vpack.c.b16 %v776, %v775
  %v907 = vpack.c.b16 %v778, %v777
  %v908 = vpack.c.b16 %v780, %v779
  %vm909 = vcmask 64512
  %v911 = vsel %vm909, %v781, 0
  %v914 = vsel %vm909, %v782, 0
  %v917 = vsel %vm909, %v783, 0
  %v920 = vsel %vm909, %v784, 0
  %v923 = vsel %vm909, %v785, 0
  %v926 = vsel %vm909, %v786, 0
  %v929 = vsel %vm909, %v787, 0
  %v932 = vsel %vm909, %v788, 0
  %v935 = vsel %vm909, %v789, 0
  %v938 = vsel %vm909, %v790, 0
  %v941 = vsel %vm909, %v791, 0
  %v944 = vsel %vm909, %v792, 0
  %v947 = vsel %vm909, %v793, 0
  %v950 = vsel %vm909, %v794, 0
  %v953 = vsel %vm909, %v795, 0
  %v956 = vsel %vm909, %v796, 0
  %v959 = vsel %vm909, %v797, 0
  %v962 = vsel %vm909, %v798, 0
  %v965 = vsel %vm909, %v799, 0
  %v968 = vsel %vm909, %v800, 0
  %v971 = vsel %vm909, %v801, 0
  %v974 = vsel %vm909, %v802, 0
  %v977 = vsel %vm909, %v803, 0
  %v980 = vsel %vm909, %v804, 0
  %v983 = vsel %vm909, %v805, 0
  %v986 = vsel %vm909, %v806, 0
  %v989 = vsel %vm909, %v807, 0
  %v992 = vsel %vm909, %v808, 0
  %v995 = vsel %vm909, %v809, 0
  %v998 = vsel %vm909, %v810, 0
  %v1001 = vsel %vm909, %v811, 0
  %v1004 = vsel %vm909, %v812, 0
  %v1007 = vsel %vm909, %v813, 0
  %v1010 = vsel %vm909, %v814, 0
  %v1013 = vsel %vm909, %v815, 0
  %v1016 = vsel %vm909, %v816, 0
  %v1019 = vsel %vm909, %v817, 0
  %v1022 = vsel %vm909, %v818, 0
  %v1025 = vsel %vm909, %v819, 0
  %v1028 = vsel %vm909, %v820, 0
  %v1031 = vsel %vm909, %v821, 0
  %v1034 = vsel %vm909, %v822, 0
  %v1037 = vsel %vm909, %v823, 0
  %v1040 = vsel %vm909, %v824, 0
  %v1043 = vsel %vm909, %v825, 0
  %v1046 = vsel %vm909, %v826, 0
  %v1049 = vsel %vm909, %v827, 0
  %v1052 = vsel %vm909, %v828, 0
  %v1055 = vsel %vm909, %v829, 0
  %v1058 = vsel %vm909, %v830, 0
  %v1061 = vsel %vm909, %v831, 0
  %v1064 = vsel %vm909, %v832, 0
  %v1067 = vsel %vm909, %v833, 0
  %v1070 = vsel %vm909, %v834, 0
  %v1073 = vsel %vm909, %v835, 0
  %v1076 = vsel %vm909, %v836, 0
  %v1079 = vsel %vm909, %v837, 0
  %v1082 = vsel %vm909, %v838, 0
  %v1085 = vsel %vm909, %v839, 0
  %v1088 = vsel %vm909, %v840, 0
  %v1091 = vsel %vm909, %v841, 0
  %v1094 = vsel %vm909, %v842, 0
  %v1097 = vsel %vm909, %v843, 0
  %v1100 = vsel %vm909, %v844, 0
  %v1103 = vsel %vm909, %v845, 0
  %v1106 = vsel %vm909, %v846, 0
  %v1109 = vsel %vm909, %v847, 0
  %v1112 = vsel %vm909, %v848, 0
  %v1115 = vsel %vm909, %v849, 0
  %v1118 = vsel %vm909, %v850, 0
  %v1121 = vsel %vm909, %v851, 0
  %v1124 = vsel %vm909, %v852, 0
  %v1127 = vsel %vm909, %v853, 0
  %v1130 = vsel %vm909, %v854, 0
  %v1133 = vsel %vm909, %v855, 0
  %v1136 = vsel %vm909, %v856, 0
  %v1139 = vsel %vm909, %v857, 0
  %v1142 = vsel %vm909, %v858, 0
  %v1145 = vsel %vm909, %v859, 0
  %v1148 = vsel %vm909, %v860, 0
  %v1151 = vsel %vm909, %v861, 0
  %v1154 = vsel %vm909, %v862, 0
  %v1157 = vsel %vm909, %v863, 0
  %v1160 = vsel %vm909, %v864, 0
  %v1163 = vsel %vm909, %v865, 0
  %v1166 = vsel %vm909, %v866, 0
  %v1169 = vsel %vm909, %v867, 0
  %v1172 = vsel %vm909, %v868, 0
  %v1175 = vsel %vm909, %v869, 0
  %v1178 = vsel %vm909, %v870, 0
  %v1181 = vsel %vm909, %v871, 0
  %v1184 = vsel %vm909, %v872, 0
  %v1187 = vsel %vm909, %v873, 0
  %v1190 = vsel %vm909, %v874, 0
  %v1193 = vsel %vm909, %v875, 0
  %v1196 = vsel %vm909, %v876, 0
  %v1199 = vsel %vm909, %v877, 0
  %v1202 = vsel %vm909, %v878, 0
  %v1205 = vsel %vm909, %v879, 0
  %v1208 = vsel %vm909, %v880, 0
  %v1211 = vsel %vm909, %v881, 0
  %v1214 = vsel %vm909, %v882, 0
  %v1217 = vsel %vm909, %v883, 0
  %v1220 = vsel %vm909, %v884, 0
  %v1223 = vsel %vm909, %v885, 0
  %v1226 = vsel %vm909, %v886, 0
  %v1229 = vsel %vm909, %v887, 0
  %v1232 = vsel %vm909, %v888, 0
  %v1235 = vsel %vm909, %v889, 0
  %v1238 = vsel %vm909, %v890, 0
  %v1241 = vsel %vm909, %v891, 0
  %v1244 = vsel %vm909, %v892, 0
  %v1247 = vsel %vm909, %v893, 0
  %v1250 = vsel %vm909, %v894, 0
  %v1253 = vsel %vm909, %v895, 0
  %v1256 = vsel %vm909, %v896, 0
  %v1259 = vsel %vm909, %v897, 0
  %v1262 = vsel %vm909, %v898, 0
  %v1265 = vsel %vm909, %v899, 0
  %v1268 = vsel %vm909, %v900, 0
  %v1271 = vsel %vm909, %v901, 0
  %v1274 = vsel %vm909, %v902, 0
  %v1277 = vsel %vm909, %v903, 0
  %v1280 = vsel %vm909, %v904, 0
  %v1283 = vsel %vm909, %v905, 0
  %v1286 = vsel %vm909, %v906, 0
  %v1289 = vsel %vm909, %v907, 0
  %v1292 = vsel %vm909, %v908, 0
  %vm1294 = vcmask 1043456
  %v1296 = vsel %vm1294, %v268, 0
  %1298 = vmatprep.subr.bf16.mxu0 0
  %1299 = vmatpush1.bf16.msra.mxu0 %v1296
  %1300 = vmatprep.subr.bf16.mxu0 0
  %1301 = vmatpush1.bf16.msra.mxu0 0
  %1302 = vmatprep.subr.bf16.mxu0 0
  %1303 = vmatpush1.bf16.msra.mxu0 0
  %1304 = vmatprep.subr.bf16.mxu0 0
  %1305 = vmatpush1.bf16.msra.mxu0 0
  %1306 = vmatprep.subr.bf16.mxu0 0
  %1307 = vmatpush1.bf16.msra.mxu0 0
  %1308 = vmatprep.subr.bf16.mxu0 0
  %1309 = vmatpush1.bf16.msra.mxu0 0
  %1310 = vmatprep.subr.bf16.mxu0 0
  %1311 = vmatpush1.bf16.msra.mxu0 0
  %1312 = vmatprep.subr.bf16.mxu0 0
  %1313 = vmatpush1.bf16.msra.mxu0 0
  %1314 = vmatprep.subr.bf16.mxu0 0
  %1315 = vmatpush1.bf16.msra.mxu0 0
  %1316 = vmatprep.subr.bf16.mxu0 0
  %1317 = vmatpush1.bf16.msra.mxu0 0
  %1318 = vmatprep.subr.bf16.mxu0 0
  %1319 = vmatpush1.bf16.msra.mxu0 0
  %1320 = vmatprep.subr.bf16.mxu0 0
  %1321 = vmatpush1.bf16.msra.mxu0 0
  %1322 = vmatprep.subr.bf16.mxu0 0
  %1323 = vmatpush1.bf16.msra.mxu0 0
  %1324 = vmatprep.subr.bf16.mxu0 0
  %1325 = vmatpush1.bf16.msra.mxu0 0
  %1326 = vmatprep.subr.bf16.mxu0 0
  %1327 = vmatpush1.bf16.msra.mxu0 0
  %1328 = vmatprep.subr.bf16.mxu0 0
  %1329 = vmatpush1.bf16.msra.mxu0 0
  %1330 = vmatprep.mubr.bf16.mxu0 0
  %1331 = vmatmul.mubr.bf16.gmra.mrb[0].mxu0 %v911
  %v1332 = vpop.f32.mrb[0].mxu0
  %v1333 = vadd.f32 0.0, %v1332
  %v1334 = vpop.f32.mrb[0].mxu0
  %v1335 = vpop.f32.mrb[0].mxu0
  %v1336 = vadd.f32 0.0, %v1335
  %v1337 = vpop.f32.mrb[0].mxu0
  %1338 = vmatprep.mubr.bf16.mxu0 0
  %1339 = vmatmul.mubr.bf16.gmra.mrb[0].mxu0 %v914
  %v1340 = vpop.f32.mrb[0].mxu0
  %v1341 = vadd.f32 0.0, %v1340
  %v1342 = vpop.f32.mrb[0].mxu0
  %v1343 = vpop.f32.mrb[0].mxu0
  %v1344 = vadd.f32 0.0, %v1343
  %v1345 = vpop.f32.mrb[0].mxu0
  %1346 = vmatprep.mubr.bf16.mxu0 0
  %1347 = vmatmul.mubr.bf16.gmra.mrb[0].mxu0 %v917
  %v1348 = vpop.f32.mrb[0].mxu0
  %v1349 = vadd.f32 0.0, %v1348
  %v1350 = vpop.f32.mrb[0].mxu0
  %v1351 = vpop.f32.mrb[0].mxu0
  %v1352 = vadd.f32 0.0, %v1351
  %v1353 = vpop.f32.mrb[0].mxu0
  %1354 = vmatprep.mubr.bf16.mxu0 0
  %1355 = vmatmul.mubr.bf16.gmra.mrb[0].mxu0 %v920
  %v1356 = vpop.f32.mrb[0].mxu0
  %v1357 = vadd.f32 0.0, %v1356
  %v1358 = vpop.f32.mrb[0].mxu0
  %v1359 = vpop.f32.mrb[0].mxu0
  %v1360 = vadd.f32 0.0, %v1359
  %v1361 = vpop.f32.mrb[0].mxu0
  %1362 = vmatprep.mubr.bf16.mxu0 0
  %1363 = vmatmul.mubr.bf16.gmra.mrb[0].mxu0 %v923
  %v1364 = vpop.f32.mrb[0].mxu0
  %v1365 = vadd.f32 0.0, %v1364
  %v1366 = vpop.f32.mrb[0].mxu0
  %v1367 = vpop.f32.mrb[0].mxu0
  %v1368 = vadd.f32 0.0, %v1367
  %v1369 = vpop.f32.mrb[0].mxu0
  %1370 = vmatprep.mubr.bf16.mxu0 0
  %1371 = vmatmul.mubr.bf16.gmra.mrb[0].mxu0 %v926
  %v1372 = vpop.f32.mrb[0].mxu0
  %v1373 = vadd.f32 0.0, %v1372
  %v1374 = vpop.f32.mrb[0].mxu0
  %v1375 = vpop.f32.mrb[0].mxu0
  %v1376 = vadd.f32 0.0, %v1375
  %v1377 = vpop.f32.mrb[0].mxu0
  %1378 = vmatprep.mubr.bf16.mxu0 0
  %1379 = vmatmul.mubr.bf16.gmra.mrb[0].mxu0 %v929
  %v1380 = vpop.f32.mrb[0].mxu0
  %v1381 = vadd.f32 0.0, %v1380
  %v1382 = vpop.f32.mrb[0].mxu0
  %v1383 = vpop.f32.mrb[0].mxu0
  %v1384 = vadd.f32 0.0, %v1383
  %v1385 = vpop.f32.mrb[0].mxu0
  %1386 = vmatprep.mubr.bf16.mxu0 0
  %1387 = vmatmul.mubr.bf16.gmra.mrb[0].mxu0 %v932
  %v1388 = vpop.f32.mrb[0].mxu0
  %v1389 = vadd.f32 0.0, %v1388
  %v1390 = vpop.f32.mrb[0].mxu0
  %v1391 = vpop.f32.mrb[0].mxu0
  %v1392 = vadd.f32 0.0, %v1391
  %v1393 = vpop.f32.mrb[0].mxu0
  %1394 = vmatprep.mubr.bf16.mxu0 0
  %1395 = vmatmul.mubr.bf16.gmra.mrb[0].mxu0 %v935
  %v1396 = vpop.f32.mrb[0].mxu0
  %v1397 = vadd.f32 0.0, %v1396
  %v1398 = vpop.f32.mrb[0].mxu0
  %v1399 = vpop.f32.mrb[0].mxu0
  %v1400 = vadd.f32 0.0, %v1399
  %v1401 = vpop.f32.mrb[0].mxu0
  %1402 = vmatprep.mubr.bf16.mxu0 0
  %1403 = vmatmul.mubr.bf16.gmra.mrb[0].mxu0 %v938
  %v1404 = vpop.f32.mrb[0].mxu0
  %v1405 = vadd.f32 0.0, %v1404
  %v1406 = vpop.f32.mrb[0].mxu0
  %v1407 = vpop.f32.mrb[0].mxu0
  %v1408 = vadd.f32 0.0, %v1407
  %v1409 = vpop.f32.mrb[0].mxu0
  %1410 = vmatprep.mubr.bf16.mxu0 0
  %1411 = vmatmul.mubr.bf16.gmra.mrb[0].mxu0 %v941
  %v1412 = vpop.f32.mrb[0].mxu0
  %v1413 = vadd.f32 0.0, %v1412
  %v1414 = vpop.f32.mrb[0].mxu0
  %v1415 = vpop.f32.mrb[0].mxu0
  %v1416 = vadd.f32 0.0, %v1415
  %v1417 = vpop.f32.mrb[0].mxu0
  %1418 = vmatprep.mubr.bf16.mxu0 0
  %1419 = vmatmul.mubr.bf16.gmra.mrb[0].mxu0 %v944
  %v1420 = vpop.f32.mrb[0].mxu0
  %v1421 = vadd.f32 0.0, %v1420
  %v1422 = vpop.f32.mrb[0].mxu0
  %v1423 = vpop.f32.mrb[0].mxu0
  %v1424 = vadd.f32 0.0, %v1423
  %v1425 = vpop.f32.mrb[0].mxu0
  %1426 = vmatprep.mubr.bf16.mxu0 0
  %1427 = vmatmul.mubr.bf16.gmra.mrb[0].mxu0 %v947
  %v1428 = vpop.f32.mrb[0].mxu0
  %v1429 = vadd.f32 0.0, %v1428
  %v1430 = vpop.f32.mrb[0].mxu0
  %v1431 = vpop.f32.mrb[0].mxu0
  %v1432 = vadd.f32 0.0, %v1431
  %v1433 = vpop.f32.mrb[0].mxu0
  %1434 = vmatprep.mubr.bf16.mxu0 0
  %1435 = vmatmul.mubr.bf16.gmra.mrb[0].mxu0 %v950
  %v1436 = vpop.f32.mrb[0].mxu0
  %v1437 = vadd.f32 0.0, %v1436
  %v1438 = vpop.f32.mrb[0].mxu0
  %v1439 = vpop.f32.mrb[0].mxu0
  %v1440 = vadd.f32 0.0, %v1439
  %v1441 = vpop.f32.mrb[0].mxu0
  %1442 = vmatprep.mubr.bf16.mxu0 0
  %1443 = vmatmul.mubr.bf16.gmra.mrb[0].mxu0 %v953
  %v1444 = vpop.f32.mrb[0].mxu0
  %v1445 = vadd.f32 0.0, %v1444
  %v1446 = vpop.f32.mrb[0].mxu0
  %v1447 = vpop.f32.mrb[0].mxu0
  %v1448 = vadd.f32 0.0, %v1447
  %v1449 = vpop.f32.mrb[0].mxu0
  %1450 = vmatprep.mubr.bf16.mxu0 0
  %1451 = vmatmul.mubr.bf16.gmra.mrb[0].mxu0 %v956
  %v1452 = vpop.f32.mrb[0].mxu0
  %v1453 = vadd.f32 0.0, %v1452
  %v1454 = vpop.f32.mrb[0].mxu0
  %v1455 = vpop.f32.mrb[0].mxu0
  %v1456 = vadd.f32 0.0, %v1455
  %v1457 = vpop.f32.mrb[0].mxu0
  %1458 = vmatprep.mubr.bf16.mxu0 0
  %1459 = vmatmul.mubr.bf16.gmra.mrb[0].mxu0 %v959
  %v1460 = vpop.f32.mrb[0].mxu0
  %v1461 = vadd.f32 0.0, %v1460
  %v1462 = vpop.f32.mrb[0].mxu0
  %v1463 = vpop.f32.mrb[0].mxu0
  %v1464 = vadd.f32 0.0, %v1463
  %v1465 = vpop.f32.mrb[0].mxu0
  %1466 = vmatprep.mubr.bf16.mxu0 0
  %1467 = vmatmul.mubr.bf16.gmra.mrb[0].mxu0 %v962
  %v1468 = vpop.f32.mrb[0].mxu0
  %v1469 = vadd.f32 0.0, %v1468
  %v1470 = vpop.f32.mrb[0].mxu0
  %v1471 = vpop.f32.mrb[0].mxu0
  %v1472 = vadd.f32 0.0, %v1471
  %v1473 = vpop.f32.mrb[0].mxu0
  %1474 = vmatprep.mubr.bf16.mxu0 0
  %1475 = vmatmul.mubr.bf16.gmra.mrb[0].mxu0 %v965
  %v1476 = vpop.f32.mrb[0].mxu0
  %v1477 = vadd.f32 0.0, %v1476
  %v1478 = vpop.f32.mrb[0].mxu0
  %v1479 = vpop.f32.mrb[0].mxu0
  %v1480 = vadd.f32 0.0, %v1479
  %v1481 = vpop.f32.mrb[0].mxu0
  %1482 = vmatprep.mubr.bf16.mxu0 0
  %1483 = vmatmul.mubr.bf16.gmra.mrb[0].mxu0 %v968
  %v1484 = vpop.f32.mrb[0].mxu0
  %v1485 = vadd.f32 0.0, %v1484
  %v1486 = vpop.f32.mrb[0].mxu0
  %v1487 = vpop.f32.mrb[0].mxu0
  %v1488 = vadd.f32 0.0, %v1487
  %v1489 = vpop.f32.mrb[0].mxu0
  %1490 = vmatprep.mubr.bf16.mxu0 0
  %1491 = vmatmul.mubr.bf16.gmra.mrb[0].mxu0 %v971
  %v1492 = vpop.f32.mrb[0].mxu0
  %v1493 = vadd.f32 0.0, %v1492
  %v1494 = vpop.f32.mrb[0].mxu0
  %v1495 = vpop.f32.mrb[0].mxu0
  %v1496 = vadd.f32 0.0, %v1495
  %v1497 = vpop.f32.mrb[0].mxu0
  %1498 = vmatprep.mubr.bf16.mxu0 0
  %1499 = vmatmul.mubr.bf16.gmra.mrb[0].mxu0 %v974
  %v1500 = vpop.f32.mrb[0].mxu0
  %v1501 = vadd.f32 0.0, %v1500
  %v1502 = vpop.f32.mrb[0].mxu0
  %v1503 = vpop.f32.mrb[0].mxu0
  %v1504 = vadd.f32 0.0, %v1503
  %v1505 = vpop.f32.mrb[0].mxu0
  %1506 = vmatprep.mubr.bf16.mxu0 0
  %1507 = vmatmul.mubr.bf16.gmra.mrb[0].mxu0 %v977
  %v1508 = vpop.f32.mrb[0].mxu0
  %v1509 = vadd.f32 0.0, %v1508
  %v1510 = vpop.f32.mrb[0].mxu0
  %v1511 = vpop.f32.mrb[0].mxu0
  %v1512 = vadd.f32 0.0, %v1511
  %v1513 = vpop.f32.mrb[0].mxu0
  %1514 = vmatprep.mubr.bf16.mxu0 0
  %1515 = vmatmul.mubr.bf16.gmra.mrb[0].mxu0 %v980
  %v1516 = vpop.f32.mrb[0].mxu0
  %v1517 = vadd.f32 0.0, %v1516
  %v1518 = vpop.f32.mrb[0].mxu0
  %v1519 = vpop.f32.mrb[0].mxu0
  %v1520 = vadd.f32 0.0, %v1519
  %v1521 = vpop.f32.mrb[0].mxu0
  %1522 = vmatprep.mubr.bf16.mxu0 0
  %1523 = vmatmul.mubr.bf16.gmra.mrb[0].mxu0 %v983
  %v1524 = vpop.f32.mrb[0].mxu0
  %v1525 = vadd.f32 0.0, %v1524
  %v1526 = vpop.f32.mrb[0].mxu0
  %v1527 = vpop.f32.mrb[0].mxu0
  %v1528 = vadd.f32 0.0, %v1527
  %v1529 = vpop.f32.mrb[0].mxu0
  %1530 = vmatprep.mubr.bf16.mxu0 0
  %1531 = vmatmul.mubr.bf16.gmra.mrb[0].mxu0 %v986
  %v1532 = vpop.f32.mrb[0].mxu0
  %v1533 = vadd.f32 0.0, %v1532
  %v1534 = vpop.f32.mrb[0].mxu0
  %v1535 = vpop.f32.mrb[0].mxu0
  %v1536 = vadd.f32 0.0, %v1535
  %v1537 = vpop.f32.mrb[0].mxu0
  %1538 = vmatprep.mubr.bf16.mxu0 0
  %1539 = vmatmul.mubr.bf16.gmra.mrb[0].mxu0 %v989
  %v1540 = vpop.f32.mrb[0].mxu0
  %v1541 = vadd.f32 0.0, %v1540
  %v1542 = vpop.f32.mrb[0].mxu0
  %v1543 = vpop.f32.mrb[0].mxu0
  %v1544 = vadd.f32 0.0, %v1543
  %v1545 = vpop.f32.mrb[0].mxu0
  %1546 = vmatprep.mubr.bf16.mxu0 0
  %1547 = vmatmul.mubr.bf16.gmra.mrb[0].mxu0 %v992
  %v1548 = vpop.f32.mrb[0].mxu0
  %v1549 = vadd.f32 0.0, %v1548
  %v1550 = vpop.f32.mrb[0].mxu0
  %v1551 = vpop.f32.mrb[0].mxu0
  %v1552 = vadd.f32 0.0, %v1551
  %v1553 = vpop.f32.mrb[0].mxu0
  %1554 = vmatprep.mubr.bf16.mxu0 0
  %1555 = vmatmul.mubr.bf16.gmra.mrb[0].mxu0 %v995
  %v1556 = vpop.f32.mrb[0].mxu0
  %v1557 = vadd.f32 0.0, %v1556
  %v1558 = vpop.f32.mrb[0].mxu0
  %v1559 = vpop.f32.mrb[0].mxu0
  %v1560 = vadd.f32 0.0, %v1559
  %v1561 = vpop.f32.mrb[0].mxu0
  %1562 = vmatprep.mubr.bf16.mxu0 0
  %1563 = vmatmul.mubr.bf16.gmra.mrb[0].mxu0 %v998
  %v1564 = vpop.f32.mrb[0].mxu0
  %v1565 = vadd.f32 0.0, %v1564
  %v1566 = vpop.f32.mrb[0].mxu0
  %v1567 = vpop.f32.mrb[0].mxu0
  %v1568 = vadd.f32 0.0, %v1567
  %v1569 = vpop.f32.mrb[0].mxu0
  %1570 = vmatprep.mubr.bf16.mxu0 0
  %1571 = vmatmul.mubr.bf16.gmra.mrb[0].mxu0 %v1001
  %v1572 = vpop.f32.mrb[0].mxu0
  %v1573 = vadd.f32 0.0, %v1572
  %v1574 = vpop.f32.mrb[0].mxu0
  %v1575 = vpop.f32.mrb[0].mxu0
  %v1576 = vadd.f32 0.0, %v1575
  %v1577 = vpop.f32.mrb[0].mxu0
  %1578 = vmatprep.mubr.bf16.mxu0 0
  %1579 = vmatmul.mubr.bf16.gmra.mrb[0].mxu0 %v1004
  %v1580 = vpop.f32.mrb[0].mxu0
  %v1581 = vadd.f32 0.0, %v1580
  %v1582 = vpop.f32.mrb[0].mxu0
  %v1583 = vpop.f32.mrb[0].mxu0
  %v1584 = vadd.f32 0.0, %v1583
  %v1585 = vpop.f32.mrb[0].mxu0
  %1586 = vmatprep.mubr.bf16.mxu0 0
  %1587 = vmatmul.mubr.bf16.gmra.mrb[0].mxu0 %v1007
  %v1588 = vpop.f32.mrb[0].mxu0
  %v1589 = vadd.f32 0.0, %v1588
  %v1590 = vpop.f32.mrb[0].mxu0
  %v1591 = vpop.f32.mrb[0].mxu0
  %v1592 = vadd.f32 0.0, %v1591
  %v1593 = vpop.f32.mrb[0].mxu0
  %1594 = vmatprep.mubr.bf16.mxu0 0
  %1595 = vmatmul.mubr.bf16.gmra.mrb[0].mxu0 %v1010
  %v1596 = vpop.f32.mrb[0].mxu0
  %v1597 = vadd.f32 0.0, %v1596
  %v1598 = vpop.f32.mrb[0].mxu0
  %v1599 = vpop.f32.mrb[0].mxu0
  %v1600 = vadd.f32 0.0, %v1599
  %v1601 = vpop.f32.mrb[0].mxu0
  %1602 = vmatprep.mubr.bf16.mxu0 0
  %1603 = vmatmul.mubr.bf16.gmra.mrb[0].mxu0 %v1013
  %v1604 = vpop.f32.mrb[0].mxu0
  %v1605 = vadd.f32 0.0, %v1604
  %v1606 = vpop.f32.mrb[0].mxu0
  %v1607 = vpop.f32.mrb[0].mxu0
  %v1608 = vadd.f32 0.0, %v1607
  %v1609 = vpop.f32.mrb[0].mxu0
  %1610 = vmatprep.mubr.bf16.mxu0 0
  %1611 = vmatmul.mubr.bf16.gmra.mrb[0].mxu0 %v1016
  %v1612 = vpop.f32.mrb[0].mxu0
  %v1613 = vadd.f32 0.0, %v1612
  %v1614 = vpop.f32.mrb[0].mxu0
  %v1615 = vpop.f32.mrb[0].mxu0
  %v1616 = vadd.f32 0.0, %v1615
  %v1617 = vpop.f32.mrb[0].mxu0
  %1618 = vmatprep.mubr.bf16.mxu0 0
  %1619 = vmatmul.mubr.bf16.gmra.mrb[0].mxu0 %v1019
  %v1620 = vpop.f32.mrb[0].mxu0
  %v1621 = vadd.f32 0.0, %v1620
  %v1622 = vpop.f32.mrb[0].mxu0
  %v1623 = vpop.f32.mrb[0].mxu0
  %v1624 = vadd.f32 0.0, %v1623
  %v1625 = vpop.f32.mrb[0].mxu0
  %1626 = vmatprep.mubr.bf16.mxu0 0
  %1627 = vmatmul.mubr.bf16.gmra.mrb[0].mxu0 %v1022
  %v1628 = vpop.f32.mrb[0].mxu0
  %v1629 = vadd.f32 0.0, %v1628
  %v1630 = vpop.f32.mrb[0].mxu0
  %v1631 = vpop.f32.mrb[0].mxu0
  %v1632 = vadd.f32 0.0, %v1631
  %v1633 = vpop.f32.mrb[0].mxu0
  %1634 = vmatprep.mubr.bf16.mxu0 0
  %1635 = vmatmul.mubr.bf16.gmra.mrb[0].mxu0 %v1025
  %v1636 = vpop.f32.mrb[0].mxu0
  %v1637 = vadd.f32 0.0, %v1636
  %v1638 = vpop.f32.mrb[0].mxu0
  %v1639 = vpop.f32.mrb[0].mxu0
  %v1640 = vadd.f32 0.0, %v1639
  %v1641 = vpop.f32.mrb[0].mxu0
  %1642 = vmatprep.mubr.bf16.mxu0 0
  %1643 = vmatmul.mubr.bf16.gmra.mrb[0].mxu0 %v1028
  %v1644 = vpop.f32.mrb[0].mxu0
  %v1645 = vadd.f32 0.0, %v1644
  %v1646 = vpop.f32.mrb[0].mxu0
  %v1647 = vpop.f32.mrb[0].mxu0
  %v1648 = vadd.f32 0.0, %v1647
  %v1649 = vpop.f32.mrb[0].mxu0
  %1650 = vmatprep.mubr.bf16.mxu0 0
  %1651 = vmatmul.mubr.bf16.gmra.mrb[0].mxu0 %v1031
  %v1652 = vpop.f32.mrb[0].mxu0
  %v1653 = vadd.f32 0.0, %v1652
  %v1654 = vpop.f32.mrb[0].mxu0
  %v1655 = vpop.f32.mrb[0].mxu0
  %v1656 = vadd.f32 0.0, %v1655
  %v1657 = vpop.f32.mrb[0].mxu0
  %1658 = vmatprep.mubr.bf16.mxu0 0
  %1659 = vmatmul.mubr.bf16.gmra.mrb[0].mxu0 %v1034
  %v1660 = vpop.f32.mrb[0].mxu0
  %v1661 = vadd.f32 0.0, %v1660
  %v1662 = vpop.f32.mrb[0].mxu0
  %v1663 = vpop.f32.mrb[0].mxu0
  %v1664 = vadd.f32 0.0, %v1663
  %v1665 = vpop.f32.mrb[0].mxu0
  %1666 = vmatprep.mubr.bf16.mxu0 0
  %1667 = vmatmul.mubr.bf16.gmra.mrb[0].mxu0 %v1037
  %v1668 = vpop.f32.mrb[0].mxu0
  %v1669 = vadd.f32 0.0, %v1668
  %v1670 = vpop.f32.mrb[0].mxu0
  %v1671 = vpop.f32.mrb[0].mxu0
  %v1672 = vadd.f32 0.0, %v1671
  %v1673 = vpop.f32.mrb[0].mxu0
  %1674 = vmatprep.mubr.bf16.mxu0 0
  %1675 = vmatmul.mubr.bf16.gmra.mrb[0].mxu0 %v1040
  %v1676 = vpop.f32.mrb[0].mxu0
  %v1677 = vadd.f32 0.0, %v1676
  %v1678 = vpop.f32.mrb[0].mxu0
  %v1679 = vpop.f32.mrb[0].mxu0
  %v1680 = vadd.f32 0.0, %v1679
  %v1681 = vpop.f32.mrb[0].mxu0
  %1682 = vmatprep.mubr.bf16.mxu0 0
  %1683 = vmatmul.mubr.bf16.gmra.mrb[0].mxu0 %v1043
  %v1684 = vpop.f32.mrb[0].mxu0
  %v1685 = vadd.f32 0.0, %v1684
  %v1686 = vpop.f32.mrb[0].mxu0
  %v1687 = vpop.f32.mrb[0].mxu0
  %v1688 = vadd.f32 0.0, %v1687
  %v1689 = vpop.f32.mrb[0].mxu0
  %1690 = vmatprep.mubr.bf16.mxu0 0
  %1691 = vmatmul.mubr.bf16.gmra.mrb[0].mxu0 %v1046
  %v1692 = vpop.f32.mrb[0].mxu0
  %v1693 = vadd.f32 0.0, %v1692
  %v1694 = vpop.f32.mrb[0].mxu0
  %v1695 = vpop.f32.mrb[0].mxu0
  %v1696 = vadd.f32 0.0, %v1695
  %v1697 = vpop.f32.mrb[0].mxu0
  %1698 = vmatprep.mubr.bf16.mxu0 0
  %1699 = vmatmul.mubr.bf16.gmra.mrb[0].mxu0 %v1049
  %v1700 = vpop.f32.mrb[0].mxu0
  %v1701 = vadd.f32 0.0, %v1700
  %v1702 = vpop.f32.mrb[0].mxu0
  %v1703 = vpop.f32.mrb[0].mxu0
  %v1704 = vadd.f32 0.0, %v1703
  %v1705 = vpop.f32.mrb[0].mxu0
  %1706 = vmatprep.mubr.bf16.mxu0 0
  %1707 = vmatmul.mubr.bf16.gmra.mrb[0].mxu0 %v1052
  %v1708 = vpop.f32.mrb[0].mxu0
  %v1709 = vadd.f32 0.0, %v1708
  %v1710 = vpop.f32.mrb[0].mxu0
  %v1711 = vpop.f32.mrb[0].mxu0
  %v1712 = vadd.f32 0.0, %v1711
  %v1713 = vpop.f32.mrb[0].mxu0
  %1714 = vmatprep.mubr.bf16.mxu0 0
  %1715 = vmatmul.mubr.bf16.gmra.mrb[0].mxu0 %v1055
  %v1716 = vpop.f32.mrb[0].mxu0
  %v1717 = vadd.f32 0.0, %v1716
  %v1718 = vpop.f32.mrb[0].mxu0
  %v1719 = vpop.f32.mrb[0].mxu0
  %v1720 = vadd.f32 0.0, %v1719
  %v1721 = vpop.f32.mrb[0].mxu0
  %1722 = vmatprep.mubr.bf16.mxu0 0
  %1723 = vmatmul.mubr.bf16.gmra.mrb[0].mxu0 %v1058
  %v1724 = vpop.f32.mrb[0].mxu0
  %v1725 = vadd.f32 0.0, %v1724
  %v1726 = vpop.f32.mrb[0].mxu0
  %v1727 = vpop.f32.mrb[0].mxu0
  %v1728 = vadd.f32 0.0, %v1727
  %v1729 = vpop.f32.mrb[0].mxu0
  %1730 = vmatprep.mubr.bf16.mxu0 0
  %1731 = vmatmul.mubr.bf16.gmra.mrb[0].mxu0 %v1061
  %v1732 = vpop.f32.mrb[0].mxu0
  %v1733 = vadd.f32 0.0, %v1732
  %v1734 = vpop.f32.mrb[0].mxu0
  %v1735 = vpop.f32.mrb[0].mxu0
  %v1736 = vadd.f32 0.0, %v1735
  %v1737 = vpop.f32.mrb[0].mxu0
  %1738 = vmatprep.mubr.bf16.mxu0 0
  %1739 = vmatmul.mubr.bf16.gmra.mrb[0].mxu0 %v1064
  %v1740 = vpop.f32.mrb[0].mxu0
  %v1741 = vadd.f32 0.0, %v1740
  %v1742 = vpop.f32.mrb[0].mxu0
  %v1743 = vpop.f32.mrb[0].mxu0
  %v1744 = vadd.f32 0.0, %v1743
  %v1745 = vpop.f32.mrb[0].mxu0
  %1746 = vmatprep.mubr.bf16.mxu0 0
  %1747 = vmatmul.mubr.bf16.gmra.mrb[0].mxu0 %v1067
  %v1748 = vpop.f32.mrb[0].mxu0
  %v1749 = vadd.f32 0.0, %v1748
  %v1750 = vpop.f32.mrb[0].mxu0
  %v1751 = vpop.f32.mrb[0].mxu0
  %v1752 = vadd.f32 0.0, %v1751
  %v1753 = vpop.f32.mrb[0].mxu0
  %1754 = vmatprep.mubr.bf16.mxu0 0
  %1755 = vmatmul.mubr.bf16.gmra.mrb[0].mxu0 %v1070
  %v1756 = vpop.f32.mrb[0].mxu0
  %v1757 = vadd.f32 0.0, %v1756
  %v1758 = vpop.f32.mrb[0].mxu0
  %v1759 = vpop.f32.mrb[0].mxu0
  %v1760 = vadd.f32 0.0, %v1759
  %v1761 = vpop.f32.mrb[0].mxu0
  %1762 = vmatprep.mubr.bf16.mxu0 0
  %1763 = vmatmul.mubr.bf16.gmra.mrb[0].mxu0 %v1073
  %v1764 = vpop.f32.mrb[0].mxu0
  %v1765 = vadd.f32 0.0, %v1764
  %v1766 = vpop.f32.mrb[0].mxu0
  %v1767 = vpop.f32.mrb[0].mxu0
  %v1768 = vadd.f32 0.0, %v1767
  %v1769 = vpop.f32.mrb[0].mxu0
  %1770 = vmatprep.mubr.bf16.mxu0 0
  %1771 = vmatmul.mubr.bf16.gmra.mrb[0].mxu0 %v1076
  %v1772 = vpop.f32.mrb[0].mxu0
  %v1773 = vadd.f32 0.0, %v1772
  %v1774 = vpop.f32.mrb[0].mxu0
  %v1775 = vpop.f32.mrb[0].mxu0
  %v1776 = vadd.f32 0.0, %v1775
  %v1777 = vpop.f32.mrb[0].mxu0
  %1778 = vmatprep.mubr.bf16.mxu0 0
  %1779 = vmatmul.mubr.bf16.gmra.mrb[0].mxu0 %v1079
  %v1780 = vpop.f32.mrb[0].mxu0
  %v1781 = vadd.f32 0.0, %v1780
  %v1782 = vpop.f32.mrb[0].mxu0
  %v1783 = vpop.f32.mrb[0].mxu0
  %v1784 = vadd.f32 0.0, %v1783
  %v1785 = vpop.f32.mrb[0].mxu0
  %1786 = vmatprep.mubr.bf16.mxu0 0
  %1787 = vmatmul.mubr.bf16.gmra.mrb[0].mxu0 %v1082
  %v1788 = vpop.f32.mrb[0].mxu0
  %v1789 = vadd.f32 0.0, %v1788
  %v1790 = vpop.f32.mrb[0].mxu0
  %v1791 = vpop.f32.mrb[0].mxu0
  %v1792 = vadd.f32 0.0, %v1791
  %v1793 = vpop.f32.mrb[0].mxu0
  %1794 = vmatprep.mubr.bf16.mxu0 0
  %1795 = vmatmul.mubr.bf16.gmra.mrb[0].mxu0 %v1085
  %v1796 = vpop.f32.mrb[0].mxu0
  %v1797 = vadd.f32 0.0, %v1796
  %v1798 = vpop.f32.mrb[0].mxu0
  %v1799 = vpop.f32.mrb[0].mxu0
  %v1800 = vadd.f32 0.0, %v1799
  %v1801 = vpop.f32.mrb[0].mxu0
  %1802 = vmatprep.mubr.bf16.mxu0 0
  %1803 = vmatmul.mubr.bf16.gmra.mrb[0].mxu0 %v1088
  %v1804 = vpop.f32.mrb[0].mxu0
  %v1805 = vadd.f32 0.0, %v1804
  %v1806 = vpop.f32.mrb[0].mxu0
  %v1807 = vpop.f32.mrb[0].mxu0
  %v1808 = vadd.f32 0.0, %v1807
  %v1809 = vpop.f32.mrb[0].mxu0
  %1810 = vmatprep.mubr.bf16.mxu0 0
  %1811 = vmatmul.mubr.bf16.gmra.mrb[0].mxu0 %v1091
  %v1812 = vpop.f32.mrb[0].mxu0
  %v1813 = vadd.f32 0.0, %v1812
  %v1814 = vpop.f32.mrb[0].mxu0
  %v1815 = vpop.f32.mrb[0].mxu0
  %v1816 = vadd.f32 0.0, %v1815
  %v1817 = vpop.f32.mrb[0].mxu0
  %1818 = vmatprep.mubr.bf16.mxu0 0
  %1819 = vmatmul.mubr.bf16.gmra.mrb[0].mxu0 %v1094
  %v1820 = vpop.f32.mrb[0].mxu0
  %v1821 = vadd.f32 0.0, %v1820
  %v1822 = vpop.f32.mrb[0].mxu0
  %v1823 = vpop.f32.mrb[0].mxu0
  %v1824 = vadd.f32 0.0, %v1823
  %v1825 = vpop.f32.mrb[0].mxu0
  %1826 = vmatprep.mubr.bf16.mxu0 0
  %1827 = vmatmul.mubr.bf16.gmra.mrb[0].mxu0 %v1097
  %v1828 = vpop.f32.mrb[0].mxu0
  %v1829 = vadd.f32 0.0, %v1828
  %v1830 = vpop.f32.mrb[0].mxu0
  %v1831 = vpop.f32.mrb[0].mxu0
  %v1832 = vadd.f32 0.0, %v1831
  %v1833 = vpop.f32.mrb[0].mxu0
  %1834 = vmatprep.mubr.bf16.mxu0 0
  %1835 = vmatmul.mubr.bf16.gmra.mrb[0].mxu0 %v1100
  %v1836 = vpop.f32.mrb[0].mxu0
  %v1837 = vadd.f32 0.0, %v1836
  %v1838 = vpop.f32.mrb[0].mxu0
  %v1839 = vpop.f32.mrb[0].mxu0
  %v1840 = vadd.f32 0.0, %v1839
  %v1841 = vpop.f32.mrb[0].mxu0
  %1842 = vmatprep.mubr.bf16.mxu0 0
  %1843 = vmatmul.mubr.bf16.gmra.mrb[0].mxu0 %v1103
  %v1844 = vpop.f32.mrb[0].mxu0
  %v1845 = vadd.f32 0.0, %v1844
  %v1846 = vpop.f32.mrb[0].mxu0
  %v1847 = vpop.f32.mrb[0].mxu0
  %v1848 = vadd.f32 0.0, %v1847
  %v1849 = vpop.f32.mrb[0].mxu0
  %1850 = vmatprep.mubr.bf16.mxu0 0
  %1851 = vmatmul.mubr.bf16.gmra.mrb[0].mxu0 %v1106
  %v1852 = vpop.f32.mrb[0].mxu0
  %v1853 = vadd.f32 0.0, %v1852
  %v1854 = vpop.f32.mrb[0].mxu0
  %v1855 = vpop.f32.mrb[0].mxu0
  %v1856 = vadd.f32 0.0, %v1855
  %v1857 = vpop.f32.mrb[0].mxu0
  %1858 = vmatprep.mubr.bf16.mxu0 0
  %1859 = vmatmul.mubr.bf16.gmra.mrb[0].mxu0 %v1109
  %v1860 = vpop.f32.mrb[0].mxu0
  %v1861 = vadd.f32 0.0, %v1860
  %v1862 = vpop.f32.mrb[0].mxu0
  %v1863 = vpop.f32.mrb[0].mxu0
  %v1864 = vadd.f32 0.0, %v1863
  %v1865 = vpop.f32.mrb[0].mxu0
  %1866 = vmatprep.mubr.bf16.mxu0 0
  %1867 = vmatmul.mubr.bf16.gmra.mrb[0].mxu0 %v1112
  %v1868 = vpop.f32.mrb[0].mxu0
  %v1869 = vadd.f32 0.0, %v1868
  %v1870 = vpop.f32.mrb[0].mxu0
  %v1871 = vpop.f32.mrb[0].mxu0
  %v1872 = vadd.f32 0.0, %v1871
  %v1873 = vpop.f32.mrb[0].mxu0
  %1874 = vmatprep.mubr.bf16.mxu0 0
  %1875 = vmatmul.mubr.bf16.gmra.mrb[0].mxu0 %v1115
  %v1876 = vpop.f32.mrb[0].mxu0
  %v1877 = vadd.f32 0.0, %v1876
  %v1878 = vpop.f32.mrb[0].mxu0
  %v1879 = vpop.f32.mrb[0].mxu0
  %v1880 = vadd.f32 0.0, %v1879
  %v1881 = vpop.f32.mrb[0].mxu0
  %1882 = vmatprep.mubr.bf16.mxu0 0
  %1883 = vmatmul.mubr.bf16.gmra.mrb[0].mxu0 %v1118
  %v1884 = vpop.f32.mrb[0].mxu0
  %v1885 = vadd.f32 0.0, %v1884
  %v1886 = vpop.f32.mrb[0].mxu0
  %v1887 = vpop.f32.mrb[0].mxu0
  %v1888 = vadd.f32 0.0, %v1887
  %v1889 = vpop.f32.mrb[0].mxu0
  %1890 = vmatprep.mubr.bf16.mxu0 0
  %1891 = vmatmul.mubr.bf16.gmra.mrb[0].mxu0 %v1121
  %v1892 = vpop.f32.mrb[0].mxu0
  %v1893 = vadd.f32 0.0, %v1892
  %v1894 = vpop.f32.mrb[0].mxu0
  %v1895 = vpop.f32.mrb[0].mxu0
  %v1896 = vadd.f32 0.0, %v1895
  %v1897 = vpop.f32.mrb[0].mxu0
  %1898 = vmatprep.mubr.bf16.mxu0 0
  %1899 = vmatmul.mubr.bf16.gmra.mrb[0].mxu0 %v1124
  %v1900 = vpop.f32.mrb[0].mxu0
  %v1901 = vadd.f32 0.0, %v1900
  %v1902 = vpop.f32.mrb[0].mxu0
  %v1903 = vpop.f32.mrb[0].mxu0
  %v1904 = vadd.f32 0.0, %v1903
  %v1905 = vpop.f32.mrb[0].mxu0
  %1906 = vmatprep.mubr.bf16.mxu0 0
  %1907 = vmatmul.mubr.bf16.gmra.mrb[0].mxu0 %v1127
  %v1908 = vpop.f32.mrb[0].mxu0
  %v1909 = vadd.f32 0.0, %v1908
  %v1910 = vpop.f32.mrb[0].mxu0
  %v1911 = vpop.f32.mrb[0].mxu0
  %v1912 = vadd.f32 0.0, %v1911
  %v1913 = vpop.f32.mrb[0].mxu0
  %1914 = vmatprep.mubr.bf16.mxu0 0
  %1915 = vmatmul.mubr.bf16.gmra.mrb[0].mxu0 %v1130
  %v1916 = vpop.f32.mrb[0].mxu0
  %v1917 = vadd.f32 0.0, %v1916
  %v1918 = vpop.f32.mrb[0].mxu0
  %v1919 = vpop.f32.mrb[0].mxu0
  %v1920 = vadd.f32 0.0, %v1919
  %v1921 = vpop.f32.mrb[0].mxu0
  %1922 = vmatprep.mubr.bf16.mxu0 0
  %1923 = vmatmul.mubr.bf16.gmra.mrb[0].mxu0 %v1133
  %v1924 = vpop.f32.mrb[0].mxu0
  %v1925 = vadd.f32 0.0, %v1924
  %v1926 = vpop.f32.mrb[0].mxu0
  %v1927 = vpop.f32.mrb[0].mxu0
  %v1928 = vadd.f32 0.0, %v1927
  %v1929 = vpop.f32.mrb[0].mxu0
  %1930 = vmatprep.mubr.bf16.mxu0 0
  %1931 = vmatmul.mubr.bf16.gmra.mrb[0].mxu0 %v1136
  %v1932 = vpop.f32.mrb[0].mxu0
  %v1933 = vadd.f32 0.0, %v1932
  %v1934 = vpop.f32.mrb[0].mxu0
  %v1935 = vpop.f32.mrb[0].mxu0
  %v1936 = vadd.f32 0.0, %v1935
  %v1937 = vpop.f32.mrb[0].mxu0
  %1938 = vmatprep.mubr.bf16.mxu0 0
  %1939 = vmatmul.mubr.bf16.gmra.mrb[0].mxu0 %v1139
  %v1940 = vpop.f32.mrb[0].mxu0
  %v1941 = vadd.f32 0.0, %v1940
  %v1942 = vpop.f32.mrb[0].mxu0
  %v1943 = vpop.f32.mrb[0].mxu0
  %v1944 = vadd.f32 0.0, %v1943
  %v1945 = vpop.f32.mrb[0].mxu0
  %1946 = vmatprep.mubr.bf16.mxu0 0
  %1947 = vmatmul.mubr.bf16.gmra.mrb[0].mxu0 %v1142
  %v1948 = vpop.f32.mrb[0].mxu0
  %v1949 = vadd.f32 0.0, %v1948
  %v1950 = vpop.f32.mrb[0].mxu0
  %v1951 = vpop.f32.mrb[0].mxu0
  %v1952 = vadd.f32 0.0, %v1951
  %v1953 = vpop.f32.mrb[0].mxu0
  %1954 = vmatprep.mubr.bf16.mxu0 0
  %1955 = vmatmul.mubr.bf16.gmra.mrb[0].mxu0 %v1145
  %v1956 = vpop.f32.mrb[0].mxu0
  %v1957 = vadd.f32 0.0, %v1956
  %v1958 = vpop.f32.mrb[0].mxu0
  %v1959 = vpop.f32.mrb[0].mxu0
  %v1960 = vadd.f32 0.0, %v1959
  %v1961 = vpop.f32.mrb[0].mxu0
  %1962 = vmatprep.mubr.bf16.mxu0 0
  %1963 = vmatmul.mubr.bf16.gmra.mrb[0].mxu0 %v1148
  %v1964 = vpop.f32.mrb[0].mxu0
  %v1965 = vadd.f32 0.0, %v1964
  %v1966 = vpop.f32.mrb[0].mxu0
  %v1967 = vpop.f32.mrb[0].mxu0
  %v1968 = vadd.f32 0.0, %v1967
  %v1969 = vpop.f32.mrb[0].mxu0
  %1970 = vmatprep.mubr.bf16.mxu0 0
  %1971 = vmatmul.mubr.bf16.gmra.mrb[0].mxu0 %v1151
  %v1972 = vpop.f32.mrb[0].mxu0
  %v1973 = vadd.f32 0.0, %v1972
  %v1974 = vpop.f32.mrb[0].mxu0
  %v1975 = vpop.f32.mrb[0].mxu0
  %v1976 = vadd.f32 0.0, %v1975
  %v1977 = vpop.f32.mrb[0].mxu0
  %1978 = vmatprep.mubr.bf16.mxu0 0
  %1979 = vmatmul.mubr.bf16.gmra.mrb[0].mxu0 %v1154
  %v1980 = vpop.f32.mrb[0].mxu0
  %v1981 = vadd.f32 0.0, %v1980
  %v1982 = vpop.f32.mrb[0].mxu0
  %v1983 = vpop.f32.mrb[0].mxu0
  %v1984 = vadd.f32 0.0, %v1983
  %v1985 = vpop.f32.mrb[0].mxu0
  %1986 = vmatprep.mubr.bf16.mxu0 0
  %1987 = vmatmul.mubr.bf16.gmra.mrb[0].mxu0 %v1157
  %v1988 = vpop.f32.mrb[0].mxu0
  %v1989 = vadd.f32 0.0, %v1988
  %v1990 = vpop.f32.mrb[0].mxu0
  %v1991 = vpop.f32.mrb[0].mxu0
  %v1992 = vadd.f32 0.0, %v1991
  %v1993 = vpop.f32.mrb[0].mxu0
  %1994 = vmatprep.mubr.bf16.mxu0 0
  %1995 = vmatmul.mubr.bf16.gmra.mrb[0].mxu0 %v1160
  %v1996 = vpop.f32.mrb[0].mxu0
  %v1997 = vadd.f32 0.0, %v1996
  %v1998 = vpop.f32.mrb[0].mxu0
  %v1999 = vpop.f32.mrb[0].mxu0
  %v2000 = vadd.f32 0.0, %v1999
  %v2001 = vpop.f32.mrb[0].mxu0
  %2002 = vmatprep.mubr.bf16.mxu0 0
  %2003 = vmatmul.mubr.bf16.gmra.mrb[0].mxu0 %v1163
  %v2004 = vpop.f32.mrb[0].mxu0
  %v2005 = vadd.f32 0.0, %v2004
  %v2006 = vpop.f32.mrb[0].mxu0
  %v2007 = vpop.f32.mrb[0].mxu0
  %v2008 = vadd.f32 0.0, %v2007
  %v2009 = vpop.f32.mrb[0].mxu0
  %2010 = vmatprep.mubr.bf16.mxu0 0
  %2011 = vmatmul.mubr.bf16.gmra.mrb[0].mxu0 %v1166
  %v2012 = vpop.f32.mrb[0].mxu0
  %v2013 = vadd.f32 0.0, %v2012
  %v2014 = vpop.f32.mrb[0].mxu0
  %v2015 = vpop.f32.mrb[0].mxu0
  %v2016 = vadd.f32 0.0, %v2015
  %v2017 = vpop.f32.mrb[0].mxu0
  %2018 = vmatprep.mubr.bf16.mxu0 0
  %2019 = vmatmul.mubr.bf16.gmra.mrb[0].mxu0 %v1169
  %v2020 = vpop.f32.mrb[0].mxu0
  %v2021 = vadd.f32 0.0, %v2020
  %v2022 = vpop.f32.mrb[0].mxu0
  %v2023 = vpop.f32.mrb[0].mxu0
  %v2024 = vadd.f32 0.0, %v2023
  %v2025 = vpop.f32.mrb[0].mxu0
  %2026 = vmatprep.mubr.bf16.mxu0 0
  %2027 = vmatmul.mubr.bf16.gmra.mrb[0].mxu0 %v1172
  %v2028 = vpop.f32.mrb[0].mxu0
  %v2029 = vadd.f32 0.0, %v2028
  %v2030 = vpop.f32.mrb[0].mxu0
  %v2031 = vpop.f32.mrb[0].mxu0
  %v2032 = vadd.f32 0.0, %v2031
  %v2033 = vpop.f32.mrb[0].mxu0
  %2034 = vmatprep.mubr.bf16.mxu0 0
  %2035 = vmatmul.mubr.bf16.gmra.mrb[0].mxu0 %v1175
  %v2036 = vpop.f32.mrb[0].mxu0
  %v2037 = vadd.f32 0.0, %v2036
  %v2038 = vpop.f32.mrb[0].mxu0
  %v2039 = vpop.f32.mrb[0].mxu0
  %v2040 = vadd.f32 0.0, %v2039
  %v2041 = vpop.f32.mrb[0].mxu0
  %2042 = vmatprep.mubr.bf16.mxu0 0
  %2043 = vmatmul.mubr.bf16.gmra.mrb[0].mxu0 %v1178
  %v2044 = vpop.f32.mrb[0].mxu0
  %v2045 = vadd.f32 0.0, %v2044
  %v2046 = vpop.f32.mrb[0].mxu0
  %v2047 = vpop.f32.mrb[0].mxu0
  %v2048 = vadd.f32 0.0, %v2047
  %v2049 = vpop.f32.mrb[0].mxu0
  %2050 = vmatprep.mubr.bf16.mxu0 0
  %2051 = vmatmul.mubr.bf16.gmra.mrb[0].mxu0 %v1181
  %v2052 = vpop.f32.mrb[0].mxu0
  %v2053 = vadd.f32 0.0, %v2052
  %v2054 = vpop.f32.mrb[0].mxu0
  %v2055 = vpop.f32.mrb[0].mxu0
  %v2056 = vadd.f32 0.0, %v2055
  %v2057 = vpop.f32.mrb[0].mxu0
  %2058 = vmatprep.mubr.bf16.mxu0 0
  %2059 = vmatmul.mubr.bf16.gmra.mrb[0].mxu0 %v1184
  %v2060 = vpop.f32.mrb[0].mxu0
  %v2061 = vadd.f32 0.0, %v2060
  %v2062 = vpop.f32.mrb[0].mxu0
  %v2063 = vpop.f32.mrb[0].mxu0
  %v2064 = vadd.f32 0.0, %v2063
  %v2065 = vpop.f32.mrb[0].mxu0
  %2066 = vmatprep.mubr.bf16.mxu0 0
  %2067 = vmatmul.mubr.bf16.gmra.mrb[0].mxu0 %v1187
  %v2068 = vpop.f32.mrb[0].mxu0
  %v2069 = vadd.f32 0.0, %v2068
  %v2070 = vpop.f32.mrb[0].mxu0
  %v2071 = vpop.f32.mrb[0].mxu0
  %v2072 = vadd.f32 0.0, %v2071
  %v2073 = vpop.f32.mrb[0].mxu0
  %2074 = vmatprep.mubr.bf16.mxu0 0
  %2075 = vmatmul.mubr.bf16.gmra.mrb[0].mxu0 %v1190
  %v2076 = vpop.f32.mrb[0].mxu0
  %v2077 = vadd.f32 0.0, %v2076
  %v2078 = vpop.f32.mrb[0].mxu0
  %v2079 = vpop.f32.mrb[0].mxu0
  %v2080 = vadd.f32 0.0, %v2079
  %v2081 = vpop.f32.mrb[0].mxu0
  %2082 = vmatprep.mubr.bf16.mxu0 0
  %2083 = vmatmul.mubr.bf16.gmra.mrb[0].mxu0 %v1193
  %v2084 = vpop.f32.mrb[0].mxu0
  %v2085 = vadd.f32 0.0, %v2084
  %v2086 = vpop.f32.mrb[0].mxu0
  %v2087 = vpop.f32.mrb[0].mxu0
  %v2088 = vadd.f32 0.0, %v2087
  %v2089 = vpop.f32.mrb[0].mxu0
  %2090 = vmatprep.mubr.bf16.mxu0 0
  %2091 = vmatmul.mubr.bf16.gmra.mrb[0].mxu0 %v1196
  %v2092 = vpop.f32.mrb[0].mxu0
  %v2093 = vadd.f32 0.0, %v2092
  %v2094 = vpop.f32.mrb[0].mxu0
  %v2095 = vpop.f32.mrb[0].mxu0
  %v2096 = vadd.f32 0.0, %v2095
  %v2097 = vpop.f32.mrb[0].mxu0
  %2098 = vmatprep.mubr.bf16.mxu0 0
  %2099 = vmatmul.mubr.bf16.gmra.mrb[0].mxu0 %v1199
  %v2100 = vpop.f32.mrb[0].mxu0
  %v2101 = vadd.f32 0.0, %v2100
  %v2102 = vpop.f32.mrb[0].mxu0
  %v2103 = vpop.f32.mrb[0].mxu0
  %v2104 = vadd.f32 0.0, %v2103
  %v2105 = vpop.f32.mrb[0].mxu0
  %2106 = vmatprep.mubr.bf16.mxu0 0
  %2107 = vmatmul.mubr.bf16.gmra.mrb[0].mxu0 %v1202
  %v2108 = vpop.f32.mrb[0].mxu0
  %v2109 = vadd.f32 0.0, %v2108
  %v2110 = vpop.f32.mrb[0].mxu0
  %v2111 = vpop.f32.mrb[0].mxu0
  %v2112 = vadd.f32 0.0, %v2111
  %v2113 = vpop.f32.mrb[0].mxu0
  %2114 = vmatprep.mubr.bf16.mxu0 0
  %2115 = vmatmul.mubr.bf16.gmra.mrb[0].mxu0 %v1205
  %v2116 = vpop.f32.mrb[0].mxu0
  %v2117 = vadd.f32 0.0, %v2116
  %v2118 = vpop.f32.mrb[0].mxu0
  %v2119 = vpop.f32.mrb[0].mxu0
  %v2120 = vadd.f32 0.0, %v2119
  %v2121 = vpop.f32.mrb[0].mxu0
  %2122 = vmatprep.mubr.bf16.mxu0 0
  %2123 = vmatmul.mubr.bf16.gmra.mrb[0].mxu0 %v1208
  %v2124 = vpop.f32.mrb[0].mxu0
  %v2125 = vadd.f32 0.0, %v2124
  %v2126 = vpop.f32.mrb[0].mxu0
  %v2127 = vpop.f32.mrb[0].mxu0
  %v2128 = vadd.f32 0.0, %v2127
  %v2129 = vpop.f32.mrb[0].mxu0
  %2130 = vmatprep.mubr.bf16.mxu0 0
  %2131 = vmatmul.mubr.bf16.gmra.mrb[0].mxu0 %v1211
  %v2132 = vpop.f32.mrb[0].mxu0
  %v2133 = vadd.f32 0.0, %v2132
  %v2134 = vpop.f32.mrb[0].mxu0
  %v2135 = vpop.f32.mrb[0].mxu0
  %v2136 = vadd.f32 0.0, %v2135
  %v2137 = vpop.f32.mrb[0].mxu0
  %2138 = vmatprep.mubr.bf16.mxu0 0
  %2139 = vmatmul.mubr.bf16.gmra.mrb[0].mxu0 %v1214
  %v2140 = vpop.f32.mrb[0].mxu0
  %v2141 = vadd.f32 0.0, %v2140
  %v2142 = vpop.f32.mrb[0].mxu0
  %v2143 = vpop.f32.mrb[0].mxu0
  %v2144 = vadd.f32 0.0, %v2143
  %v2145 = vpop.f32.mrb[0].mxu0
  %2146 = vmatprep.mubr.bf16.mxu0 0
  %2147 = vmatmul.mubr.bf16.gmra.mrb[0].mxu0 %v1217
  %v2148 = vpop.f32.mrb[0].mxu0
  %v2149 = vadd.f32 0.0, %v2148
  %v2150 = vpop.f32.mrb[0].mxu0
  %v2151 = vpop.f32.mrb[0].mxu0
  %v2152 = vadd.f32 0.0, %v2151
  %v2153 = vpop.f32.mrb[0].mxu0
  %2154 = vmatprep.mubr.bf16.mxu0 0
  %2155 = vmatmul.mubr.bf16.gmra.mrb[0].mxu0 %v1220
  %v2156 = vpop.f32.mrb[0].mxu0
  %v2157 = vadd.f32 0.0, %v2156
  %v2158 = vpop.f32.mrb[0].mxu0
  %v2159 = vpop.f32.mrb[0].mxu0
  %v2160 = vadd.f32 0.0, %v2159
  %v2161 = vpop.f32.mrb[0].mxu0
  %2162 = vmatprep.mubr.bf16.mxu0 0
  %2163 = vmatmul.mubr.bf16.gmra.mrb[0].mxu0 %v1223
  %v2164 = vpop.f32.mrb[0].mxu0
  %v2165 = vadd.f32 0.0, %v2164
  %v2166 = vpop.f32.mrb[0].mxu0
  %v2167 = vpop.f32.mrb[0].mxu0
  %v2168 = vadd.f32 0.0, %v2167
  %v2169 = vpop.f32.mrb[0].mxu0
  %2170 = vmatprep.mubr.bf16.mxu0 0
  %2171 = vmatmul.mubr.bf16.gmra.mrb[0].mxu0 %v1226
  %v2172 = vpop.f32.mrb[0].mxu0
  %v2173 = vadd.f32 0.0, %v2172
  %v2174 = vpop.f32.mrb[0].mxu0
  %v2175 = vpop.f32.mrb[0].mxu0
  %v2176 = vadd.f32 0.0, %v2175
  %v2177 = vpop.f32.mrb[0].mxu0
  %2178 = vmatprep.mubr.bf16.mxu0 0
  %2179 = vmatmul.mubr.bf16.gmra.mrb[0].mxu0 %v1229
  %v2180 = vpop.f32.mrb[0].mxu0
  %v2181 = vadd.f32 0.0, %v2180
  %v2182 = vpop.f32.mrb[0].mxu0
  %v2183 = vpop.f32.mrb[0].mxu0
  %v2184 = vadd.f32 0.0, %v2183
  %v2185 = vpop.f32.mrb[0].mxu0
  %2186 = vmatprep.mubr.bf16.mxu0 0
  %2187 = vmatmul.mubr.bf16.gmra.mrb[0].mxu0 %v1232
  %v2188 = vpop.f32.mrb[0].mxu0
  %v2189 = vadd.f32 0.0, %v2188
  %v2190 = vpop.f32.mrb[0].mxu0
  %v2191 = vpop.f32.mrb[0].mxu0
  %v2192 = vadd.f32 0.0, %v2191
  %v2193 = vpop.f32.mrb[0].mxu0
  %2194 = vmatprep.mubr.bf16.mxu0 0
  %2195 = vmatmul.mubr.bf16.gmra.mrb[0].mxu0 %v1235
  %v2196 = vpop.f32.mrb[0].mxu0
  %v2197 = vadd.f32 0.0, %v2196
  %v2198 = vpop.f32.mrb[0].mxu0
  %v2199 = vpop.f32.mrb[0].mxu0
  %v2200 = vadd.f32 0.0, %v2199
  %v2201 = vpop.f32.mrb[0].mxu0
  %2202 = vmatprep.mubr.bf16.mxu0 0
  %2203 = vmatmul.mubr.bf16.gmra.mrb[0].mxu0 %v1238
  %v2204 = vpop.f32.mrb[0].mxu0
  %v2205 = vadd.f32 0.0, %v2204
  %v2206 = vpop.f32.mrb[0].mxu0
  %v2207 = vpop.f32.mrb[0].mxu0
  %v2208 = vadd.f32 0.0, %v2207
  %v2209 = vpop.f32.mrb[0].mxu0
  %2210 = vmatprep.mubr.bf16.mxu0 0
  %2211 = vmatmul.mubr.bf16.gmra.mrb[0].mxu0 %v1241
  %v2212 = vpop.f32.mrb[0].mxu0
  %v2213 = vadd.f32 0.0, %v2212
  %v2214 = vpop.f32.mrb[0].mxu0
  %v2215 = vpop.f32.mrb[0].mxu0
  %v2216 = vadd.f32 0.0, %v2215
  %v2217 = vpop.f32.mrb[0].mxu0
  %2218 = vmatprep.mubr.bf16.mxu0 0
  %2219 = vmatmul.mubr.bf16.gmra.mrb[0].mxu0 %v1244
  %v2220 = vpop.f32.mrb[0].mxu0
  %v2221 = vadd.f32 0.0, %v2220
  %v2222 = vpop.f32.mrb[0].mxu0
  %v2223 = vpop.f32.mrb[0].mxu0
  %v2224 = vadd.f32 0.0, %v2223
  %v2225 = vpop.f32.mrb[0].mxu0
  %2226 = vmatprep.mubr.bf16.mxu0 0
  %2227 = vmatmul.mubr.bf16.gmra.mrb[0].mxu0 %v1247
  %v2228 = vpop.f32.mrb[0].mxu0
  %v2229 = vadd.f32 0.0, %v2228
  %v2230 = vpop.f32.mrb[0].mxu0
  %v2231 = vpop.f32.mrb[0].mxu0
  %v2232 = vadd.f32 0.0, %v2231
  %v2233 = vpop.f32.mrb[0].mxu0
  %2234 = vmatprep.mubr.bf16.mxu0 0
  %2235 = vmatmul.mubr.bf16.gmra.mrb[0].mxu0 %v1250
  %v2236 = vpop.f32.mrb[0].mxu0
  %v2237 = vadd.f32 0.0, %v2236
  %v2238 = vpop.f32.mrb[0].mxu0
  %v2239 = vpop.f32.mrb[0].mxu0
  %v2240 = vadd.f32 0.0, %v2239
  %v2241 = vpop.f32.mrb[0].mxu0
  %2242 = vmatprep.mubr.bf16.mxu0 0
  %2243 = vmatmul.mubr.bf16.gmra.mrb[0].mxu0 %v1253
  %v2244 = vpop.f32.mrb[0].mxu0
  %v2245 = vadd.f32 0.0, %v2244
  %v2246 = vpop.f32.mrb[0].mxu0
  %v2247 = vpop.f32.mrb[0].mxu0
  %v2248 = vadd.f32 0.0, %v2247
  %v2249 = vpop.f32.mrb[0].mxu0
  %2250 = vmatprep.mubr.bf16.mxu0 0
  %2251 = vmatmul.mubr.bf16.gmra.mrb[0].mxu0 %v1256
  %v2252 = vpop.f32.mrb[0].mxu0
  %v2253 = vadd.f32 0.0, %v2252
  %v2254 = vpop.f32.mrb[0].mxu0
  %v2255 = vpop.f32.mrb[0].mxu0
  %v2256 = vadd.f32 0.0, %v2255
  %v2257 = vpop.f32.mrb[0].mxu0
  %2258 = vmatprep.mubr.bf16.mxu0 0
  %2259 = vmatmul.mubr.bf16.gmra.mrb[0].mxu0 %v1259
  %v2260 = vpop.f32.mrb[0].mxu0
  %v2261 = vadd.f32 0.0, %v2260
  %v2262 = vpop.f32.mrb[0].mxu0
  %v2263 = vpop.f32.mrb[0].mxu0
  %v2264 = vadd.f32 0.0, %v2263
  %v2265 = vpop.f32.mrb[0].mxu0
  %2266 = vmatprep.mubr.bf16.mxu0 0
  %2267 = vmatmul.mubr.bf16.gmra.mrb[0].mxu0 %v1262
  %v2268 = vpop.f32.mrb[0].mxu0
  %v2269 = vadd.f32 0.0, %v2268
  %v2270 = vpop.f32.mrb[0].mxu0
  %v2271 = vpop.f32.mrb[0].mxu0
  %v2272 = vadd.f32 0.0, %v2271
  %v2273 = vpop.f32.mrb[0].mxu0
  %2274 = vmatprep.mubr.bf16.mxu0 0
  %2275 = vmatmul.mubr.bf16.gmra.mrb[0].mxu0 %v1265
  %v2276 = vpop.f32.mrb[0].mxu0
  %v2277 = vadd.f32 0.0, %v2276
  %v2278 = vpop.f32.mrb[0].mxu0
  %v2279 = vpop.f32.mrb[0].mxu0
  %v2280 = vadd.f32 0.0, %v2279
  %v2281 = vpop.f32.mrb[0].mxu0
  %2282 = vmatprep.mubr.bf16.mxu0 0
  %2283 = vmatmul.mubr.bf16.gmra.mrb[0].mxu0 %v1268
  %v2284 = vpop.f32.mrb[0].mxu0
  %v2285 = vadd.f32 0.0, %v2284
  %v2286 = vpop.f32.mrb[0].mxu0
  %v2287 = vpop.f32.mrb[0].mxu0
  %v2288 = vadd.f32 0.0, %v2287
  %v2289 = vpop.f32.mrb[0].mxu0
  %2290 = vmatprep.mubr.bf16.mxu0 0
  %2291 = vmatmul.mubr.bf16.gmra.mrb[0].mxu0 %v1271
  %v2292 = vpop.f32.mrb[0].mxu0
  %v2293 = vadd.f32 0.0, %v2292
  %v2294 = vpop.f32.mrb[0].mxu0
  %v2295 = vpop.f32.mrb[0].mxu0
  %v2296 = vadd.f32 0.0, %v2295
  %v2297 = vpop.f32.mrb[0].mxu0
  %2298 = vmatprep.mubr.bf16.mxu0 0
  %2299 = vmatmul.mubr.bf16.gmra.mrb[0].mxu0 %v1274
  %v2300 = vpop.f32.mrb[0].mxu0
  %v2301 = vadd.f32 0.0, %v2300
  %v2302 = vpop.f32.mrb[0].mxu0
  %v2303 = vpop.f32.mrb[0].mxu0
  %v2304 = vadd.f32 0.0, %v2303
  %v2305 = vpop.f32.mrb[0].mxu0
  %2306 = vmatprep.mubr.bf16.mxu0 0
  %2307 = vmatmul.mubr.bf16.gmra.mrb[0].mxu0 %v1277
  %v2308 = vpop.f32.mrb[0].mxu0
  %v2309 = vadd.f32 0.0, %v2308
  %v2310 = vpop.f32.mrb[0].mxu0
  %v2311 = vpop.f32.mrb[0].mxu0
  %v2312 = vadd.f32 0.0, %v2311
  %v2313 = vpop.f32.mrb[0].mxu0
  %2314 = vmatprep.mubr.bf16.mxu0 0
  %2315 = vmatmul.mubr.bf16.gmra.mrb[0].mxu0 %v1280
  %v2316 = vpop.f32.mrb[0].mxu0
  %v2317 = vadd.f32 0.0, %v2316
  %v2318 = vpop.f32.mrb[0].mxu0
  %v2319 = vpop.f32.mrb[0].mxu0
  %v2320 = vadd.f32 0.0, %v2319
  %v2321 = vpop.f32.mrb[0].mxu0
  %2322 = vmatprep.mubr.bf16.mxu0 0
  %2323 = vmatmul.mubr.bf16.gmra.mrb[0].mxu0 %v1283
  %v2324 = vpop.f32.mrb[0].mxu0
  %v2325 = vadd.f32 0.0, %v2324
  %v2326 = vpop.f32.mrb[0].mxu0
  %v2327 = vpop.f32.mrb[0].mxu0
  %v2328 = vadd.f32 0.0, %v2327
  %v2329 = vpop.f32.mrb[0].mxu0
  %2330 = vmatprep.mubr.bf16.mxu0 0
  %2331 = vmatmul.mubr.bf16.gmra.mrb[0].mxu0 %v1286
  %v2332 = vpop.f32.mrb[0].mxu0
  %v2333 = vadd.f32 0.0, %v2332
  %v2334 = vpop.f32.mrb[0].mxu0
  %v2335 = vpop.f32.mrb[0].mxu0
  %v2336 = vadd.f32 0.0, %v2335
  %v2337 = vpop.f32.mrb[0].mxu0
  %2338 = vmatprep.mubr.bf16.mxu0 0
  %2339 = vmatmul.mubr.bf16.gmra.mrb[0].mxu0 %v1289
  %v2340 = vpop.f32.mrb[0].mxu0
  %v2341 = vadd.f32 0.0, %v2340
  %v2342 = vpop.f32.mrb[0].mxu0
  %v2343 = vpop.f32.mrb[0].mxu0
  %v2344 = vadd.f32 0.0, %v2343
  %v2345 = vpop.f32.mrb[0].mxu0
  %2346 = vmatprep.mubr.bf16.mxu0 0
  %2347 = vmatmul.mubr.bf16.gmra.mrb[0].mxu0 %v1292
  %v2348 = vpop.f32.mrb[0].mxu0
  %v2349 = vadd.f32 0.0, %v2348
  %v2350 = vpop.f32.mrb[0].mxu0
  %v2351 = vpop.f32.mrb[0].mxu0
  %v2352 = vadd.f32 0.0, %v2351
  %v2353 = vpop.f32.mrb[0].mxu0
  %2354 = vdwg.mxu0
  %2355 = vst [vmem:[%s2] sm:$0xff] %v1333
  %2356 = vst [vmem:[%s2 + $0x8] sm:$0xff] %v1336
  %2357 = vst [vmem:[%s2 + $0x10] sm:$0xff] %v1341
  %2358 = vst [vmem:[%s2 + $0x18] sm:$0xff] %v1344
  %2359 = vst [vmem:[%s2 + $0x20] sm:$0xff] %v1349
  %2360 = vst [vmem:[%s2 + $0x28] sm:$0xff] %v1352
  %2361 = vst [vmem:[%s2 + $0x30] sm:$0xff] %v1357
  %2362 = vst [vmem:[%s2 + $0x38] sm:$0xff] %v1360
  %2363 = vst [vmem:[%s2 + $0x40] sm:$0xff] %v1365
  %2364 = vst [vmem:[%s2 + $0x48] sm:$0xff] %v1368
  %2365 = vst [vmem:[%s2 + $0x50] sm:$0xff] %v1373
  %2366 = vst [vmem:[%s2 + $0x58] sm:$0xff] %v1376
  %2367 = vst [vmem:[%s2 + $0x60] sm:$0xff] %v1381
  %2368 = vst [vmem:[%s2 + $0x68] sm:$0xff] %v1384
  %2369 = vst [vmem:[%s2 + $0x70] sm:$0xff] %v1389
  %2370 = vst [vmem:[%s2 + $0x78] sm:$0xff] %v1392
  %2371 = vst [vmem:[%s2 + $0x80] sm:$0xff] %v1397
  %2372 = vst [vmem:[%s2 + $0x88] sm:$0xff] %v1400
  %2373 = vst [vmem:[%s2 + $0x90] sm:$0xff] %v1405
  %2374 = vst [vmem:[%s2 + $0x98] sm:$0xff] %v1408
  %2375 = vst [vmem:[%s2 + $0xa0] sm:$0xff] %v1413
  %2376 = vst [vmem:[%s2 + $0xa8] sm:$0xff] %v1416
  %2377 = vst [vmem:[%s2 + $0xb0] sm:$0xff] %v1421
  %2378 = vst [vmem:[%s2 + $0xb8] sm:$0xff] %v1424
  %2379 = vst [vmem:[%s2 + $0xc0] sm:$0xff] %v1429
  %2380 = vst [vmem:[%s2 + $0xc8] sm:$0xff] %v1432
  %2381 = vst [vmem:[%s2 + $0xd0] sm:$0xff] %v1437
  %2382 = vst [vmem:[%s2 + $0xd8] sm:$0xff] %v1440
  %2383 = vst [vmem:[%s2 + $0xe0] sm:$0xff] %v1445
  %2384 = vst [vmem:[%s2 + $0xe8] sm:$0xff] %v1448
  %2385 = vst [vmem:[%s2 + $0xf0] sm:$0xff] %v1453
  %2386 = vst [vmem:[%s2 + $0xf8] sm:$0xff] %v1456
  %2387 = vst [vmem:[%s2 + $0x100] sm:$0xff] %v1461
  %2388 = vst [vmem:[%s2 + $0x108] sm:$0xff] %v1464
  %2389 = vst [vmem:[%s2 + $0x110] sm:$0xff] %v1469
  %2390 = vst [vmem:[%s2 + $0x118] sm:$0xff] %v1472
  %2391 = vst [vmem:[%s2 + $0x120] sm:$0xff] %v1477
  %2392 = vst [vmem:[%s2 + $0x128] sm:$0xff] %v1480
  %2393 = vst [vmem:[%s2 + $0x130] sm:$0xff] %v1485
  %2394 = vst [vmem:[%s2 + $0x138] sm:$0xff] %v1488
  %2395 = vst [vmem:[%s2 + $0x140] sm:$0xff] %v1493
  %2396 = vst [vmem:[%s2 + $0x148] sm:$0xff] %v1496
  %2397 = vst [vmem:[%s2 + $0x150] sm:$0xff] %v1501
  %2398 = vst [vmem:[%s2 + $0x158] sm:$0xff] %v1504
  %2399 = vst [vmem:[%s2 + $0x160] sm:$0xff] %v1509
  %2400 = vst [vmem:[%s2 + $0x168] sm:$0xff] %v1512
  %2401 = vst [vmem:[%s2 + $0x170] sm:$0xff] %v1517
  %2402 = vst [vmem:[%s2 + $0x178] sm:$0xff] %v1520
  %2403 = vst [vmem:[%s2 + $0x180] sm:$0xff] %v1525
  %2404 = vst [vmem:[%s2 + $0x188] sm:$0xff] %v1528
  %2405 = vst [vmem:[%s2 + $0x190] sm:$0xff] %v1533
  %2406 = vst [vmem:[%s2 + $0x198] sm:$0xff] %v1536
  %2407 = vst [vmem:[%s2 + $0x1a0] sm:$0xff] %v1541
  %2408 = vst [vmem:[%s2 + $0x1a8] sm:$0xff] %v1544
  %2409 = vst [vmem:[%s2 + $0x1b0] sm:$0xff] %v1549
  %2410 = vst [vmem:[%s2 + $0x1b8] sm:$0xff] %v1552
  %2411 = vst [vmem:[%s2 + $0x1c0] sm:$0xff] %v1557
  %2412 = vst [vmem:[%s2 + $0x1c8] sm:$0xff] %v1560
  %2413 = vst [vmem:[%s2 + $0x1d0] sm:$0xff] %v1565
  %2414 = vst [vmem:[%s2 + $0x1d8] sm:$0xff] %v1568
  %2415 = vst [vmem:[%s2 + $0x1e0] sm:$0xff] %v1573
  %2416 = vst [vmem:[%s2 + $0x1e8] sm:$0xff] %v1576
  %2417 = vst [vmem:[%s2 + $0x1f0] sm:$0xff] %v1581
  %2418 = vst [vmem:[%s2 + $0x1f8] sm:$0xff] %v1584
  %2419 = vst [vmem:[%s2 + $0x200] sm:$0xff] %v1589
  %2420 = vst [vmem:[%s2 + $0x208] sm:$0xff] %v1592
  %2421 = vst [vmem:[%s2 + $0x210] sm:$0xff] %v1597
  %2422 = vst [vmem:[%s2 + $0x218] sm:$0xff] %v1600
  %2423 = vst [vmem:[%s2 + $0x220] sm:$0xff] %v1605
  %2424 = vst [vmem:[%s2 + $0x228] sm:$0xff] %v1608
  %2425 = vst [vmem:[%s2 + $0x230] sm:$0xff] %v1613
  %2426 = vst [vmem:[%s2 + $0x238] sm:$0xff] %v1616
  %2427 = vst [vmem:[%s2 + $0x240] sm:$0xff] %v1621
  %2428 = vst [vmem:[%s2 + $0x248] sm:$0xff] %v1624
  %2429 = vst [vmem:[%s2 + $0x250] sm:$0xff] %v1629
  %2430 = vst [vmem:[%s2 + $0x258] sm:$0xff] %v1632
  %2431 = vst [vmem:[%s2 + $0x260] sm:$0xff] %v1637
  %2432 = vst [vmem:[%s2 + $0x268] sm:$0xff] %v1640
  %2433 = vst [vmem:[%s2 + $0x270] sm:$0xff] %v1645
  %2434 = vst [vmem:[%s2 + $0x278] sm:$0xff] %v1648
  %2435 = vst [vmem:[%s2 + $0x280] sm:$0xff] %v1653
  %2436 = vst [vmem:[%s2 + $0x288] sm:$0xff] %v1656
  %2437 = vst [vmem:[%s2 + $0x290] sm:$0xff] %v1661
  %2438 = vst [vmem:[%s2 + $0x298] sm:$0xff] %v1664
  %2439 = vst [vmem:[%s2 + $0x2a0] sm:$0xff] %v1669
  %2440 = vst [vmem:[%s2 + $0x2a8] sm:$0xff] %v1672
  %2441 = vst [vmem:[%s2 + $0x2b0] sm:$0xff] %v1677
  %2442 = vst [vmem:[%s2 + $0x2b8] sm:$0xff] %v1680
  %2443 = vst [vmem:[%s2 + $0x2c0] sm:$0xff] %v1685
  %2444 = vst [vmem:[%s2 + $0x2c8] sm:$0xff] %v1688
  %2445 = vst [vmem:[%s2 + $0x2d0] sm:$0xff] %v1693
  %2446 = vst [vmem:[%s2 + $0x2d8] sm:$0xff] %v1696
  %2447 = vst [vmem:[%s2 + $0x2e0] sm:$0xff] %v1701
  %2448 = vst [vmem:[%s2 + $0x2e8] sm:$0xff] %v1704
  %2449 = vst [vmem:[%s2 + $0x2f0] sm:$0xff] %v1709
  %2450 = vst [vmem:[%s2 + $0x2f8] sm:$0xff] %v1712
  %2451 = vst [vmem:[%s2 + $0x300] sm:$0xff] %v1717
  %2452 = vst [vmem:[%s2 + $0x308] sm:$0xff] %v1720
  %2453 = vst [vmem:[%s2 + $0x310] sm:$0xff] %v1725
  %2454 = vst [vmem:[%s2 + $0x318] sm:$0xff] %v1728
  %2455 = vst [vmem:[%s2 + $0x320] sm:$0xff] %v1733
  %2456 = vst [vmem:[%s2 + $0x328] sm:$0xff] %v1736
  %2457 = vst [vmem:[%s2 + $0x330] sm:$0xff] %v1741
  %2458 = vst [vmem:[%s2 + $0x338] sm:$0xff] %v1744
  %2459 = vst [vmem:[%s2 + $0x340] sm:$0xff] %v1749
  %2460 = vst [vmem:[%s2 + $0x348] sm:$0xff] %v1752
  %2461 = vst [vmem:[%s2 + $0x350] sm:$0xff] %v1757
  %2462 = vst [vmem:[%s2 + $0x358] sm:$0xff] %v1760
  %2463 = vst [vmem:[%s2 + $0x360] sm:$0xff] %v1765
  %2464 = vst [vmem:[%s2 + $0x368] sm:$0xff] %v1768
  %2465 = vst [vmem:[%s2 + $0x370] sm:$0xff] %v1773
  %2466 = vst [vmem:[%s2 + $0x378] sm:$0xff] %v1776
  %2467 = vst [vmem:[%s2 + $0x380] sm:$0xff] %v1781
  %2468 = vst [vmem:[%s2 + $0x388] sm:$0xff] %v1784
  %2469 = vst [vmem:[%s2 + $0x390] sm:$0xff] %v1789
  %2470 = vst [vmem:[%s2 + $0x398] sm:$0xff] %v1792
  %2471 = vst [vmem:[%s2 + $0x3a0] sm:$0xff] %v1797
  %2472 = vst [vmem:[%s2 + $0x3a8] sm:$0xff] %v1800
  %2473 = vst [vmem:[%s2 + $0x3b0] sm:$0xff] %v1805
  %2474 = vst [vmem:[%s2 + $0x3b8] sm:$0xff] %v1808
  %2475 = vst [vmem:[%s2 + $0x3c0] sm:$0xff] %v1813
  %2476 = vst [vmem:[%s2 + $0x3c8] sm:$0xff] %v1816
  %2477 = vst [vmem:[%s2 + $0x3d0] sm:$0xff] %v1821
  %2478 = vst [vmem:[%s2 + $0x3d8] sm:$0xff] %v1824
  %2479 = vst [vmem:[%s2 + $0x3e0] sm:$0xff] %v1829
  %2480 = vst [vmem:[%s2 + $0x3e8] sm:$0xff] %v1832
  %2481 = vst [vmem:[%s2 + $0x3f0] sm:$0xff] %v1837
  %2482 = vst [vmem:[%s2 + $0x3f8] sm:$0xff] %v1840
  %2483 = vst [vmem:[%s2 + $0x400] sm:$0xff] %v1845
  %2484 = vst [vmem:[%s2 + $0x408] sm:$0xff] %v1848
  %2485 = vst [vmem:[%s2 + $0x410] sm:$0xff] %v1853
  %2486 = vst [vmem:[%s2 + $0x418] sm:$0xff] %v1856
  %2487 = vst [vmem:[%s2 + $0x420] sm:$0xff] %v1861
  %2488 = vst [vmem:[%s2 + $0x428] sm:$0xff] %v1864
  %2489 = vst [vmem:[%s2 + $0x430] sm:$0xff] %v1869
  %2490 = vst [vmem:[%s2 + $0x438] sm:$0xff] %v1872
  %2491 = vst [vmem:[%s2 + $0x440] sm:$0xff] %v1877
  %2492 = vst [vmem:[%s2 + $0x448] sm:$0xff] %v1880
  %2493 = vst [vmem:[%s2 + $0x450] sm:$0xff] %v1885
  %2494 = vst [vmem:[%s2 + $0x458] sm:$0xff] %v1888
  %2495 = vst [vmem:[%s2 + $0x460] sm:$0xff] %v1893
  %2496 = vst [vmem:[%s2 + $0x468] sm:$0xff] %v1896
  %2497 = vst [vmem:[%s2 + $0x470] sm:$0xff] %v1901
  %2498 = vst [vmem:[%s2 + $0x478] sm:$0xff] %v1904
  %2499 = vst [vmem:[%s2 + $0x480] sm:$0xff] %v1909
  %2500 = vst [vmem:[%s2 + $0x488] sm:$0xff] %v1912
  %2501 = vst [vmem:[%s2 + $0x490] sm:$0xff] %v1917
  %2502 = vst [vmem:[%s2 + $0x498] sm:$0xff] %v1920
  %2503 = vst [vmem:[%s2 + $0x4a0] sm:$0xff] %v1925
  %2504 = vst [vmem:[%s2 + $0x4a8] sm:$0xff] %v1928
  %2505 = vst [vmem:[%s2 + $0x4b0] sm:$0xff] %v1933
  %2506 = vst [vmem:[%s2 + $0x4b8] sm:$0xff] %v1936
  %2507 = vst [vmem:[%s2 + $0x4c0] sm:$0xff] %v1941
  %2508 = vst [vmem:[%s2 + $0x4c8] sm:$0xff] %v1944
  %2509 = vst [vmem:[%s2 + $0x4d0] sm:$0xff] %v1949
  %2510 = vst [vmem:[%s2 + $0x4d8] sm:$0xff] %v1952
  %2511 = vst [vmem:[%s2 + $0x4e0] sm:$0xff] %v1957
  %2512 = vst [vmem:[%s2 + $0x4e8] sm:$0xff] %v1960
  %2513 = vst [vmem:[%s2 + $0x4f0] sm:$0xff] %v1965
  %2514 = vst [vmem:[%s2 + $0x4f8] sm:$0xff] %v1968
  %2515 = vst [vmem:[%s2 + $0x500] sm:$0xff] %v1973
  %2516 = vst [vmem:[%s2 + $0x508] sm:$0xff] %v1976
  %2517 = vst [vmem:[%s2 + $0x510] sm:$0xff] %v1981
  %2518 = vst [vmem:[%s2 + $0x518] sm:$0xff] %v1984
  %2519 = vst [vmem:[%s2 + $0x520] sm:$0xff] %v1989
  %2520 = vst [vmem:[%s2 + $0x528] sm:$0xff] %v1992
  %2521 = vst [vmem:[%s2 + $0x530] sm:$0xff] %v1997
  %2522 = vst [vmem:[%s2 + $0x538] sm:$0xff] %v2000
  %2523 = vst [vmem:[%s2 + $0x540] sm:$0xff] %v2005
  %2524 = vst [vmem:[%s2 + $0x548] sm:$0xff] %v2008
  %2525 = vst [vmem:[%s2 + $0x550] sm:$0xff] %v2013
  %2526 = vst [vmem:[%s2 + $0x558] sm:$0xff] %v2016
  %2527 = vst [vmem:[%s2 + $0x560] sm:$0xff] %v2021
  %2528 = vst [vmem:[%s2 + $0x568] sm:$0xff] %v2024
  %2529 = vst [vmem:[%s2 + $0x570] sm:$0xff] %v2029
  %2530 = vst [vmem:[%s2 + $0x578] sm:$0xff] %v2032
  %2531 = vst [vmem:[%s2 + $0x580] sm:$0xff] %v2037
  %2532 = vst [vmem:[%s2 + $0x588] sm:$0xff] %v2040
  %2533 = vst [vmem:[%s2 + $0x590] sm:$0xff] %v2045
  %2534 = vst [vmem:[%s2 + $0x598] sm:$0xff] %v2048
  %2535 = vst [vmem:[%s2 + $0x5a0] sm:$0xff] %v2053
  %2536 = vst [vmem:[%s2 + $0x5a8] sm:$0xff] %v2056
  %2537 = vst [vmem:[%s2 + $0x5b0] sm:$0xff] %v2061
  %2538 = vst [vmem:[%s2 + $0x5b8] sm:$0xff] %v2064
  %2539 = vst [vmem:[%s2 + $0x5c0] sm:$0xff] %v2069
  %2540 = vst [vmem:[%s2 + $0x5c8] sm:$0xff] %v2072
  %2541 = vst [vmem:[%s2 + $0x5d0] sm:$0xff] %v2077
  %2542 = vst [vmem:[%s2 + $0x5d8] sm:$0xff] %v2080
  %2543 = vst [vmem:[%s2 + $0x5e0] sm:$0xff] %v2085
  %2544 = vst [vmem:[%s2 + $0x5e8] sm:$0xff] %v2088
  %2545 = vst [vmem:[%s2 + $0x5f0] sm:$0xff] %v2093
  %2546 = vst [vmem:[%s2 + $0x5f8] sm:$0xff] %v2096
  %2547 = vst [vmem:[%s2 + $0x600] sm:$0xff] %v2101
  %2548 = vst [vmem:[%s2 + $0x608] sm:$0xff] %v2104
  %2549 = vst [vmem:[%s2 + $0x610] sm:$0xff] %v2109
  %2550 = vst [vmem:[%s2 + $0x618] sm:$0xff] %v2112
  %2551 = vst [vmem:[%s2 + $0x620] sm:$0xff] %v2117
  %2552 = vst [vmem:[%s2 + $0x628] sm:$0xff] %v2120
  %2553 = vst [vmem:[%s2 + $0x630] sm:$0xff] %v2125
  %2554 = vst [vmem:[%s2 + $0x638] sm:$0xff] %v2128
  %2555 = vst [vmem:[%s2 + $0x640] sm:$0xff] %v2133
  %2556 = vst [vmem:[%s2 + $0x648] sm:$0xff] %v2136
  %2557 = vst [vmem:[%s2 + $0x650] sm:$0xff] %v2141
  %2558 = vst [vmem:[%s2 + $0x658] sm:$0xff] %v2144
  %2559 = vst [vmem:[%s2 + $0x660] sm:$0xff] %v2149
  %2560 = vst [vmem:[%s2 + $0x668] sm:$0xff] %v2152
  %2561 = vst [vmem:[%s2 + $0x670] sm:$0xff] %v2157
  %2562 = vst [vmem:[%s2 + $0x678] sm:$0xff] %v2160
  %2563 = vst [vmem:[%s2 + $0x680] sm:$0xff] %v2165
  %2564 = vst [vmem:[%s2 + $0x688] sm:$0xff] %v2168
  %2565 = vst [vmem:[%s2 + $0x690] sm:$0xff] %v2173
  %2566 = vst [vmem:[%s2 + $0x698] sm:$0xff] %v2176
  %2567 = vst [vmem:[%s2 + $0x6a0] sm:$0xff] %v2181
  %2568 = vst [vmem:[%s2 + $0x6a8] sm:$0xff] %v2184
  %2569 = vst [vmem:[%s2 + $0x6b0] sm:$0xff] %v2189
  %2570 = vst [vmem:[%s2 + $0x6b8] sm:$0xff] %v2192
  %2571 = vst [vmem:[%s2 + $0x6c0] sm:$0xff] %v2197
  %2572 = vst [vmem:[%s2 + $0x6c8] sm:$0xff] %v2200
  %2573 = vst [vmem:[%s2 + $0x6d0] sm:$0xff] %v2205
  %2574 = vst [vmem:[%s2 + $0x6d8] sm:$0xff] %v2208
  %2575 = vst [vmem:[%s2 + $0x6e0] sm:$0xff] %v2213
  %2576 = vst [vmem:[%s2 + $0x6e8] sm:$0xff] %v2216
  %2577 = vst [vmem:[%s2 + $0x6f0] sm:$0xff] %v2221
  %2578 = vst [vmem:[%s2 + $0x6f8] sm:$0xff] %v2224
  %2579 = vst [vmem:[%s2 + $0x700] sm:$0xff] %v2229
  %2580 = vst [vmem:[%s2 + $0x708] sm:$0xff] %v2232
  %2581 = vst [vmem:[%s2 + $0x710] sm:$0xff] %v2237
  %2582 = vst [vmem:[%s2 + $0x718] sm:$0xff] %v2240
  %2583 = vst [vmem:[%s2 + $0x720] sm:$0xff] %v2245
  %2584 = vst [vmem:[%s2 + $0x728] sm:$0xff] %v2248
  %2585 = vst [vmem:[%s2 + $0x730] sm:$0xff] %v2253
  %2586 = vst [vmem:[%s2 + $0x738] sm:$0xff] %v2256
  %2587 = vst [vmem:[%s2 + $0x740] sm:$0xff] %v2261
  %2588 = vst [vmem:[%s2 + $0x748] sm:$0xff] %v2264
  %2589 = vst [vmem:[%s2 + $0x750] sm:$0xff] %v2269
  %2590 = vst [vmem:[%s2 + $0x758] sm:$0xff] %v2272
  %2591 = vst [vmem:[%s2 + $0x760] sm:$0xff] %v2277
  %2592 = vst [vmem:[%s2 + $0x768] sm:$0xff] %v2280
  %2593 = vst [vmem:[%s2 + $0x770] sm:$0xff] %v2285
  %2594 = vst [vmem:[%s2 + $0x778] sm:$0xff] %v2288
  %2595 = vst [vmem:[%s2 + $0x780] sm:$0xff] %v2293
  %2596 = vst [vmem:[%s2 + $0x788] sm:$0xff] %v2296
  %2597 = vst [vmem:[%s2 + $0x790] sm:$0xff] %v2301
  %2598 = vst [vmem:[%s2 + $0x798] sm:$0xff] %v2304
  %2599 = vst [vmem:[%s2 + $0x7a0] sm:$0xff] %v2309
  %2600 = vst [vmem:[%s2 + $0x7a8] sm:$0xff] %v2312
  %2601 = vst [vmem:[%s2 + $0x7b0] sm:$0xff] %v2317
  %2602 = vst [vmem:[%s2 + $0x7b8] sm:$0xff] %v2320
  %2603 = vst [vmem:[%s2 + $0x7c0] sm:$0xff] %v2325
  %2604 = vst [vmem:[%s2 + $0x7c8] sm:$0xff] %v2328
  %2605 = vst [vmem:[%s2 + $0x7d0] sm:$0xff] %v2333
  %2606 = vst [vmem:[%s2 + $0x7d8] sm:$0xff] %v2336
  %2607 = vst [vmem:[%s2 + $0x7e0] sm:$0xff] %v2341
  %2608 = vst [vmem:[%s2 + $0x7e8] sm:$0xff] %v2344
  %2609 = vst [vmem:[%s2 + $0x7f0] sm:$0xff] %v2349
  %2610 = vst [vmem:[%s2 + $0x7f8] sm:$0xff] %v2352
  // Predicated region
  $region10: #{generator_forward.26} parent=0 // pred_check
    _
  $region11: #{generator_forward.26} parent=0 // pred_check_branch
    %2612 = sbr.rel (0) target = $region13
  $region12: #{generator_forward.26} parent=0 // pred_region
    _
  $region13: #{generator_forward.26} parent=0 // pred_fallthru
    _
  // Predicated region
  $region14: #{generator_forward.26} parent=0 // pred_check
    _
  $region15: #{generator_forward.26} parent=0 // pred_check_branch
    %2614 = sbr.rel (0) target = $region17
  $region16: #{generator_forward.26} parent=0 // pred_region
    _
  $region17: #{generator_forward.26} parent=0 // pred_fallthru
    _

// kernel: generator_forward.27
$region0: #{generator_forward.27}
  #allocation0 [shape = 'u32[]', space=smem, size = 0x4, offset = 0x4, fixed_abs, tag = 'smem constant byte address 0x4 - core index']
  #allocation1 [shape = 'u32[144,128]{1,0:T(1,128)}', space=vmem, size = 0x12000, scoped, tag = 'internal scratch']
  %s0 = inlined_call_operand.vmem [shape: f32[96,256], index: 0, kind: input, shape index: {}, may-alias: {0,3}]
  %s1 = inlined_call_operand.vmem [shape: f32[1,256], index: 1, kind: input, shape index: {}]
  %s2 = inlined_call_operand.vmem [shape: f32[1,256], index: 2, kind: input, shape index: {}]
  %s3 = inlined_call_operand.vmem [shape: f32[96,256], index: 3, kind: output, shape index: {}, may-alias: {0,3}]
  %s4 = sld [smem:[#allocation0]]
  $region22: #{generator_forward.27} parent=0
    _
  %s6 = ssub.s32 1, %s4
  %s7 = scalar_select 0, %s6, %s4
  // Predicated region
  $region2: #{generator_forward.27} parent=0 // pred_check
    _
  $region3: #{generator_forward.27} parent=0 // pred_check_branch
    %9 = sbr.rel (0) target = $region5
  $region4: #{generator_forward.27} parent=0 // pred_region
    _
  $region5: #{generator_forward.27} parent=0 // pred_fallthru
    _
  // Predicated region
  $region6: #{generator_forward.27} parent=0 // pred_check
    _
  $region7: #{generator_forward.27} parent=0 // pred_check_branch
    %11 = sbr.rel (0) target = $region9
  $region8: #{generator_forward.27} parent=0 // pred_region
    _
  $region9: #{generator_forward.27} parent=0 // pred_fallthru
    _
  // Predicated region
  $region10: #{generator_forward.27} parent=0 // pred_check
    _
  $region11: #{generator_forward.27} parent=0 // pred_check_branch
    %13 = sbr.rel (0) target = $region13
  $region12: #{generator_forward.27} parent=0 // pred_region
    _
  $region13: #{generator_forward.27} parent=0 // pred_fallthru
    _
  %v14 = vld [vmem:[%s0] sm:$0xff]
  %v15 = vld [vmem:[%s0 + $0x8] sm:$0xff]
  %v16 = vld [vmem:[%s0 + $0x10] sm:$0xff]
  %v17 = vld [vmem:[%s0 + $0x18] sm:$0xff]
  %v18 = vld [vmem:[%s0 + $0x20] sm:$0xff]
  %v19 = vld [vmem:[%s0 + $0x28] sm:$0xff]
  %v20 = vld [vmem:[%s0 + $0x30] sm:$0xff]
  %v21 = vld [vmem:[%s0 + $0x38] sm:$0xff]
  %v22 = vld [vmem:[%s0 + $0x40] sm:$0xff]
  %v23 = vld [vmem:[%s0 + $0x48] sm:$0xff]
  %v24 = vld [vmem:[%s0 + $0x50] sm:$0xff]
  %v25 = vld [vmem:[%s0 + $0x58] sm:$0xff]
  %v26 = vld [vmem:[%s0 + $0x60] sm:$0xff]
  %v27 = vld [vmem:[%s0 + $0x68] sm:$0xff]
  %v28 = vld [vmem:[%s0 + $0x70] sm:$0xff]
  %v29 = vld [vmem:[%s0 + $0x78] sm:$0xff]
  %v30 = vld [vmem:[%s0 + $0x80] sm:$0xff]
  %v31 = vld [vmem:[%s0 + $0x88] sm:$0xff]
  %v32 = vld [vmem:[%s0 + $0x90] sm:$0xff]
  %v33 = vld [vmem:[%s0 + $0x98] sm:$0xff]
  %v34 = vld [vmem:[%s0 + $0xa0] sm:$0xff]
  %v35 = vld [vmem:[%s0 + $0xa8] sm:$0xff]
  %v36 = vld [vmem:[%s0 + $0xb0] sm:$0xff]
  %v37 = vld [vmem:[%s0 + $0xb8] sm:$0xff]
  %v38 = vld [vmem:[%s1] sm:$0x3]
  %v40 = vlaneseq
  %v41 = vshrl.u32 %v40, 7
  %v42 = vsub.s32 0, %v41
  %v43 = vrot.slane %v38, %v42
  %v44 = vlaneseq
  %v45 = vshrl.u32 %v44, 7
  %v46 = vsub.s32 1, %v45
  %v47 = vrot.slane %v38, %v46
  %v50 = vmul.f32 %v14, %v43
  %v51 = vmul.f32 %v15, %v47
  %v52 = vmul.f32 %v16, %v43
  %v53 = vmul.f32 %v17, %v47
  %v54 = vmul.f32 %v18, %v43
  %v55 = vmul.f32 %v19, %v47
  %v56 = vmul.f32 %v20, %v43
  %v57 = vmul.f32 %v21, %v47
  %v58 = vmul.f32 %v22, %v43
  %v59 = vmul.f32 %v23, %v47
  %v60 = vmul.f32 %v24, %v43
  %v61 = vmul.f32 %v25, %v47
  %v62 = vmul.f32 %v26, %v43
  %v63 = vmul.f32 %v27, %v47
  %v64 = vmul.f32 %v28, %v43
  %v65 = vmul.f32 %v29, %v47
  %v66 = vmul.f32 %v30, %v43
  %v67 = vmul.f32 %v31, %v47
  %v68 = vmul.f32 %v32, %v43
  %v69 = vmul.f32 %v33, %v47
  %v70 = vmul.f32 %v34, %v43
  %v71 = vmul.f32 %v35, %v47
  %v72 = vmul.f32 %v36, %v43
  %v73 = vmul.f32 %v37, %v47
  %v74 = vld [vmem:[%s2] sm:$0x3]
  %v76 = vlaneseq
  %v77 = vshrl.u32 %v76, 7
  %v78 = vsub.s32 0, %v77
  %v79 = vrot.slane %v74, %v78
  %v80 = vlaneseq
  %v81 = vshrl.u32 %v80, 7
  %v82 = vsub.s32 1, %v81
  %v83 = vrot.slane %v74, %v82
  %v86 = vadd.f32 %v50, %v79
  %v87 = vadd.f32 %v51, %v83
  %v88 = vadd.f32 %v52, %v79
  %v89 = vadd.f32 %v53, %v83
  %v90 = vadd.f32 %v54, %v79
  %v91 = vadd.f32 %v55, %v83
  %v92 = vadd.f32 %v56, %v79
  %v93 = vadd.f32 %v57, %v83
  %v94 = vadd.f32 %v58, %v79
  %v95 = vadd.f32 %v59, %v83
  %v96 = vadd.f32 %v60, %v79
  %v97 = vadd.f32 %v61, %v83
  %v98 = vadd.f32 %v62, %v79
  %v99 = vadd.f32 %v63, %v83
  %v100 = vadd.f32 %v64, %v79
  %v101 = vadd.f32 %v65, %v83
  %v102 = vadd.f32 %v66, %v79
  %v103 = vadd.f32 %v67, %v83
  %v104 = vadd.f32 %v68, %v79
  %v105 = vadd.f32 %v69, %v83
  %v106 = vadd.f32 %v70, %v79
  %v107 = vadd.f32 %v71, %v83
  %v108 = vadd.f32 %v72, %v79
  %v109 = vadd.f32 %v73, %v83
  %v110 = vtanh.pop %v86
  %v111 = vtanh.pop %v87
  %v112 = vtanh.pop %v88
  %v113 = vtanh.pop %v89
  %v114 = vtanh.pop %v90
  %v115 = vtanh.pop %v91
  %v116 = vtanh.pop %v92
  %v117 = vtanh.pop %v93
  %v118 = vtanh.pop %v94
  %v119 = vtanh.pop %v95
  %v120 = vtanh.pop %v96
  %v121 = vtanh.pop %v97
  %v122 = vtanh.pop %v98
  %v123 = vtanh.pop %v99
  %v124 = vtanh.pop %v100
  %v125 = vtanh.pop %v101
  %v126 = vtanh.pop %v102
  %v127 = vtanh.pop %v103
  %v128 = vtanh.pop %v104
  %v129 = vtanh.pop %v105
  %v130 = vtanh.pop %v106
  %v131 = vtanh.pop %v107
  %v132 = vtanh.pop %v108
  %v133 = vtanh.pop %v109
  %134 = vst [vmem:[%s3] sm:$0xff] %v110
  %135 = vst [vmem:[%s3 + $0x8] sm:$0xff] %v111
  %136 = vst [vmem:[%s3 + $0x10] sm:$0xff] %v112
  %137 = vst [vmem:[%s3 + $0x18] sm:$0xff] %v113
  %138 = vst [vmem:[%s3 + $0x20] sm:$0xff] %v114
  %139 = vst [vmem:[%s3 + $0x28] sm:$0xff] %v115
  %140 = vst [vmem:[%s3 + $0x30] sm:$0xff] %v116
  %141 = vst [vmem:[%s3 + $0x38] sm:$0xff] %v117
  %142 = vst [vmem:[%s3 + $0x40] sm:$0xff] %v118
  %143 = vst [vmem:[%s3 + $0x48] sm:$0xff] %v119
  %144 = vst [vmem:[%s3 + $0x50] sm:$0xff] %v120
  %145 = vst [vmem:[%s3 + $0x58] sm:$0xff] %v121
  %146 = vst [vmem:[%s3 + $0x60] sm:$0xff] %v122
  %147 = vst [vmem:[%s3 + $0x68] sm:$0xff] %v123
  %148 = vst [vmem:[%s3 + $0x70] sm:$0xff] %v124
  %149 = vst [vmem:[%s3 + $0x78] sm:$0xff] %v125
  %150 = vst [vmem:[%s3 + $0x80] sm:$0xff] %v126
  %151 = vst [vmem:[%s3 + $0x88] sm:$0xff] %v127
  %152 = vst [vmem:[%s3 + $0x90] sm:$0xff] %v128
  %153 = vst [vmem:[%s3 + $0x98] sm:$0xff] %v129
  %154 = vst [vmem:[%s3 + $0xa0] sm:$0xff] %v130
  %155 = vst [vmem:[%s3 + $0xa8] sm:$0xff] %v131
  %156 = vst [vmem:[%s3 + $0xb0] sm:$0xff] %v132
  %157 = vst [vmem:[%s3 + $0xb8] sm:$0xff] %v133
  // Predicated region
  $region14: #{generator_forward.27} parent=0 // pred_check
    _
  $region15: #{generator_forward.27} parent=0 // pred_check_branch
    %159 = sbr.rel (0) target = $region17
  $region16: #{generator_forward.27} parent=0 // pred_region
    _
  $region17: #{generator_forward.27} parent=0 // pred_fallthru
    _
  // Predicated region
  $region18: #{generator_forward.27} parent=0 // pred_check
    _
  $region19: #{generator_forward.27} parent=0 // pred_check_branch
    %161 = sbr.rel (0) target = $region21
  $region20: #{generator_forward.27} parent=0 // pred_region
    _
  $region21: #{generator_forward.27} parent=0 // pred_fallthru
    _

</llo_original>
